<compile_context>
chip_gen: v7x
topology: tpu7x:2x2x1
jax: 0.10.0
libtpu: 0.0.40
codegen_flags: <defaults>
</compile_context>

<pallas_src>
import functools

import jax
import jax.numpy as jnp
from jax.experimental import pallas as pl
from jax.experimental.pallas import tpu as pltpu

PAD_IDX = 0
NEG_INF = -1e30
LANE = 128


# ----------------------------- host-side helpers ----------------------------

def _round_up(x, m):
    return ((x + m - 1) // m) * m


def create_positional_encoding(max_len, hidden_dim):
    # table[pos, i] = pos / 10000**(2*i/hidden_dim); sin on even cols, cos on
    # odd cols; row 0 (pad position) zeroed — matches the reference repo.
    pos = jnp.arange(max_len, dtype=jnp.float32)[:, None]
    i = jnp.arange(hidden_dim, dtype=jnp.float32)[None, :]
    table = pos / jnp.power(10000.0, 2.0 * i / hidden_dim)
    out = jnp.zeros((max_len, hidden_dim), jnp.float32)
    out = out.at[:, 0::2].set(jnp.sin(table[:, 0::2]))
    out = out.at[:, 1::2].set(jnp.cos(table[:, 1::2]))
    out = out.at[0].set(0.0)
    return out


def create_position_vector(source):
    S = source.shape[1]
    return jnp.where(source != PAD_IDX,
                     jnp.arange(S, dtype=jnp.int32)[None, :] + 1, 0)


# ----------------------------- Pallas kernel ---------------------------------

def _layer_norm(x, gamma, beta, h_real, eps=1e-6):
    # Single-pass LN over the lane axis.  Padded lanes of x are identically 0
    # and gamma/beta are zero-padded, so padded lanes of the result stay 0 and
    # the statistics over the real h_real lanes are exact.
    inv_h = 1.0 / float(h_real)
    mean = jnp.sum(x, axis=-1, keepdims=True) * inv_h
    msq = jnp.sum(x * x, axis=-1, keepdims=True) * inv_h
    var = msq - mean * mean
    return (x - mean) * jax.lax.rsqrt(var + eps) * gamma + beta


def encoder_stack_kernel(mask_ref, x_ref, gamma_ref, beta_ref,
                         wqkv_ref, wo_ref, w1_ref, b1_ref, w2_ref, b2_ref,
                         fgamma_ref, fbeta_ref, o_ref, x_sc,
                         *, n_head, h_real):
    l = pl.program_id(1)
    n_layer = pl.num_programs(1)

    # Layer 0: seed the VMEM-resident residual stream for this batch element.
    @pl.when(l == 0)
    def _():
        x_sc[...] = x_ref[0]

    x = x_sc[...]                                   # (S, Hp) f32 residual
    S, Hp = x.shape
    Ap = wqkv_ref.shape[1] // 3                     # n_head * dp (padded)
    dp = Ap // n_head
    d_real = h_real // n_head
    scale = 1.0 / float(d_real) ** 0.5

    mask_add = mask_ref[0]                          # (1, S): 0 keep / -1e30 pad
    gamma = gamma_ref[...]                          # (1, Hp)
    beta = beta_ref[...]

    # ---- self-attention sub-layer (pre-LN; gamma/beta shared with FFN LN) ----
    xn = _layer_norm(x, gamma, beta, h_real)
    qkv = jnp.dot(xn.astype(jnp.bfloat16), wqkv_ref[...],
                  preferred_element_type=jnp.float32)           # (S, 3*Ap)
    qh = qkv[:, 0 * Ap:1 * Ap].reshape(S, n_head, dp)
    kh = qkv[:, 1 * Ap:2 * Ap].reshape(S, n_head, dp)
    vh = qkv[:, 2 * Ap:3 * Ap].reshape(S, n_head, dp)
    qh = qh.transpose(1, 0, 2).astype(jnp.bfloat16)             # (nh, S, dp)
    kh = kh.transpose(1, 0, 2).astype(jnp.bfloat16)
    vh = vh.transpose(1, 0, 2).astype(jnp.bfloat16)

    s = jnp.einsum('hqd,hkd->hqk', qh, kh,
                   preferred_element_type=jnp.float32) * scale  # (nh, S, S)
    s = s + mask_add[None]                                      # additive key-pad mask
    m = jnp.max(s, axis=-1, keepdims=True)
    e = jnp.exp(s - m)
    p = e * pl.reciprocal(jnp.sum(e, axis=-1, keepdims=True), approx=True)
    ctx = jnp.einsum('hqk,hkd->hqd', p.astype(jnp.bfloat16), vh,
                     preferred_element_type=jnp.float32)        # (nh, S, dp)
    ctx = ctx.transpose(1, 0, 2).reshape(S, Ap)                 # concat heads
    attn = jnp.dot(ctx.astype(jnp.bfloat16), wo_ref[...],
                   preferred_element_type=jnp.float32)          # (S, Hp)
    out1 = x + attn                                             # dropout == identity

    # ---- position-wise FFN (Conv1d k=1 == per-token matmul, ReLU) ----
    on = _layer_norm(out1, gamma, beta, h_real)
    h1 = jnp.dot(on.astype(jnp.bfloat16), w1_ref[...],
                 preferred_element_type=jnp.float32) + b1_ref[...]
    h1 = jnp.maximum(h1, 0.0)
    h2 = jnp.dot(h1.astype(jnp.bfloat16), w2_ref[...],
                 preferred_element_type=jnp.float32) + b2_ref[...]
    out2 = out1 + h2

    x_sc[...] = out2                                # stays resident for layer l+1

    # Final LayerNorm fused into the last layer step; the output block is
    # written (and later flushed to HBM) once per batch element.
    @pl.when(l == n_layer - 1)
    def _():
        o_ref[...] = _layer_norm(out2, fgamma_ref[...], fbeta_ref[...],
                                 h_real)[None]


# ----------------------------- wrapper ---------------------------------------

def run_encoder_stack(x_pad, mask_bias, stacked, fgamma, fbeta, n_head, h_real):
    B, S, Hp = x_pad.shape
    L = stacked["wqkv"].shape[0]
    three_ap = stacked["wqkv"].shape[2]
    Ap = three_ap // 3
    Fp = stacked["w1"].shape[-1]

    kern = functools.partial(encoder_stack_kernel, n_head=n_head, h_real=h_real)

    bmap = lambda b, l: (b, 0, 0)     # per-batch blocks (resident over layers)
    lmap = lambda b, l: (l, 0, 0)     # per-layer weight blocks
    smap = lambda b, l: (0, 0)        # shared (final LN) blocks

    return pl.pallas_call(
        kern,
        out_shape=jax.ShapeDtypeStruct((B, S, Hp), jnp.float32),
        grid=(B, L),
        in_specs=[
            pl.BlockSpec((1, 1, S), bmap),              # additive key-pad bias
            pl.BlockSpec((1, S, Hp), bmap),             # embedded input
            pl.BlockSpec((None, 1, Hp), lmap),          # per-layer LN gamma
            pl.BlockSpec((None, 1, Hp), lmap),          # per-layer LN beta
            pl.BlockSpec((None, Hp, three_ap), lmap),   # fused Wq|Wk|Wv (bf16)
            pl.BlockSpec((None, Ap, Hp), lmap),         # Wo (bf16)
            pl.BlockSpec((None, Hp, Fp), lmap),         # FFN W1 (bf16)
            pl.BlockSpec((None, 1, Fp), lmap),          # FFN b1
            pl.BlockSpec((None, Fp, Hp), lmap),         # FFN W2 (bf16)
            pl.BlockSpec((None, 1, Hp), lmap),          # FFN b2
            pl.BlockSpec((1, Hp), smap),                # final LN gamma
            pl.BlockSpec((1, Hp), smap),                # final LN beta
        ],
        out_specs=pl.BlockSpec((1, S, Hp), bmap),
        scratch_shapes=[pltpu.VMEM((S, Hp), jnp.float32)],   # resident residual
        compiler_params=pltpu.CompilerParams(
            dimension_semantics=("parallel", "arbitrary"),
            vmem_limit_bytes=32 * 1024 * 1024),
    )(mask_bias, x_pad, stacked["gamma"], stacked["beta"], stacked["wqkv"],
      stacked["wo"], stacked["w1"], stacked["b1"], stacked["w2"], stacked["b2"],
      fgamma, fbeta)


# ----------------------------- params / padding ------------------------------

def init_layer_params(key, H, F, n_head):
    d = H // n_head
    ks = jax.random.split(key, 6)
    std_qkv = (2.0 / (H + d)) ** 0.5
    return {
        "gamma": jnp.ones((1, H), jnp.float32),
        "beta": jnp.zeros((1, H), jnp.float32),
        "wq": jax.random.normal(ks[0], (H, H), jnp.float32) * std_qkv,
        "wk": jax.random.normal(ks[1], (H, H), jnp.float32) * std_qkv,
        "wv": jax.random.normal(ks[2], (H, H), jnp.float32) * std_qkv,
        "wo": jax.random.normal(ks[3], (H, H), jnp.float32) * (1.0 / H ** 0.5),
        "w1": jax.random.normal(ks[4], (H, F), jnp.float32) * (2.0 / H) ** 0.5,
        "b1": jnp.zeros((1, F), jnp.float32),
        "w2": jax.random.normal(ks[5], (F, H), jnp.float32) * (2.0 / F) ** 0.5,
        "b2": jnp.zeros((1, H), jnp.float32),
    }


def pad_and_stack_params(layer_params, H, F, n_head, Hp, Fp, dp):
    """Zero-pad to lane-dense shapes (head structure preserved) and stack layers."""
    d = H // n_head

    def pad2(a, r, c):
        return jnp.pad(a, ((0, r - a.shape[0]), (0, c - a.shape[1])))

    def pad_head_cols(w):   # (H, n_head*d) -> (Hp, n_head*dp)
        w = w.reshape(H, n_head, d)
        w = jnp.pad(w, ((0, Hp - H), (0, 0), (0, dp - d)))
        return w.reshape(Hp, n_head * dp)

    def pad_head_rows(w):   # (n_head*d, H) -> (n_head*dp, Hp)
        w = w.reshape(n_head, d, H)
        w = jnp.pad(w, ((0, 0), (0, dp - d), (0, Hp - H)))
        return w.reshape(n_head * dp, Hp)

    gammas, betas, wqkvs, wos, w1s, b1s, w2s, b2s = ([] for _ in range(8))
    for p in layer_params:
        gammas.append(pad2(p["gamma"], 1, Hp))   # zero-padded => padded lanes stay 0
        betas.append(pad2(p["beta"], 1, Hp))
        wq, wk, wv = (pad_head_cols(p[k]) for k in ("wq", "wk", "wv"))
        wqkvs.append(jnp.concatenate([wq, wk, wv], axis=1))     # (Hp, 3*Ap)
        wos.append(pad_head_rows(p["wo"]))                      # (Ap, Hp)
        w1s.append(pad2(p["w1"], Hp, Fp))
        b1s.append(pad2(p["b1"], 1, Fp))
        w2s.append(pad2(p["w2"], Fp, Hp))
        b2s.append(pad2(p["b2"], 1, Hp))

    return {
        "gamma": jnp.stack(gammas).astype(jnp.float32),
        "beta": jnp.stack(betas).astype(jnp.float32),
        "wqkv": jnp.stack(wqkvs).astype(jnp.bfloat16),
        "wo": jnp.stack(wos).astype(jnp.bfloat16),
        "w1": jnp.stack(w1s).astype(jnp.bfloat16),
        "b1": jnp.stack(b1s).astype(jnp.float32),
        "w2": jnp.stack(w2s).astype(jnp.bfloat16),
        "b2": jnp.stack(b2s).astype(jnp.float32),
    }


def encoder_forward(source, token_emb, pos_table, layer_params, final_gamma,
                    final_beta, n_head):
    H = token_emb.shape[1]
    F = layer_params[0]["w1"].shape[1]
    d = H // n_head
    Hp = max(LANE, _round_up(H, LANE))
    Fp = max(LANE, _round_up(F, LANE))
    dp = max(LANE, _round_up(d, LANE))      # per-head dim padded to full lanes

    # embedding + sinusoidal positions (data-dependent gathers; left to XLA)
    # TODO(synk): gathers could be pulled in-kernel with manual DMA, but the
    # embedding lookup is tiny compared to the layer stack.
    source_pos = create_position_vector(source)
    x = token_emb[source] * (H ** 0.5) + pos_table[source_pos]
    x = jnp.pad(x, ((0, 0), (0, 0), (0, Hp - H))).astype(jnp.float32)
    # dropout == identity (eval)

    # additive key-pad bias -- replaces the old (B, S, S) f32 mask tensor
    mask_bias = jnp.where(source == PAD_IDX, NEG_INF, 0.0)
    mask_bias = mask_bias.astype(jnp.float32)[:, None, :]        # (B, 1, S)

    stacked = pad_and_stack_params(layer_params, H, F, n_head, Hp, Fp, dp)
    fgamma = jnp.pad(final_gamma, ((0, 0), (0, Hp - H))).astype(jnp.float32)
    fbeta = jnp.pad(final_beta, ((0, 0), (0, Hp - H))).astype(jnp.float32)

    out = run_encoder_stack(x, mask_bias, stacked, fgamma, fbeta, n_head, H)
    return out[:, :, :H]


# ----------------------------- main -------------------------------------------

if __name__ == "__main__":
    B, S, H, F, N_HEAD, N_LAYER = 2, 8, 32, 64, 4, 2
    VOCAB, MAX_LEN = 11, 16

    key = jax.random.PRNGKey(0)
    k_tok, k_emb, *k_layers = jax.random.split(key, 2 + N_LAYER)

    # tokens (pad_idx = 0) with some trailing padding
    source = jax.random.randint(k_tok, (B, S), 1, VOCAB, dtype=jnp.int32)
    source = source.at[0, 6:].set(PAD_IDX).at[1, 4:].set(PAD_IDX)

    token_emb = jax.random.normal(k_emb, (VOCAB, H), jnp.float32) * (H ** -0.5)
    token_emb = token_emb.at[PAD_IDX].set(0.0)          # padding_idx row
    pos_table = create_positional_encoding(MAX_LEN + 1, H)
    layer_params = [init_layer_params(k, H, F, N_HEAD) for k in k_layers]
    final_gamma = jnp.ones((1, H), jnp.float32)
    final_beta = jnp.zeros((1, H), jnp.float32)

    out = encoder_forward(source, token_emb, pos_table, layer_params,
                          final_gamma, final_beta, N_HEAD)
    out = jax.block_until_ready(out)
    assert out.shape == (B, S, H)
    assert bool(jnp.all(jnp.isfinite(out)))
    print("KERNEL_OK")
</pallas_src>

<mosaic_0001>
module attributes {stable_mosaic.version = 11 : i64} {
  func.func @encoder_stack_kernel(%arg0: i32, %arg1: i32, %arg2: memref<1x1x8xf32, #tpu.memory_space<vmem>>, %arg3: memref<1x8x128xf32, #tpu.memory_space<vmem>>, %arg4: memref<1x1x128xf32, #tpu.memory_space<vmem>>, %arg5: memref<1x1x128xf32, #tpu.memory_space<vmem>>, %arg6: memref<1x128x1536xbf16, #tpu.memory_space<vmem>>, %arg7: memref<1x512x128xbf16, #tpu.memory_space<vmem>>, %arg8: memref<1x128x128xbf16, #tpu.memory_space<vmem>>, %arg9: memref<1x1x128xf32, #tpu.memory_space<vmem>>, %arg10: memref<1x128x128xbf16, #tpu.memory_space<vmem>>, %arg11: memref<1x1x128xf32, #tpu.memory_space<vmem>>, %arg12: memref<1x128xf32, #tpu.memory_space<vmem>>, %arg13: memref<1x128xf32, #tpu.memory_space<vmem>>, %arg14: memref<1x8x128xf32, #tpu.memory_space<vmem>>, %arg15: memref<8x128xf32, #tpu.memory_space<vmem>>) attributes {dimension_semantics = [#tpu.dimension_semantics<parallel>, #tpu.dimension_semantics<arbitrary>], iteration_bounds = array<i64: 2, 2>, scalar_prefetch = 0 : i64, scratch_operands = 1 : i64, tpu.core_type = #tpu.core_type<tc>, window_params = [{transform_indices = @transform_0, window_bounds = array<i64: 1, 1, 8>}, {transform_indices = @transform_1, window_bounds = array<i64: 1, 8, 128>}, {transform_indices = @transform_2, window_bounds = array<i64: 1, 1, 128>}, {transform_indices = @transform_3, window_bounds = array<i64: 1, 1, 128>}, {transform_indices = @transform_4, window_bounds = array<i64: 1, 128, 1536>}, {transform_indices = @transform_5, window_bounds = array<i64: 1, 512, 128>}, {transform_indices = @transform_6, window_bounds = array<i64: 1, 128, 128>}, {transform_indices = @transform_7, window_bounds = array<i64: 1, 1, 128>}, {transform_indices = @transform_8, window_bounds = array<i64: 1, 128, 128>}, {transform_indices = @transform_9, window_bounds = array<i64: 1, 1, 128>}, {pipeline_mode = #tpu.pipeline_mode<synchronous>, transform_indices = @transform_10, window_bounds = array<i64: 1, 128>}, {pipeline_mode = #tpu.pipeline_mode<synchronous>, transform_indices = @transform_11, window_bounds = array<i64: 1, 128>}, {transform_indices = @transform_12, window_bounds = array<i64: 1, 8, 128>}]} {
    %c0_i32 = arith.constant 0 : i32
    %0 = arith.cmpi eq, %arg1, %c0_i32 : i32
    %1 = arith.extui %0 : i1 to i32
    %c0_i32_0 = arith.constant 0 : i32
    %2 = arith.cmpi ne, %1, %c0_i32_0 : i32
    scf.if %2 {
      %c0_51 = arith.constant 0 : index
      %c0_52 = arith.constant 0 : index
      %c0_53 = arith.constant 0 : index
      %118 = vector.load %arg3[%c0_51, %c0_52, %c0_53] : memref<1x8x128xf32, #tpu.memory_space<vmem>>, vector<1x8x128xf32>
      %119 = vector.shape_cast %118 : vector<1x8x128xf32> to vector<8x128xf32>
      %c0_54 = arith.constant 0 : index
      %c0_55 = arith.constant 0 : index
      %120 = vector.load %arg15[%c0_54, %c0_55] : memref<8x128xf32, #tpu.memory_space<vmem>>, vector<8x128xf32>
      tpu.vector_store %arg15[%c0_54, %c0_55], %119 {strides = array<i32>} : memref<8x128xf32, #tpu.memory_space<vmem>>, vector<8x128xf32>,
    } else {
    }
    %c0 = arith.constant 0 : index
    %c0_1 = arith.constant 0 : index
    %3 = vector.load %arg15[%c0, %c0_1] : memref<8x128xf32, #tpu.memory_space<vmem>>, vector<8x128xf32>
    %c0_2 = arith.constant 0 : index
    %c0_3 = arith.constant 0 : index
    %c0_4 = arith.constant 0 : index
    %4 = vector.load %arg2[%c0_2, %c0_3, %c0_4] : memref<1x1x8xf32, #tpu.memory_space<vmem>>, vector<1x1x8xf32>
    %5 = vector.shape_cast %4 : vector<1x1x8xf32> to vector<1x8xf32>
    %c0_5 = arith.constant 0 : index
    %c0_6 = arith.constant 0 : index
    %c0_7 = arith.constant 0 : index
    %6 = vector.load %arg4[%c0_5, %c0_6, %c0_7] : memref<1x1x128xf32, #tpu.memory_space<vmem>>, vector<1x1x128xf32>
    %7 = vector.shape_cast %6 : vector<1x1x128xf32> to vector<1x128xf32>
    %c0_8 = arith.constant 0 : index
    %c0_9 = arith.constant 0 : index
    %c0_10 = arith.constant 0 : index
    %8 = vector.load %arg5[%c0_8, %c0_9, %c0_10] : memref<1x1x128xf32, #tpu.memory_space<vmem>>, vector<1x1x128xf32>
    %9 = vector.shape_cast %8 : vector<1x1x128xf32> to vector<1x128xf32>
    %cst = arith.constant dense<0.000000e+00> : vector<8xf32>
    %10 = vector.multi_reduction <add>, %3, %cst [1] : vector<8x128xf32> to vector<8xf32>
    %11 = vector.shape_cast %10 : vector<8xf32> to vector<8x1xf32>
    %cst_11 = arith.constant 3.125000e-02 : f32
    %12 = vector.broadcast %cst_11 : f32 to vector<8x1xf32>
    %13 = arith.mulf %11, %12 : vector<8x1xf32>
    %14 = arith.mulf %3, %3 : vector<8x128xf32>
    %cst_12 = arith.constant dense<0.000000e+00> : vector<8xf32>
    %15 = vector.multi_reduction <add>, %14, %cst_12 [1] : vector<8x128xf32> to vector<8xf32>
    %16 = vector.shape_cast %15 : vector<8xf32> to vector<8x1xf32>
    %cst_13 = arith.constant 3.125000e-02 : f32
    %17 = vector.broadcast %cst_13 : f32 to vector<8x1xf32>
    %18 = arith.mulf %16, %17 : vector<8x1xf32>
    %19 = arith.mulf %13, %13 : vector<8x1xf32>
    %20 = arith.subf %18, %19 : vector<8x1xf32>
    %21 = vector.broadcast %13 : vector<8x1xf32> to vector<8x128xf32>
    %22 = arith.subf %3, %21 : vector<8x128xf32>
    %cst_14 = arith.constant 9.99999997E-7 : f32
    %23 = vector.broadcast %cst_14 : f32 to vector<8x1xf32>
    %24 = arith.addf %20, %23 : vector<8x1xf32>
    %25 = math.rsqrt %24 : vector<8x1xf32>
    %26 = vector.broadcast %25 : vector<8x1xf32> to vector<8x128xf32>
    %27 = arith.mulf %22, %26 : vector<8x128xf32>
    %28 = vector.broadcast %7 : vector<1x128xf32> to vector<8x128xf32>
    %29 = arith.mulf %27, %28 : vector<8x128xf32>
    %30 = vector.broadcast %9 : vector<1x128xf32> to vector<8x128xf32>
    %31 = arith.addf %29, %30 : vector<8x128xf32>
    %32 = arith.truncf %31 : vector<8x128xf32> to vector<8x128xbf16>
    %c0_15 = arith.constant 0 : index
    %c0_16 = arith.constant 0 : index
    %c0_17 = arith.constant 0 : index
    %33 = vector.load %arg6[%c0_15, %c0_16, %c0_17] : memref<1x128x1536xbf16, #tpu.memory_space<vmem>>, vector<1x128x1536xbf16>
    %34 = vector.shape_cast %33 : vector<1x128x1536xbf16> to vector<128x1536xbf16>
    %cst_18 = arith.constant dense<0.000000e+00> : vector<8x1536xf32>
    %35 = tpu.matmul %32, %34, %cst_18 {dimension_numbers = #tpu.dot_dimension_numbers<[1], [0], [0], [1], [0, 0, 1, 1], [], []>} : vector<8x128xbf16>, vector<128x1536xbf16>, vector<8x1536xf32> -> vector<8x1536xf32>
    %36 = vector.extract_strided_slice %35 {offsets = [0, 0], sizes = [8, 512], strides = [1, 1]} : vector<8x1536xf32> to vector<8x512xf32>
    %37 = vector.shape_cast %36 : vector<8x512xf32> to vector<8x4x128xf32>
    %38 = vector.extract_strided_slice %35 {offsets = [0, 512], sizes = [8, 512], strides = [1, 1]} : vector<8x1536xf32> to vector<8x512xf32>
    %39 = vector.shape_cast %38 : vector<8x512xf32> to vector<8x4x128xf32>
    %40 = vector.extract_strided_slice %35 {offsets = [0, 1024], sizes = [8, 512], strides = [1, 1]} : vector<8x1536xf32> to vector<8x512xf32>
    %41 = vector.shape_cast %40 : vector<8x512xf32> to vector<8x4x128xf32>
    %42 = tpu.transpose %37, [1, 0, 2] : vector<8x4x128xf32> -> vector<4x8x128xf32>
    %43 = arith.truncf %42 : vector<4x8x128xf32> to vector<4x8x128xbf16>
    %44 = tpu.transpose %39, [1, 0, 2] : vector<8x4x128xf32> -> vector<4x8x128xf32>
    %45 = arith.truncf %44 : vector<4x8x128xf32> to vector<4x8x128xbf16>
    %46 = tpu.transpose %41, [1, 0, 2] : vector<8x4x128xf32> -> vector<4x8x128xf32>
    %47 = arith.truncf %46 : vector<4x8x128xf32> to vector<4x8x128xbf16>
    "tpu.trace_start"() <{level = 10 : i32, message = "hqd,hkd->hqk"}> : () -> ()
    %cst_19 = arith.constant dense<0.000000e+00> : vector<4x8x8xf32>
    %48 = tpu.matmul %43, %45, %cst_19 {dimension_numbers = #tpu.dot_dimension_numbers<[2], [2], [1], [1], [0, 0, 0, 1, 1, 1], [0], [0]>} : vector<4x8x128xbf16>, vector<4x8x128xbf16>, vector<4x8x8xf32> -> vector<4x8x8xf32>
    "tpu.trace_stop"() : () -> ()
    %cst_20 = arith.constant 0.353553385 : f32
    %49 = vector.broadcast %cst_20 : f32 to vector<4x8x8xf32>
    %50 = arith.mulf %48, %49 : vector<4x8x8xf32>
    %51 = vector.shape_cast %5 : vector<1x8xf32> to vector<1x1x8xf32>
    %52 = vector.broadcast %51 : vector<1x1x8xf32> to vector<4x8x8xf32>
    %53 = arith.addf %50, %52 : vector<4x8x8xf32>
    %cst_21 = arith.constant dense<0xFF800000> : vector<4x8xf32>
    %54 = vector.multi_reduction <maximumf>, %53, %cst_21 [2] : vector<4x8x8xf32> to vector<4x8xf32>
    %55 = vector.shape_cast %54 : vector<4x8xf32> to vector<4x8x1xf32>
    %56 = vector.broadcast %55 : vector<4x8x1xf32> to vector<4x8x8xf32>
    %57 = arith.subf %53, %56 : vector<4x8x8xf32>
    %58 = math.exp %57 : vector<4x8x8xf32>
    %cst_22 = arith.constant dense<0.000000e+00> : vector<4x8xf32>
    %59 = vector.multi_reduction <add>, %58, %cst_22 [2] : vector<4x8x8xf32> to vector<4x8xf32>
    %60 = vector.shape_cast %59 : vector<4x8xf32> to vector<4x8x1xf32>
    %61 = tpu.reciprocal %60 {approx = true} : vector<4x8x1xf32> -> vector<4x8x1xf32>
    %62 = vector.broadcast %61 : vector<4x8x1xf32> to vector<4x8x8xf32>
    %63 = arith.mulf %58, %62 : vector<4x8x8xf32>
    %64 = arith.truncf %63 : vector<4x8x8xf32> to vector<4x8x8xbf16>
    "tpu.trace_start"() <{level = 10 : i32, message = "hqk,hkd->hqd"}> : () -> ()
    %cst_23 = arith.constant dense<0.000000e+00> : vector<4x8x128xf32>
    %65 = tpu.matmul %64, %47, %cst_23 {dimension_numbers = #tpu.dot_dimension_numbers<[2], [1], [1], [2], [0, 0, 0, 1, 1, 2], [0], [0]>} : vector<4x8x8xbf16>, vector<4x8x128xbf16>, vector<4x8x128xf32> -> vector<4x8x128xf32>
    "tpu.trace_stop"() : () -> ()
    %66 = tpu.transpose %65, [1, 0, 2] : vector<4x8x128xf32> -> vector<8x4x128xf32>
    %67 = vector.shape_cast %66 : vector<8x4x128xf32> to vector<8x512xf32>
    %68 = arith.truncf %67 : vector<8x512xf32> to vector<8x512xbf16>
    %c0_24 = arith.constant 0 : index
    %c0_25 = arith.constant 0 : index
    %c0_26 = arith.constant 0 : index
    %69 = vector.load %arg7[%c0_24, %c0_25, %c0_26] : memref<1x512x128xbf16, #tpu.memory_space<vmem>>, vector<1x512x128xbf16>
    %70 = vector.shape_cast %69 : vector<1x512x128xbf16> to vector<512x128xbf16>
    %cst_27 = arith.constant dense<0.000000e+00> : vector<8x128xf32>
    %71 = tpu.matmul %68, %70, %cst_27 {dimension_numbers = #tpu.dot_dimension_numbers<[1], [0], [0], [1], [0, 0, 1, 1], [], []>} : vector<8x512xbf16>, vector<512x128xbf16>, vector<8x128xf32> -> vector<8x128xf32>
    %72 = arith.addf %3, %71 : vector<8x128xf32>
    %cst_28 = arith.constant dense<0.000000e+00> : vector<8xf32>
    %73 = vector.multi_reduction <add>, %72, %cst_28 [1] : vector<8x128xf32> to vector<8xf32>
    %74 = vector.shape_cast %73 : vector<8xf32> to vector<8x1xf32>
    %cst_29 = arith.constant 3.125000e-02 : f32
    %75 = vector.broadcast %cst_29 : f32 to vector<8x1xf32>
    %76 = arith.mulf %74, %75 : vector<8x1xf32>
    %77 = arith.mulf %72, %72 : vector<8x128xf32>
    %cst_30 = arith.constant dense<0.000000e+00> : vector<8xf32>
    %78 = vector.multi_reduction <add>, %77, %cst_30 [1] : vector<8x128xf32> to vector<8xf32>
    %79 = vector.shape_cast %78 : vector<8xf32> to vector<8x1xf32>
    %cst_31 = arith.constant 3.125000e-02 : f32
    %80 = vector.broadcast %cst_31 : f32 to vector<8x1xf32>
    %81 = arith.mulf %79, %80 : vector<8x1xf32>
    %82 = arith.mulf %76, %76 : vector<8x1xf32>
    %83 = arith.subf %81, %82 : vector<8x1xf32>
    %84 = vector.broadcast %76 : vector<8x1xf32> to vector<8x128xf32>
    %85 = arith.subf %72, %84 : vector<8x128xf32>
    %cst_32 = arith.constant 9.99999997E-7 : f32
    %86 = vector.broadcast %cst_32 : f32 to vector<8x1xf32>
    %87 = arith.addf %83, %86 : vector<8x1xf32>
    %88 = math.rsqrt %87 : vector<8x1xf32>
    %89 = vector.broadcast %88 : vector<8x1xf32> to vector<8x128xf32>
    %90 = arith.mulf %85, %89 : vector<8x128xf32>
    %91 = vector.broadcast %7 : vector<1x128xf32> to vector<8x128xf32>
    %92 = arith.mulf %90, %91 : vector<8x128xf32>
    %93 = vector.broadcast %9 : vector<1x128xf32> to vector<8x128xf32>
    %94 = arith.addf %92, %93 : vector<8x128xf32>
    %95 = arith.truncf %94 : vector<8x128xf32> to vector<8x128xbf16>
    %c0_33 = arith.constant 0 : index
    %c0_34 = arith.constant 0 : index
    %c0_35 = arith.constant 0 : index
    %96 = vector.load %arg8[%c0_33, %c0_34, %c0_35] : memref<1x128x128xbf16, #tpu.memory_space<vmem>>, vector<1x128x128xbf16>
    %97 = vector.shape_cast %96 : vector<1x128x128xbf16> to vector<128x128xbf16>
    %cst_36 = arith.constant dense<0.000000e+00> : vector<8x128xf32>
    %98 = tpu.matmul %95, %97, %cst_36 {dimension_numbers = #tpu.dot_dimension_numbers<[1], [0], [0], [1], [0, 0, 1, 1], [], []>} : vector<8x128xbf16>, vector<128x128xbf16>, vector<8x128xf32> -> vector<8x128xf32>
    %c0_37 = arith.constant 0 : index
    %c0_38 = arith.constant 0 : index
    %c0_39 = arith.constant 0 : index
    %99 = vector.load %arg9[%c0_37, %c0_38, %c0_39] : memref<1x1x128xf32, #tpu.memory_space<vmem>>, vector<1x1x128xf32>
    %100 = vector.shape_cast %99 : vector<1x1x128xf32> to vector<1x128xf32>
    %101 = vector.broadcast %100 : vector<1x128xf32> to vector<8x128xf32>
    %102 = arith.addf %98, %101 : vector<8x128xf32>
    %cst_40 = arith.constant 0.000000e+00 : f32
    %103 = vector.broadcast %cst_40 : f32 to vector<8x128xf32>
    %104 = arith.maximumf %102, %103 : vector<8x128xf32>
    %105 = arith.truncf %104 : vector<8x128xf32> to vector<8x128xbf16>
    %c0_41 = arith.constant 0 : index
    %c0_42 = arith.constant 0 : index
    %c0_43 = arith.constant 0 : index
    %106 = vector.load %arg10[%c0_41, %c0_42, %c0_43] : memref<1x128x128xbf16, #tpu.memory_space<vmem>>, vector<1x128x128xbf16>
    %107 = vector.shape_cast %106 : vector<1x128x128xbf16> to vector<128x128xbf16>
    %cst_44 = arith.constant dense<0.000000e+00> : vector<8x128xf32>
    %108 = tpu.matmul %105, %107, %cst_44 {dimension_numbers = #tpu.dot_dimension_numbers<[1], [0], [0], [1], [0, 0, 1, 1], [], []>} : vector<8x128xbf16>, vector<128x128xbf16>, vector<8x128xf32> -> vector<8x128xf32>
    %c0_45 = arith.constant 0 : index
    %c0_46 = arith.constant 0 : index
    %c0_47 = arith.constant 0 : index
    %109 = vector.load %arg11[%c0_45, %c0_46, %c0_47] : memref<1x1x128xf32, #tpu.memory_space<vmem>>, vector<1x1x128xf32>
    %110 = vector.shape_cast %109 : vector<1x1x128xf32> to vector<1x128xf32>
    %111 = vector.broadcast %110 : vector<1x128xf32> to vector<8x128xf32>
    %112 = arith.addf %108, %111 : vector<8x128xf32>
    %113 = arith.addf %72, %112 : vector<8x128xf32>
    %c0_48 = arith.constant 0 : index
    %c0_49 = arith.constant 0 : index
    %114 = vector.load %arg15[%c0_48, %c0_49] : memref<8x128xf32, #tpu.memory_space<vmem>>, vector<8x128xf32>
    tpu.vector_store %arg15[%c0_48, %c0_49], %113 {strides = array<i32>} : memref<8x128xf32, #tpu.memory_space<vmem>>, vector<8x128xf32>,
    %c1_i32 = arith.constant 1 : i32
    %115 = arith.cmpi eq, %arg1, %c1_i32 : i32
    %116 = arith.extui %115 : i1 to i32
    %c0_i32_50 = arith.constant 0 : i32
    %117 = arith.cmpi ne, %116, %c0_i32_50 : i32
    scf.if %117 {
      %c0_51 = arith.constant 0 : index
      %c0_52 = arith.constant 0 : index
      %118 = vector.load %arg12[%c0_51, %c0_52] : memref<1x128xf32, #tpu.memory_space<vmem>>, vector<1x128xf32>
      %c0_53 = arith.constant 0 : index
      %c0_54 = arith.constant 0 : index
      %119 = vector.load %arg13[%c0_53, %c0_54] : memref<1x128xf32, #tpu.memory_space<vmem>>, vector<1x128xf32>
      %cst_55 = arith.constant dense<0.000000e+00> : vector<8xf32>
      %120 = vector.multi_reduction <add>, %113, %cst_55 [1] : vector<8x128xf32> to vector<8xf32>
      %121 = vector.shape_cast %120 : vector<8xf32> to vector<8x1xf32>
      %cst_56 = arith.constant 3.125000e-02 : f32
      %122 = vector.broadcast %cst_56 : f32 to vector<8x1xf32>
      %123 = arith.mulf %121, %122 : vector<8x1xf32>
      %124 = arith.mulf %113, %113 : vector<8x128xf32>
      %cst_57 = arith.constant dense<0.000000e+00> : vector<8xf32>
      %125 = vector.multi_reduction <add>, %124, %cst_57 [1] : vector<8x128xf32> to vector<8xf32>
      %126 = vector.shape_cast %125 : vector<8xf32> to vector<8x1xf32>
      %cst_58 = arith.constant 3.125000e-02 : f32
      %127 = vector.broadcast %cst_58 : f32 to vector<8x1xf32>
      %128 = arith.mulf %126, %127 : vector<8x1xf32>
      %129 = arith.mulf %123, %123 : vector<8x1xf32>
      %130 = arith.subf %128, %129 : vector<8x1xf32>
      %131 = vector.broadcast %123 : vector<8x1xf32> to vector<8x128xf32>
      %132 = arith.subf %113, %131 : vector<8x128xf32>
      %cst_59 = arith.constant 9.99999997E-7 : f32
      %133 = vector.broadcast %cst_59 : f32 to vector<8x1xf32>
      %134 = arith.addf %130, %133 : vector<8x1xf32>
      %135 = math.rsqrt %134 : vector<8x1xf32>
      %136 = vector.broadcast %135 : vector<8x1xf32> to vector<8x128xf32>
      %137 = arith.mulf %132, %136 : vector<8x128xf32>
      %138 = vector.broadcast %118 : vector<1x128xf32> to vector<8x128xf32>
      %139 = arith.mulf %137, %138 : vector<8x128xf32>
      %140 = vector.broadcast %119 : vector<1x128xf32> to vector<8x128xf32>
      %141 = arith.addf %139, %140 : vector<8x128xf32>
      %142 = vector.shape_cast %141 : vector<8x128xf32> to vector<1x8x128xf32>
      %c0_60 = arith.constant 0 : index
      %c0_61 = arith.constant 0 : index
      %c0_62 = arith.constant 0 : index
      %143 = vector.load %arg14[%c0_60, %c0_61, %c0_62] : memref<1x8x128xf32, #tpu.memory_space<vmem>>, vector<1x8x128xf32>
      tpu.vector_store %arg14[%c0_60, %c0_61, %c0_62], %142 {strides = array<i32>} : memref<1x8x128xf32, #tpu.memory_space<vmem>>, vector<1x8x128xf32>,
    } else {
    }
    return
  }
  func.func @transform_0(%arg0: i32, %arg1: i32) -> (i32, i32, i32) {
    %c0_i32 = arith.constant 0 : i32
    %c0_i32_0 = arith.constant 0 : i32
    %c0_i32_1 = arith.constant 0 : i32
    return %arg0, %c0_i32, %c0_i32_0 : i32, i32, i32
  }
  func.func @transform_1(%arg0: i32, %arg1: i32) -> (i32, i32, i32) {
    %c0_i32 = arith.constant 0 : i32
    %c0_i32_0 = arith.constant 0 : i32
    %c0_i32_1 = arith.constant 0 : i32
    return %arg0, %c0_i32, %c0_i32_0 : i32, i32, i32
  }
  func.func @transform_2(%arg0: i32, %arg1: i32) -> (i32, i32, i32) {
    %c0_i32 = arith.constant 0 : i32
    %c0_i32_0 = arith.constant 0 : i32
    %c0_i32_1 = arith.constant 0 : i32
    return %arg1, %c0_i32, %c0_i32_0 : i32, i32, i32
  }
  func.func @transform_3(%arg0: i32, %arg1: i32) -> (i32, i32, i32) {
    %c0_i32 = arith.constant 0 : i32
    %c0_i32_0 = arith.constant 0 : i32
    %c0_i32_1 = arith.constant 0 : i32
    return %arg1, %c0_i32, %c0_i32_0 : i32, i32, i32
  }
  func.func @transform_4(%arg0: i32, %arg1: i32) -> (i32, i32, i32) {
    %c0_i32 = arith.constant 0 : i32
    %c0_i32_0 = arith.constant 0 : i32
    %c0_i32_1 = arith.constant 0 : i32
    return %arg1, %c0_i32, %c0_i32_0 : i32, i32, i32
  }
  func.func @transform_5(%arg0: i32, %arg1: i32) -> (i32, i32, i32) {
    %c0_i32 = arith.constant 0 : i32
    %c0_i32_0 = arith.constant 0 : i32
    %c0_i32_1 = arith.constant 0 : i32
    return %arg1, %c0_i32, %c0_i32_0 : i32, i32, i32
  }
  func.func @transform_6(%arg0: i32, %arg1: i32) -> (i32, i32, i32) {
    %c0_i32 = arith.constant 0 : i32
    %c0_i32_0 = arith.constant 0 : i32
    %c0_i32_1 = arith.constant 0 : i32
    return %arg1, %c0_i32, %c0_i32_0 : i32, i32, i32
  }
  func.func @transform_7(%arg0: i32, %arg1: i32) -> (i32, i32, i32) {
    %c0_i32 = arith.constant 0 : i32
    %c0_i32_0 = arith.constant 0 : i32
    %c0_i32_1 = arith.constant 0 : i32
    return %arg1, %c0_i32, %c0_i32_0 : i32, i32, i32
  }
  func.func @transform_8(%arg0: i32, %arg1: i32) -> (i32, i32, i32) {
    %c0_i32 = arith.constant 0 : i32
    %c0_i32_0 = arith.constant 0 : i32
    %c0_i32_1 = arith.constant 0 : i32
    return %arg1, %c0_i32, %c0_i32_0 : i32, i32, i32
  }
  func.func @transform_9(%arg0: i32, %arg1: i32) -> (i32, i32, i32) {
    %c0_i32 = arith.constant 0 : i32
    %c0_i32_0 = arith.constant 0 : i32
    %c0_i32_1 = arith.constant 0 : i32
    return %arg1, %c0_i32, %c0_i32_0 : i32, i32, i32
  }
  func.func @transform_10(%arg0: i32, %arg1: i32) -> (i32, i32) {
    %c0_i32 = arith.constant 0 : i32
    %c0_i32_0 = arith.constant 0 : i32
    %c0_i32_1 = arith.constant 0 : i32
    return %c0_i32, %c0_i32_0 : i32, i32
  }
  func.func @transform_11(%arg0: i32, %arg1: i32) -> (i32, i32) {
    %c0_i32 = arith.constant 0 : i32
    %c0_i32_0 = arith.constant 0 : i32
    %c0_i32_1 = arith.constant 0 : i32
    return %c0_i32, %c0_i32_0 : i32, i32
  }
  func.func @transform_12(%arg0: i32, %arg1: i32) -> (i32, i32, i32) {
    %c0_i32 = arith.constant 0 : i32
    %c0_i32_0 = arith.constant 0 : i32
    %c0_i32_1 = arith.constant 0 : i32
    return %arg0, %c0_i32, %c0_i32_0 : i32, i32, i32
  }
}

</mosaic_0001>

<llo_original>
// kernel: tpu_custom_call.1
$region0: #{tpu_custom_call.1}
  #allocation0 [shape = 'u32[]', space=smem, size = 0x4, offset = 0x4, fixed_abs, tag = 'smem constant byte address 0x4 - core index']
  #allocation1 [shape = 'u32[144,128]{1,0:T(1,128)}', space=vmem, size = 0x12000, scoped, tag = 'internal scratch']
  #allocation2 [shape = 'f32[8,128]{1,0:T(8,128)}', space=vmem, size = 0x1000, scoped, tag = 'scratch operand']
  %s0 = inlined_call_operand.hbm [shape: f32[2,1,8], index: 0, kind: input, shape index: {}]
  %s1 = inlined_call_operand.hbm [shape: f32[2,8,128], index: 1, kind: input, shape index: {}]
  %s2 = inlined_call_operand.vmem [shape: f32[2,1,128], index: 2, kind: input, shape index: {}]
  %s3 = inlined_call_operand.vmem [shape: f32[2,1,128], index: 3, kind: input, shape index: {}]
  %s4 = inlined_call_operand.hbm [shape: bf16[2,128,1536], index: 4, kind: input, shape index: {}]
  %s5 = inlined_call_operand.hbm [shape: bf16[2,512,128], index: 5, kind: input, shape index: {}]
  %s6 = inlined_call_operand.hbm [shape: bf16[2,128,128], index: 6, kind: input, shape index: {}]
  %s7 = inlined_call_operand.vmem [shape: f32[2,1,128], index: 7, kind: input, shape index: {}]
  %s8 = inlined_call_operand.hbm [shape: bf16[2,128,128], index: 8, kind: input, shape index: {}]
  %s9 = inlined_call_operand.vmem [shape: f32[2,1,128], index: 9, kind: input, shape index: {}]
  %s10 = inlined_call_operand.vmem [shape: f32[1,128], index: 10, kind: input, shape index: {}]
  %s11 = inlined_call_operand.vmem [shape: f32[1,128], index: 11, kind: input, shape index: {}]
  %s12 = inlined_call_operand.hbm [shape: f32[2,8,128], index: 12, kind: output, shape index: {}]
  %s13 = sld [smem:[#allocation0]]
  $region113: #{tpu_custom_call.1} parent=0
    _
  %s15 = ssub.s32 1, %s13
  %s16 = scalar_select 0, %s15, %s13
  $region1: #{tpu_custom_call.1} parent=0
    #allocation3 [shape = 'u8[1024]{0}', space=vmem, size = 0x400, scoped, tag = 'input window, operand 0']
    #allocation4 [shape = 's32[2]{0}', space=sflag, size = 0x8, scoped, tag = 'scoped memory for tpu_custom_call.1']
    #allocation5 [shape = 's32[2]{0}', space=sflag, size = 0x8, scoped, tag = 'scoped memory for tpu_custom_call.1']
    #allocation6 [shape = 'u8[8192]{0}', space=vmem, size = 0x2000, scoped, tag = 'input window, operand 1']
    #allocation7 [shape = 's32[2]{0}', space=sflag, size = 0x8, scoped, tag = 'scoped memory for tpu_custom_call.1']
    #allocation8 [shape = 'u8[786432]{0}', space=vmem, size = 0xc0000, scoped, tag = 'input window, operand 4']
    #allocation9 [shape = 'u8[262144]{0}', space=vmem, size = 0x40000, scoped, tag = 'input window, operand 5']
    #allocation10 [shape = 's32[2]{0}', space=sflag, size = 0x8, scoped, tag = 'scoped memory for tpu_custom_call.1']
    #allocation11 [shape = 'u8[65536]{0}', space=vmem, size = 0x10000, scoped, tag = 'input window, operand 6']
    #allocation12 [shape = 'u8[65536]{0}', space=vmem, size = 0x10000, scoped, tag = 'input window, operand 8']
    #allocation13 [shape = 's32[2]{0}', space=sflag, size = 0x8, scoped, tag = 'scoped memory for tpu_custom_call.1']
    #allocation14 [shape = 'u8[8192]{0}', space=vmem, size = 0x2000, scoped, tag = 'output window, operand 0']
    %17 = vsyncpa [#allocation4], 0
    %s18 = scalar_lea.sflag [#allocation4], 1
    %19 = vsyncpa %s18, 0
    %20 = vsyncpa [#allocation7], 0
    %s21 = scalar_lea.sflag [#allocation7], 1
    %22 = vsyncpa %s21, 0
    %23 = vsyncpa [#allocation10], 0
    %s24 = scalar_lea.sflag [#allocation10], 1
    %25 = vsyncpa %s24, 0
    %26 = vsyncpa [#allocation13], 0
    %s27 = scalar_lea.sflag [#allocation13], 1
    %28 = vsyncpa %s27, 0
    %29 = vsyncpa [#allocation5], 0
    %s30 = scalar_lea.sflag [#allocation5], 1
    %31 = vsyncpa %s30, 0
    loop: start=0, step=1, limit=6
    $region2: #{tpu_custom_call.1} parent=1 // loop_pre_header
      _
    $region3: #{tpu_custom_call.1} parent=1 // loop_header
      %s33 = sphi 0, %s37
      %p34 = scmp.ge.s32.totalorder %s33, 6
      %s40 = sphi 0, %s52
      %s41 = sphi 0, %s48
      %s42 = sphi 0, %s40
      %s43 = sphi 0, %s41
      %s44 = sphi 0, %s42
      %s45 = sphi 0, %s43
      %s55 = sphi 0, %s57
      %s58 = sphi 0, %s55
      %s59 = sphi 0, %s58
      %s75 = sphi 0, %s59
      %s81 = sphi 0, %s83
      %s84 = sphi 0, %s81
      %s85 = sphi 0, %s84
      %s101 = sphi 0, %s85
      %s107 = sphi 0, %s109
      %s110 = sphi 0, %s107
      %s111 = sphi 0, %s110
      %s127 = sphi 0, %s111
      %s133 = sphi 0, %s135
      %s136 = sphi 0, %s133
      %s137 = sphi 0, %s136
      %s153 = sphi 0, %s137
      %s159 = sphi 0, %s161
      %s162 = sphi 0, %s159
      %s163 = sphi 0, %s162
      %s179 = sphi 0, %s163
      %s185 = sphi 0, %s187
      %s188 = sphi 0, %s185
      %s189 = sphi 0, %s188
      %s205 = sphi 0, %s189
      %s211 = sphi 0, %s213
      %s214 = sphi 0, %s211
      %s215 = sphi 0, %s214
      %s231 = sphi 0, %s215
      %s237 = sphi 0, %s239
      %s240 = sphi 0, %s237
      %s241 = sphi 0, %s240
      %s257 = sphi 0, %s241
      %s263 = sphi 0, %s265
      %s266 = sphi 0, %s263
      %s267 = sphi 0, %s266
      %s283 = sphi 0, %s267
      %s289 = sphi 0, %s291
      %s292 = sphi 0, %s289
      %s293 = sphi 0, %s292
      %s309 = sphi 0, %s293
      %s313 = sphi 0, %s313
      %s315 = sphi 0, %s313
      %s316 = sphi 0, %s315
      %s330 = sphi 0, %s316
      %s334 = sphi 0, %s334
      %s336 = sphi 0, %s334
      %s337 = sphi 0, %s336
      %s351 = sphi 0, %s337
      %s357 = sphi 0, %s359
      %s360 = sphi 0, %s357
      %s361 = sphi 0, %s360
      %s377 = sphi 0, %s361
    $region4: #{tpu_custom_call.1} parent=1 // loop_header_branch
      %36 = sbr.rel (%p34) target = $region8
    $region5: #{tpu_custom_call.1} parent=1 // loop_body
      %s38 = ssub.s32 %s33, 1
      %s39 = ssub.s32 %s33, 2
      %s46 = sadd.s32 1, %s41
      %p47 = scmp.ge.s32.totalorder %s46, 2
      %s48 = scalar_select %p47, 0, %s46
      %s49 = sadd.s32 1, %s40
      %s50 = scalar_select %p47, %s49, %s40
      %p51 = scmp.ge.s32.totalorder %s50, 2
      %s52 = scalar_select %p51, 0, %s50
      %s53 = ssub.s32 %s40, %s52
      %p54 = scmp.eq.s32.totalorder %s53, 0
      %s56 = sadd.s32 %s55, 1
      %s57 = scalar_select %p54, %s55, %s56
      %p60 = pneg %p54
      %p61 = scmp.eq.s32.totalorder %s33, 3
      %p62 = por %p60, %p61
      %p63 = scmp.ne.s32.totalorder %s55, %s58
      %p64 = scmp.eq.s32.totalorder %s33, 0
      %p65 = por %p63, %p64
      %p66 = scmp.ne.s32.totalorder %s55, %s58
      %p67 = scmp.eq.s32.totalorder %s38, 3
      %p68 = por %p66, %p67
      %p69 = scmp.ne.s32.totalorder %s58, %s59
      %p70 = scmp.eq.s32.totalorder %s38, 0
      %p71 = por %p69, %p70
      %p72 = scmp.ne.s32.totalorder %s58, %s59
      %p73 = scmp.eq.s32.totalorder %s39, 3
      %p74 = por %p72, %p73
      %p76 = scmp.ne.s32.totalorder %s59, %s75
      %p77 = scmp.eq.s32.totalorder %s39, 0
      %p78 = por %p76, %p77
      %s79 = ssub.s32 %s40, %s52
      %p80 = scmp.eq.s32.totalorder %s79, 0
      %s82 = sadd.s32 %s81, 1
      %s83 = scalar_select %p80, %s81, %s82
      %p86 = pneg %p80
      %p87 = scmp.eq.s32.totalorder %s33, 3
      %p88 = por %p86, %p87
      %p89 = scmp.ne.s32.totalorder %s81, %s84
      %p90 = scmp.eq.s32.totalorder %s33, 0
      %p91 = por %p89, %p90
      %p92 = scmp.ne.s32.totalorder %s81, %s84
      %p93 = scmp.eq.s32.totalorder %s38, 3
      %p94 = por %p92, %p93
      %p95 = scmp.ne.s32.totalorder %s84, %s85
      %p96 = scmp.eq.s32.totalorder %s38, 0
      %p97 = por %p95, %p96
      %p98 = scmp.ne.s32.totalorder %s84, %s85
      %p99 = scmp.eq.s32.totalorder %s39, 3
      %p100 = por %p98, %p99
      %p102 = scmp.ne.s32.totalorder %s85, %s101
      %p103 = scmp.eq.s32.totalorder %s39, 0
      %p104 = por %p102, %p103
      %s105 = ssub.s32 %s41, %s48
      %p106 = scmp.eq.s32.totalorder %s105, 0
      %s108 = sadd.s32 %s107, 1
      %s109 = scalar_select %p106, %s107, %s108
      %p112 = pneg %p106
      %p113 = scmp.eq.s32.totalorder %s33, 3
      %p114 = por %p112, %p113
      %p115 = scmp.ne.s32.totalorder %s107, %s110
      %p116 = scmp.eq.s32.totalorder %s33, 0
      %p117 = por %p115, %p116
      %p118 = scmp.ne.s32.totalorder %s107, %s110
      %p119 = scmp.eq.s32.totalorder %s38, 3
      %p120 = por %p118, %p119
      %p121 = scmp.ne.s32.totalorder %s110, %s111
      %p122 = scmp.eq.s32.totalorder %s38, 0
      %p123 = por %p121, %p122
      %p124 = scmp.ne.s32.totalorder %s110, %s111
      %p125 = scmp.eq.s32.totalorder %s39, 3
      %p126 = por %p124, %p125
      %p128 = scmp.ne.s32.totalorder %s111, %s127
      %p129 = scmp.eq.s32.totalorder %s39, 0
      %p130 = por %p128, %p129
      %s131 = ssub.s32 %s41, %s48
      %p132 = scmp.eq.s32.totalorder %s131, 0
      %s134 = sadd.s32 %s133, 1
      %s135 = scalar_select %p132, %s133, %s134
      %p138 = pneg %p132
      %p139 = scmp.eq.s32.totalorder %s33, 3
      %p140 = por %p138, %p139
      %p141 = scmp.ne.s32.totalorder %s133, %s136
      %p142 = scmp.eq.s32.totalorder %s33, 0
      %p143 = por %p141, %p142
      %p144 = scmp.ne.s32.totalorder %s133, %s136
      %p145 = scmp.eq.s32.totalorder %s38, 3
      %p146 = por %p144, %p145
      %p147 = scmp.ne.s32.totalorder %s136, %s137
      %p148 = scmp.eq.s32.totalorder %s38, 0
      %p149 = por %p147, %p148
      %p150 = scmp.ne.s32.totalorder %s136, %s137
      %p151 = scmp.eq.s32.totalorder %s39, 3
      %p152 = por %p150, %p151
      %p154 = scmp.ne.s32.totalorder %s137, %s153
      %p155 = scmp.eq.s32.totalorder %s39, 0
      %p156 = por %p154, %p155
      %s157 = ssub.s32 %s41, %s48
      %p158 = scmp.eq.s32.totalorder %s157, 0
      %s160 = sadd.s32 %s159, 1
      %s161 = scalar_select %p158, %s159, %s160
      %p164 = pneg %p158
      %p165 = scmp.eq.s32.totalorder %s33, 3
      %p166 = por %p164, %p165
      %p167 = scmp.ne.s32.totalorder %s159, %s162
      %p168 = scmp.eq.s32.totalorder %s33, 0
      %p169 = por %p167, %p168
      %p170 = scmp.ne.s32.totalorder %s159, %s162
      %p171 = scmp.eq.s32.totalorder %s38, 3
      %p172 = por %p170, %p171
      %p173 = scmp.ne.s32.totalorder %s162, %s163
      %p174 = scmp.eq.s32.totalorder %s38, 0
      %p175 = por %p173, %p174
      %p176 = scmp.ne.s32.totalorder %s162, %s163
      %p177 = scmp.eq.s32.totalorder %s39, 3
      %p178 = por %p176, %p177
      %p180 = scmp.ne.s32.totalorder %s163, %s179
      %p181 = scmp.eq.s32.totalorder %s39, 0
      %p182 = por %p180, %p181
      %s183 = ssub.s32 %s41, %s48
      %p184 = scmp.eq.s32.totalorder %s183, 0
      %s186 = sadd.s32 %s185, 1
      %s187 = scalar_select %p184, %s185, %s186
      %p190 = pneg %p184
      %p191 = scmp.eq.s32.totalorder %s33, 3
      %p192 = por %p190, %p191
      %p193 = scmp.ne.s32.totalorder %s185, %s188
      %p194 = scmp.eq.s32.totalorder %s33, 0
      %p195 = por %p193, %p194
      %p196 = scmp.ne.s32.totalorder %s185, %s188
      %p197 = scmp.eq.s32.totalorder %s38, 3
      %p198 = por %p196, %p197
      %p199 = scmp.ne.s32.totalorder %s188, %s189
      %p200 = scmp.eq.s32.totalorder %s38, 0
      %p201 = por %p199, %p200
      %p202 = scmp.ne.s32.totalorder %s188, %s189
      %p203 = scmp.eq.s32.totalorder %s39, 3
      %p204 = por %p202, %p203
      %p206 = scmp.ne.s32.totalorder %s189, %s205
      %p207 = scmp.eq.s32.totalorder %s39, 0
      %p208 = por %p206, %p207
      %s209 = ssub.s32 %s41, %s48
      %p210 = scmp.eq.s32.totalorder %s209, 0
      %s212 = sadd.s32 %s211, 1
      %s213 = scalar_select %p210, %s211, %s212
      %p216 = pneg %p210
      %p217 = scmp.eq.s32.totalorder %s33, 3
      %p218 = por %p216, %p217
      %p219 = scmp.ne.s32.totalorder %s211, %s214
      %p220 = scmp.eq.s32.totalorder %s33, 0
      %p221 = por %p219, %p220
      %p222 = scmp.ne.s32.totalorder %s211, %s214
      %p223 = scmp.eq.s32.totalorder %s38, 3
      %p224 = por %p222, %p223
      %p225 = scmp.ne.s32.totalorder %s214, %s215
      %p226 = scmp.eq.s32.totalorder %s38, 0
      %p227 = por %p225, %p226
      %p228 = scmp.ne.s32.totalorder %s214, %s215
      %p229 = scmp.eq.s32.totalorder %s39, 3
      %p230 = por %p228, %p229
      %p232 = scmp.ne.s32.totalorder %s215, %s231
      %p233 = scmp.eq.s32.totalorder %s39, 0
      %p234 = por %p232, %p233
      %s235 = ssub.s32 %s41, %s48
      %p236 = scmp.eq.s32.totalorder %s235, 0
      %s238 = sadd.s32 %s237, 1
      %s239 = scalar_select %p236, %s237, %s238
      %p242 = pneg %p236
      %p243 = scmp.eq.s32.totalorder %s33, 3
      %p244 = por %p242, %p243
      %p245 = scmp.ne.s32.totalorder %s237, %s240
      %p246 = scmp.eq.s32.totalorder %s33, 0
      %p247 = por %p245, %p246
      %p248 = scmp.ne.s32.totalorder %s237, %s240
      %p249 = scmp.eq.s32.totalorder %s38, 3
      %p250 = por %p248, %p249
      %p251 = scmp.ne.s32.totalorder %s240, %s241
      %p252 = scmp.eq.s32.totalorder %s38, 0
      %p253 = por %p251, %p252
      %p254 = scmp.ne.s32.totalorder %s240, %s241
      %p255 = scmp.eq.s32.totalorder %s39, 3
      %p256 = por %p254, %p255
      %p258 = scmp.ne.s32.totalorder %s241, %s257
      %p259 = scmp.eq.s32.totalorder %s39, 0
      %p260 = por %p258, %p259
      %s261 = ssub.s32 %s41, %s48
      %p262 = scmp.eq.s32.totalorder %s261, 0
      %s264 = sadd.s32 %s263, 1
      %s265 = scalar_select %p262, %s263, %s264
      %p268 = pneg %p262
      %p269 = scmp.eq.s32.totalorder %s33, 3
      %p270 = por %p268, %p269
      %p271 = scmp.ne.s32.totalorder %s263, %s266
      %p272 = scmp.eq.s32.totalorder %s33, 0
      %p273 = por %p271, %p272
      %p274 = scmp.ne.s32.totalorder %s263, %s266
      %p275 = scmp.eq.s32.totalorder %s38, 3
      %p276 = por %p274, %p275
      %p277 = scmp.ne.s32.totalorder %s266, %s267
      %p278 = scmp.eq.s32.totalorder %s38, 0
      %p279 = por %p277, %p278
      %p280 = scmp.ne.s32.totalorder %s266, %s267
      %p281 = scmp.eq.s32.totalorder %s39, 3
      %p282 = por %p280, %p281
      %p284 = scmp.ne.s32.totalorder %s267, %s283
      %p285 = scmp.eq.s32.totalorder %s39, 0
      %p286 = por %p284, %p285
      %s287 = ssub.s32 %s41, %s48
      %p288 = scmp.eq.s32.totalorder %s287, 0
      %s290 = sadd.s32 %s289, 1
      %s291 = scalar_select %p288, %s289, %s290
      %p294 = pneg %p288
      %p295 = scmp.eq.s32.totalorder %s33, 3
      %p296 = por %p294, %p295
      %p297 = scmp.ne.s32.totalorder %s289, %s292
      %p298 = scmp.eq.s32.totalorder %s33, 0
      %p299 = por %p297, %p298
      %p300 = scmp.ne.s32.totalorder %s289, %s292
      %p301 = scmp.eq.s32.totalorder %s38, 3
      %p302 = por %p300, %p301
      %p303 = scmp.ne.s32.totalorder %s292, %s293
      %p304 = scmp.eq.s32.totalorder %s38, 0
      %p305 = por %p303, %p304
      %p306 = scmp.ne.s32.totalorder %s292, %s293
      %p307 = scmp.eq.s32.totalorder %s39, 3
      %p308 = por %p306, %p307
      %p310 = scmp.ne.s32.totalorder %s293, %s309
      %p311 = scmp.eq.s32.totalorder %s39, 0
      %p312 = por %p310, %p311
      %s314 = sadd.s32 %s313, 1
      %p317 = scmp.eq.s32.totalorder %s33, 3
      %p318 = scmp.ne.s32.totalorder %s313, %s315
      %p319 = scmp.eq.s32.totalorder %s33, 0
      %p320 = por %p318, %p319
      %p321 = scmp.ne.s32.totalorder %s313, %s315
      %p322 = scmp.eq.s32.totalorder %s38, 3
      %p323 = por %p321, %p322
      %p324 = scmp.ne.s32.totalorder %s315, %s316
      %p325 = scmp.eq.s32.totalorder %s38, 0
      %p326 = por %p324, %p325
      %p327 = scmp.ne.s32.totalorder %s315, %s316
      %p328 = scmp.eq.s32.totalorder %s39, 3
      %p329 = por %p327, %p328
      %p331 = scmp.ne.s32.totalorder %s316, %s330
      %p332 = scmp.eq.s32.totalorder %s39, 0
      %p333 = por %p331, %p332
      %s335 = sadd.s32 %s334, 1
      %p338 = scmp.eq.s32.totalorder %s33, 3
      %p339 = scmp.ne.s32.totalorder %s334, %s336
      %p340 = scmp.eq.s32.totalorder %s33, 0
      %p341 = por %p339, %p340
      %p342 = scmp.ne.s32.totalorder %s334, %s336
      %p343 = scmp.eq.s32.totalorder %s38, 3
      %p344 = por %p342, %p343
      %p345 = scmp.ne.s32.totalorder %s336, %s337
      %p346 = scmp.eq.s32.totalorder %s38, 0
      %p347 = por %p345, %p346
      %p348 = scmp.ne.s32.totalorder %s336, %s337
      %p349 = scmp.eq.s32.totalorder %s39, 3
      %p350 = por %p348, %p349
      %p352 = scmp.ne.s32.totalorder %s337, %s351
      %p353 = scmp.eq.s32.totalorder %s39, 0
      %p354 = por %p352, %p353
      %s355 = ssub.s32 %s40, %s52
      %p356 = scmp.eq.s32.totalorder %s355, 0
      %s358 = sadd.s32 %s357, 1
      %s359 = scalar_select %p356, %s357, %s358
      %p362 = pneg %p356
      %p363 = scmp.eq.s32.totalorder %s33, 3
      %p364 = por %p362, %p363
      %p365 = scmp.ne.s32.totalorder %s357, %s360
      %p366 = scmp.eq.s32.totalorder %s33, 0
      %p367 = por %p365, %p366
      %p368 = scmp.ne.s32.totalorder %s357, %s360
      %p369 = scmp.eq.s32.totalorder %s38, 3
      %p370 = por %p368, %p369
      %p371 = scmp.ne.s32.totalorder %s360, %s361
      %p372 = scmp.eq.s32.totalorder %s38, 0
      %p373 = por %p371, %p372
      %p374 = scmp.ne.s32.totalorder %s360, %s361
      %p375 = scmp.eq.s32.totalorder %s39, 3
      %p376 = por %p374, %p375
      %p378 = scmp.ne.s32.totalorder %s361, %s377
      %p379 = scmp.eq.s32.totalorder %s39, 0
      %p380 = por %p378, %p379
      %p381 = scmp.le.s32.totalorder 1, %s33
      %p382 = scmp.lt.s32.totalorder %s33, 5
      %p383 = pnand %p381, %p382
      %p384 = pneg %p383
      // Predicated region
      $region9: #{tpu_custom_call.1} parent=5 // pred_check
        _
      $region10: #{tpu_custom_call.1} parent=5 // pred_check_branch
        %386 = sbr.rel (%p383) target = $region12
      $region11: #{tpu_custom_call.1} parent=5 // pred_region
        %s387 = ssub.s32 %s33, 1
        // Predicated region
        $region13: #{tpu_custom_call.1} parent=11 // pred_check
          %p388 = pneg %p326
        $region14: #{tpu_custom_call.1} parent=11 // pred_check_branch
          %390 = sbr.rel (%p388) target = $region16
        $region15: #{tpu_custom_call.1} parent=11 // pred_region
          _
        $region16: #{tpu_custom_call.1} parent=11 // pred_fallthru
          _
        // Predicated region
        $region17: #{tpu_custom_call.1} parent=11 // pred_check
          %p391 = pneg %p347
        $region18: #{tpu_custom_call.1} parent=11 // pred_check_branch
          %393 = sbr.rel (%p391) target = $region20
        $region19: #{tpu_custom_call.1} parent=11 // pred_region
          _
        $region20: #{tpu_custom_call.1} parent=11 // pred_fallthru
          _
      $region12: #{tpu_custom_call.1} parent=5 // pred_fallthru
        _
      %p394 = scmp.lt.s32.totalorder %s33, 4
      // Predicated region
      $region21: #{tpu_custom_call.1} parent=5 // pred_check
        %p395 = pneg %p394
      $region22: #{tpu_custom_call.1} parent=5 // pred_check_branch
        %397 = sbr.rel (%p395) target = $region24
      $region23: #{tpu_custom_call.1} parent=5 // pred_region
        // Predicated region
        $region25: #{tpu_custom_call.1} parent=23 // pred_check
          %p398 = pneg %p65
        $region26: #{tpu_custom_call.1} parent=23 // pred_check_branch
          %400 = sbr.rel (%p398) target = $region28
        $region27: #{tpu_custom_call.1} parent=23 // pred_region
          %s401 = sand.u32 %s55, 1
          %s402 = scalar_lea.sflag [#allocation4], %s401
          %s403 = sand.u32 %s55, 1
          %s404 = scalar_lea.vmem [#allocation3], %s403
          %s406 = ssub.s32 16, 16
          %407 = vsyncadd %s402, %s406
          %s408 = smul.addr %s40, 16
          %s409 = scalar_lea.hbm %s0, %s408
          %s411 = sshll.u32 %s404, 4
          %s412 = int_to_ptr.vmem [resolvable:$true] %s411
          %414 = dma.hbm_to_vmem [thread:$0]  %s409, 16, %s412, %s402
        $region28: #{tpu_custom_call.1} parent=23 // pred_fallthru
          _
        // Predicated region
        $region29: #{tpu_custom_call.1} parent=23 // pred_check
          %p415 = pneg %p91
        $region30: #{tpu_custom_call.1} parent=23 // pred_check_branch
          %417 = sbr.rel (%p415) target = $region32
        $region31: #{tpu_custom_call.1} parent=23 // pred_region
          %s418 = sand.u32 %s33, 1
          %s419 = scalar_lea.sflag [#allocation7], %s418
          %s420 = sand.u32 %s81, 1
          %s421 = smul.addr %s420, 8
          %s422 = scalar_lea.vmem [#allocation6], %s421
          %s424 = ssub.s32 128, 128
          %425 = vsyncadd %s419, %s424
          %s426 = smul.addr %s40, 128
          %s427 = scalar_lea.hbm %s1, %s426
          %s429 = sshll.u32 %s422, 4
          %s430 = int_to_ptr.vmem [resolvable:$true] %s429
          %432 = dma.hbm_to_vmem [thread:$0]  %s427, 128, %s430, %s419
        $region32: #{tpu_custom_call.1} parent=23 // pred_fallthru
          _
        // Predicated region
        $region33: #{tpu_custom_call.1} parent=23 // pred_check
          %p433 = pneg %p117
        $region34: #{tpu_custom_call.1} parent=23 // pred_check_branch
          %435 = sbr.rel (%p433) target = $region36
        $region35: #{tpu_custom_call.1} parent=23 // pred_region
          %p436 = scmp.lt.s32.totalorder %s41, 1
          %s437 = scalar_select %p436, %s41, 1
          %s438 = scalar_lea.vmem %s2, %s437
        $region36: #{tpu_custom_call.1} parent=23 // pred_fallthru
          _
        // Predicated region
        $region37: #{tpu_custom_call.1} parent=23 // pred_check
          %p439 = pneg %p143
        $region38: #{tpu_custom_call.1} parent=23 // pred_check_branch
          %441 = sbr.rel (%p439) target = $region40
        $region39: #{tpu_custom_call.1} parent=23 // pred_region
          %p442 = scmp.lt.s32.totalorder %s41, 1
          %s443 = scalar_select %p442, %s41, 1
          %s444 = scalar_lea.vmem %s3, %s443
        $region40: #{tpu_custom_call.1} parent=23 // pred_fallthru
          _
        // Predicated region
        $region41: #{tpu_custom_call.1} parent=23 // pred_check
          %p445 = pneg %p169
        $region42: #{tpu_custom_call.1} parent=23 // pred_check_branch
          %447 = sbr.rel (%p445) target = $region44
        $region43: #{tpu_custom_call.1} parent=23 // pred_region
          %s448 = sand.u32 %s33, 1
          %s449 = scalar_lea.sflag [#allocation7], %s448
          %s450 = sand.u32 %s159, 1
          %s451 = smul.addr %s450, 768
          %s452 = scalar_lea.vmem [#allocation8], %s451
          %s454 = ssub.s32 12288, 12288
          %455 = vsyncadd %s449, %s454
          %s456 = smul.addr %s41, 192
          %s457 = smul.addr %s456, 64
          %s458 = scalar_lea.hbm %s4, %s457
          %s459 = sshll.u32 %s452, 4
          %s460 = int_to_ptr.vmem [resolvable:$true] %s459
          %465 = dma.hbm_to_vmem [thread:$0]  %s458, 12288, %s460, %s449, 768, 768, 48
        $region44: #{tpu_custom_call.1} parent=23 // pred_fallthru
          _
        // Predicated region
        $region45: #{tpu_custom_call.1} parent=23 // pred_check
          %p466 = pneg %p195
        $region46: #{tpu_custom_call.1} parent=23 // pred_check_branch
          %468 = sbr.rel (%p466) target = $region48
        $region47: #{tpu_custom_call.1} parent=23 // pred_region
          %s469 = sand.u32 %s33, 1
          %s470 = scalar_lea.sflag [#allocation10], %s469
          %s471 = sand.u32 %s185, 1
          %s472 = smul.addr %s471, 256
          %s473 = scalar_lea.vmem [#allocation9], %s472
          %s475 = ssub.s32 4096, 4096
          %476 = vsyncadd %s470, %s475
          %s477 = smul.addr %s41, 64
          %s478 = smul.addr %s477, 64
          %s479 = scalar_lea.hbm %s5, %s478
          %s480 = sshll.u32 %s473, 4
          %s481 = int_to_ptr.vmem [resolvable:$true] %s480
          %486 = dma.hbm_to_vmem [thread:$0]  %s479, 4096, %s481, %s470, 64, 64, 4
        $region48: #{tpu_custom_call.1} parent=23 // pred_fallthru
          _
        // Predicated region
        $region49: #{tpu_custom_call.1} parent=23 // pred_check
          %p487 = pneg %p221
        $region50: #{tpu_custom_call.1} parent=23 // pred_check_branch
          %489 = sbr.rel (%p487) target = $region52
        $region51: #{tpu_custom_call.1} parent=23 // pred_region
          %s490 = sand.u32 %s33, 1
          %s491 = scalar_lea.sflag [#allocation10], %s490
          %s492 = sand.u32 %s211, 1
          %s493 = smul.addr %s492, 64
          %s494 = scalar_lea.vmem [#allocation11], %s493
          %s496 = ssub.s32 1024, 1024
          %497 = vsyncadd %s491, %s496
          %s498 = smul.addr %s41, 16
          %s499 = smul.addr %s498, 64
          %s500 = scalar_lea.hbm %s6, %s499
          %s501 = sshll.u32 %s494, 4
          %s502 = int_to_ptr.vmem [resolvable:$true] %s501
          %507 = dma.hbm_to_vmem [thread:$0]  %s500, 1024, %s502, %s491, 64, 64, 4
        $region52: #{tpu_custom_call.1} parent=23 // pred_fallthru
          _
        // Predicated region
        $region53: #{tpu_custom_call.1} parent=23 // pred_check
          %p508 = pneg %p247
        $region54: #{tpu_custom_call.1} parent=23 // pred_check_branch
          %510 = sbr.rel (%p508) target = $region56
        $region55: #{tpu_custom_call.1} parent=23 // pred_region
          %p511 = scmp.lt.s32.totalorder %s41, 1
          %s512 = scalar_select %p511, %s41, 1
          %s513 = scalar_lea.vmem %s7, %s512
        $region56: #{tpu_custom_call.1} parent=23 // pred_fallthru
          _
        // Predicated region
        $region57: #{tpu_custom_call.1} parent=23 // pred_check
          %p514 = pneg %p273
        $region58: #{tpu_custom_call.1} parent=23 // pred_check_branch
          %516 = sbr.rel (%p514) target = $region60
        $region59: #{tpu_custom_call.1} parent=23 // pred_region
          %s517 = sand.u32 %s263, 1
          %s518 = scalar_lea.sflag [#allocation13], %s517
          %s519 = sand.u32 %s263, 1
          %s520 = smul.addr %s519, 64
          %s521 = scalar_lea.vmem [#allocation12], %s520
          %s523 = ssub.s32 1024, 1024
          %524 = vsyncadd %s518, %s523
          %s525 = smul.addr %s41, 16
          %s526 = smul.addr %s525, 64
          %s527 = scalar_lea.hbm %s8, %s526
          %s528 = sshll.u32 %s521, 4
          %s529 = int_to_ptr.vmem [resolvable:$true] %s528
          %534 = dma.hbm_to_vmem [thread:$0]  %s527, 1024, %s529, %s518, 64, 64, 4
        $region60: #{tpu_custom_call.1} parent=23 // pred_fallthru
          _
        // Predicated region
        $region61: #{tpu_custom_call.1} parent=23 // pred_check
          %p535 = pneg %p299
        $region62: #{tpu_custom_call.1} parent=23 // pred_check_branch
          %537 = sbr.rel (%p535) target = $region64
        $region63: #{tpu_custom_call.1} parent=23 // pred_region
          %p538 = scmp.lt.s32.totalorder %s41, 1
          %s539 = scalar_select %p538, %s41, 1
          %s540 = scalar_lea.vmem %s9, %s539
        $region64: #{tpu_custom_call.1} parent=23 // pred_fallthru
          _
      $region24: #{tpu_custom_call.1} parent=5 // pred_fallthru
        _
      %p541 = scmp.le.s32.totalorder 1, %s33
      %p542 = scmp.lt.s32.totalorder %s33, 5
      %p543 = pnand %p541, %p542
      %p544 = pneg %p543
      // Predicated region
      $region65: #{tpu_custom_call.1} parent=5 // pred_check
        _
      $region66: #{tpu_custom_call.1} parent=5 // pred_check_branch
        %546 = sbr.rel (%p543) target = $region68
      $region67: #{tpu_custom_call.1} parent=5 // pred_region
        %s547 = ssub.s32 %s33, 1
        %s548 = sand.u32 %s58, 1
        %s549 = scalar_lea.sflag [#allocation4], %s548
        %s550 = sand.u32 %s58, 1
        %s551 = scalar_lea.vmem [#allocation3], %s550
        // Predicated region
        $region69: #{tpu_custom_call.1} parent=67 // pred_check
          %p552 = pneg %p71
        $region70: #{tpu_custom_call.1} parent=67 // pred_check_branch
          %554 = sbr.rel (%p552) target = $region72
        $region71: #{tpu_custom_call.1} parent=67 // pred_region
          %555 = dma.done %s549, 16
        $region72: #{tpu_custom_call.1} parent=67 // pred_fallthru
          _
        %s556 = sand.u32 %s38, 1
        %s557 = scalar_lea.sflag [#allocation7], %s556
        %s558 = sand.u32 %s84, 1
        %s559 = smul.addr %s558, 8
        %s560 = scalar_lea.vmem [#allocation6], %s559
        // Predicated region
        $region73: #{tpu_custom_call.1} parent=67 // pred_check
          %p561 = pneg %p97
        $region74: #{tpu_custom_call.1} parent=67 // pred_check_branch
          %563 = sbr.rel (%p561) target = $region76
        $region75: #{tpu_custom_call.1} parent=67 // pred_region
          %564 = dma.done %s557, 128
        $region76: #{tpu_custom_call.1} parent=67 // pred_fallthru
          _
        %s565 = sand.u32 %s38, 1
        %s566 = scalar_lea.sflag [#allocation7], %s565
        %s567 = sand.u32 %s162, 1
        %s568 = smul.addr %s567, 768
        %s569 = scalar_lea.vmem [#allocation8], %s568
        // Predicated region
        $region77: #{tpu_custom_call.1} parent=67 // pred_check
          %p570 = pneg %p175
        $region78: #{tpu_custom_call.1} parent=67 // pred_check_branch
          %572 = sbr.rel (%p570) target = $region80
        $region79: #{tpu_custom_call.1} parent=67 // pred_region
          %573 = dma.done %s566, 12288
        $region80: #{tpu_custom_call.1} parent=67 // pred_fallthru
          _
        %s574 = sand.u32 %s38, 1
        %s575 = scalar_lea.sflag [#allocation10], %s574
        %s576 = sand.u32 %s188, 1
        %s577 = smul.addr %s576, 256
        %s578 = scalar_lea.vmem [#allocation9], %s577
        // Predicated region
        $region81: #{tpu_custom_call.1} parent=67 // pred_check
          %p579 = pneg %p201
        $region82: #{tpu_custom_call.1} parent=67 // pred_check_branch
          %581 = sbr.rel (%p579) target = $region84
        $region83: #{tpu_custom_call.1} parent=67 // pred_region
          %582 = dma.done %s575, 4096
        $region84: #{tpu_custom_call.1} parent=67 // pred_fallthru
          _
        %s583 = sand.u32 %s38, 1
        %s584 = scalar_lea.sflag [#allocation10], %s583
        %s585 = sand.u32 %s214, 1
        %s586 = smul.addr %s585, 64
        %s587 = scalar_lea.vmem [#allocation11], %s586
        // Predicated region
        $region85: #{tpu_custom_call.1} parent=67 // pred_check
          %p588 = pneg %p227
        $region86: #{tpu_custom_call.1} parent=67 // pred_check_branch
          %590 = sbr.rel (%p588) target = $region88
        $region87: #{tpu_custom_call.1} parent=67 // pred_region
          %591 = dma.done %s584, 1024
        $region88: #{tpu_custom_call.1} parent=67 // pred_fallthru
          _
        %s592 = sand.u32 %s266, 1
        %s593 = scalar_lea.sflag [#allocation13], %s592
        %s594 = sand.u32 %s266, 1
        %s595 = smul.addr %s594, 64
        %s596 = scalar_lea.vmem [#allocation12], %s595
        // Predicated region
        $region89: #{tpu_custom_call.1} parent=67 // pred_check
          %p597 = pneg %p279
        $region90: #{tpu_custom_call.1} parent=67 // pred_check_branch
          %599 = sbr.rel (%p597) target = $region92
        $region91: #{tpu_custom_call.1} parent=67 // pred_region
          %600 = dma.done %s593, 1024
        $region92: #{tpu_custom_call.1} parent=67 // pred_fallthru
          _
        %s601 = sand.u32 %s58, 1
        %s602 = scalar_lea.sflag [#allocation4], %s601
        %s603 = sand.u32 %s58, 1
        %s604 = scalar_lea.vmem [#allocation3], %s603
        %p605 = pneg %p71
        %p606 = pneg %p68
        %s607 = sand.u32 %s38, 1
        %s608 = scalar_lea.sflag [#allocation7], %s607
        %s609 = sand.u32 %s84, 1
        %s610 = smul.addr %s609, 8
        %s611 = scalar_lea.vmem [#allocation6], %s610
        %p612 = pneg %p97
        %p613 = pneg %p94
        %p614 = scmp.lt.s32.totalorder %s43, 1
        %s615 = scalar_select %p614, %s43, 1
        %s616 = scalar_lea.vmem %s2, %s615
        %p617 = pneg %p123
        %p618 = pneg %p120
        %p619 = scmp.lt.s32.totalorder %s43, 1
        %s620 = scalar_select %p619, %s43, 1
        %s621 = scalar_lea.vmem %s3, %s620
        %p622 = pneg %p149
        %p623 = pneg %p146
        %s624 = sand.u32 %s38, 1
        %s625 = scalar_lea.sflag [#allocation7], %s624
        %s626 = sand.u32 %s162, 1
        %s627 = smul.addr %s626, 768
        %s628 = scalar_lea.vmem [#allocation8], %s627
        %p629 = pneg %p175
        %p630 = pneg %p172
        %s631 = sand.u32 %s38, 1
        %s632 = scalar_lea.sflag [#allocation10], %s631
        %s633 = sand.u32 %s188, 1
        %s634 = smul.addr %s633, 256
        %s635 = scalar_lea.vmem [#allocation9], %s634
        %p636 = pneg %p201
        %p637 = pneg %p198
        %s638 = sand.u32 %s38, 1
        %s639 = scalar_lea.sflag [#allocation10], %s638
        %s640 = sand.u32 %s214, 1
        %s641 = smul.addr %s640, 64
        %s642 = scalar_lea.vmem [#allocation11], %s641
        %p643 = pneg %p227
        %p644 = pneg %p224
        %p645 = scmp.lt.s32.totalorder %s43, 1
        %s646 = scalar_select %p645, %s43, 1
        %s647 = scalar_lea.vmem %s7, %s646
        %p648 = pneg %p253
        %p649 = pneg %p250
        %s650 = sand.u32 %s266, 1
        %s651 = scalar_lea.sflag [#allocation13], %s650
        %s652 = sand.u32 %s266, 1
        %s653 = smul.addr %s652, 64
        %s654 = scalar_lea.vmem [#allocation12], %s653
        %p655 = pneg %p279
        %p656 = pneg %p276
        %p657 = scmp.lt.s32.totalorder %s43, 1
        %s658 = scalar_select %p657, %s43, 1
        %s659 = scalar_lea.vmem %s9, %s658
        %p660 = pneg %p305
        %p661 = pneg %p302
        %p662 = pneg %p326
        %p663 = pneg %p323
        %p664 = pneg %p347
        %p665 = pneg %p344
        %p666 = pneg %p373
        %p667 = pneg %p370
        %s668 = sand.u32 %s360, 1
        %s669 = scalar_lea.sflag [#allocation5], %s668
        %s670 = sand.u32 %s360, 1
        %s671 = smul.addr %s670, 8
        %s672 = scalar_lea.vmem [#allocation14], %s671
        %p673 = scmp.lt.s32.totalorder %s43, 1
        %s674 = scalar_select %p673, %s43, 1
        %s675 = scalar_lea.vmem %s2, %s674
        %p676 = scmp.lt.s32.totalorder %s43, 1
        %s677 = scalar_select %p676, %s43, 1
        %s678 = scalar_lea.vmem %s3, %s677
        %p679 = scmp.lt.s32.totalorder %s43, 1
        %s680 = scalar_select %p679, %s43, 1
        %s681 = scalar_lea.vmem %s7, %s680
        %p682 = scmp.lt.s32.totalorder %s43, 1
        %s683 = scalar_select %p682, %s43, 1
        %s684 = scalar_lea.vmem %s9, %s683
        %p686 = scmp.eq.s32.totalorder %s43, 0
        // Predicated region
        $region93: #{tpu_custom_call.1} parent=67 // pred_check
          %p687 = pneg %p686
        $region94: #{tpu_custom_call.1} parent=67 // pred_check_branch
          %689 = sbr.rel (%p687) target = $region96
        $region95: #{tpu_custom_call.1} parent=67 // pred_region
          %v690 = vld [vmem:[%s560] sm:$0xff]
          %691 = vst [vmem:[#allocation2] sm:$0xff] %v690
        $region96: #{tpu_custom_call.1} parent=67 // pred_fallthru
          _
        %v692 = vld [vmem:[#allocation2] sm:$0xff]
        %v693 = vld [vmem:[%s551] sm:$0x1]
        %v694 = vld [vmem:[%s675] sm:$0x1]
        %v695 = vld [vmem:[%s678] sm:$0x1]
        %696 = vadd.xlane.f32.xlu0 %v692
        %v697 = vpop.xlane.xlu0 %696
        %v698 = vmul.f32 %v697, 0.03125
        %v699 = vmul.f32 %v692, %v692
        %700 = vadd.xlane.f32.xlu0 %v699
        %v701 = vpop.xlane.xlu0 %700
        %v702 = vmul.f32 %v701, 0.03125
        %v703 = vmul.f32 %v698, %v698
        %v704 = vsub.f32 %v702, %v703
        %v705 = vsub.f32 %v692, %v698
        %v706 = vadd.f32 %v704, 1e-06
        %v707 = vrsqrt.pop %v706
        %v708 = vmul.f32 %v705, %v707
        %v710 = vlaneseq
        %v711 = vshrl.u32 %v710, 7
        %v712 = vsub.s32 0, %v711
        %v713 = vrot.slane %v694, %v712
        %v715 = vmul.f32 %v708, %v713
        %v717 = vlaneseq
        %v718 = vshrl.u32 %v717, 7
        %v719 = vsub.s32 0, %v718
        %v720 = vrot.slane %v695, %v719
        %v722 = vadd.f32 %v715, %v720
        %v723 = vpack.c.bf16 %v722, %v722
        %v724 = vld [vmem:[%s569] sm:$0xff]
        %v725 = vld [vmem:[%s569 + $0x8] sm:$0xff]
        %v726 = vld [vmem:[%s569 + $0x10] sm:$0xff]
        %v727 = vld [vmem:[%s569 + $0x18] sm:$0xff]
        %v728 = vld [vmem:[%s569 + $0x20] sm:$0xff]
        %v729 = vld [vmem:[%s569 + $0x28] sm:$0xff]
        %v730 = vld [vmem:[%s569 + $0x30] sm:$0xff]
        %v731 = vld [vmem:[%s569 + $0x38] sm:$0xff]
        %v732 = vld [vmem:[%s569 + $0x40] sm:$0xff]
        %v733 = vld [vmem:[%s569 + $0x48] sm:$0xff]
        %v734 = vld [vmem:[%s569 + $0x50] sm:$0xff]
        %v735 = vld [vmem:[%s569 + $0x58] sm:$0xff]
        %v736 = vld [vmem:[%s569 + $0x60] sm:$0xff]
        %v737 = vld [vmem:[%s569 + $0x68] sm:$0xff]
        %v738 = vld [vmem:[%s569 + $0x70] sm:$0xff]
        %v739 = vld [vmem:[%s569 + $0x78] sm:$0xff]
        %v740 = vld [vmem:[%s569 + $0x80] sm:$0xff]
        %v741 = vld [vmem:[%s569 + $0x88] sm:$0xff]
        %v742 = vld [vmem:[%s569 + $0x90] sm:$0xff]
        %v743 = vld [vmem:[%s569 + $0x98] sm:$0xff]
        %v744 = vld [vmem:[%s569 + $0xa0] sm:$0xff]
        %v745 = vld [vmem:[%s569 + $0xa8] sm:$0xff]
        %v746 = vld [vmem:[%s569 + $0xb0] sm:$0xff]
        %v747 = vld [vmem:[%s569 + $0xb8] sm:$0xff]
        %v748 = vld [vmem:[%s569 + $0xc0] sm:$0xff]
        %v749 = vld [vmem:[%s569 + $0xc8] sm:$0xff]
        %v750 = vld [vmem:[%s569 + $0xd0] sm:$0xff]
        %v751 = vld [vmem:[%s569 + $0xd8] sm:$0xff]
        %v752 = vld [vmem:[%s569 + $0xe0] sm:$0xff]
        %v753 = vld [vmem:[%s569 + $0xe8] sm:$0xff]
        %v754 = vld [vmem:[%s569 + $0xf0] sm:$0xff]
        %v755 = vld [vmem:[%s569 + $0xf8] sm:$0xff]
        %v756 = vld [vmem:[%s569 + $0x100] sm:$0xff]
        %v757 = vld [vmem:[%s569 + $0x108] sm:$0xff]
        %v758 = vld [vmem:[%s569 + $0x110] sm:$0xff]
        %v759 = vld [vmem:[%s569 + $0x118] sm:$0xff]
        %v760 = vld [vmem:[%s569 + $0x120] sm:$0xff]
        %v761 = vld [vmem:[%s569 + $0x128] sm:$0xff]
        %v762 = vld [vmem:[%s569 + $0x130] sm:$0xff]
        %v763 = vld [vmem:[%s569 + $0x138] sm:$0xff]
        %v764 = vld [vmem:[%s569 + $0x140] sm:$0xff]
        %v765 = vld [vmem:[%s569 + $0x148] sm:$0xff]
        %v766 = vld [vmem:[%s569 + $0x150] sm:$0xff]
        %v767 = vld [vmem:[%s569 + $0x158] sm:$0xff]
        %v768 = vld [vmem:[%s569 + $0x160] sm:$0xff]
        %v769 = vld [vmem:[%s569 + $0x168] sm:$0xff]
        %v770 = vld [vmem:[%s569 + $0x170] sm:$0xff]
        %v771 = vld [vmem:[%s569 + $0x178] sm:$0xff]
        %v772 = vld [vmem:[%s569 + $0x180] sm:$0xff]
        %v773 = vld [vmem:[%s569 + $0x188] sm:$0xff]
        %v774 = vld [vmem:[%s569 + $0x190] sm:$0xff]
        %v775 = vld [vmem:[%s569 + $0x198] sm:$0xff]
        %v776 = vld [vmem:[%s569 + $0x1a0] sm:$0xff]
        %v777 = vld [vmem:[%s569 + $0x1a8] sm:$0xff]
        %v778 = vld [vmem:[%s569 + $0x1b0] sm:$0xff]
        %v779 = vld [vmem:[%s569 + $0x1b8] sm:$0xff]
        %v780 = vld [vmem:[%s569 + $0x1c0] sm:$0xff]
        %v781 = vld [vmem:[%s569 + $0x1c8] sm:$0xff]
        %v782 = vld [vmem:[%s569 + $0x1d0] sm:$0xff]
        %v783 = vld [vmem:[%s569 + $0x1d8] sm:$0xff]
        %v784 = vld [vmem:[%s569 + $0x1e0] sm:$0xff]
        %v785 = vld [vmem:[%s569 + $0x1e8] sm:$0xff]
        %v786 = vld [vmem:[%s569 + $0x1f0] sm:$0xff]
        %v787 = vld [vmem:[%s569 + $0x1f8] sm:$0xff]
        %v788 = vld [vmem:[%s569 + $0x200] sm:$0xff]
        %v789 = vld [vmem:[%s569 + $0x208] sm:$0xff]
        %v790 = vld [vmem:[%s569 + $0x210] sm:$0xff]
        %v791 = vld [vmem:[%s569 + $0x218] sm:$0xff]
        %v792 = vld [vmem:[%s569 + $0x220] sm:$0xff]
        %v793 = vld [vmem:[%s569 + $0x228] sm:$0xff]
        %v794 = vld [vmem:[%s569 + $0x230] sm:$0xff]
        %v795 = vld [vmem:[%s569 + $0x238] sm:$0xff]
        %v796 = vld [vmem:[%s569 + $0x240] sm:$0xff]
        %v797 = vld [vmem:[%s569 + $0x248] sm:$0xff]
        %v798 = vld [vmem:[%s569 + $0x250] sm:$0xff]
        %v799 = vld [vmem:[%s569 + $0x258] sm:$0xff]
        %v800 = vld [vmem:[%s569 + $0x260] sm:$0xff]
        %v801 = vld [vmem:[%s569 + $0x268] sm:$0xff]
        %v802 = vld [vmem:[%s569 + $0x270] sm:$0xff]
        %v803 = vld [vmem:[%s569 + $0x278] sm:$0xff]
        %v804 = vld [vmem:[%s569 + $0x280] sm:$0xff]
        %v805 = vld [vmem:[%s569 + $0x288] sm:$0xff]
        %v806 = vld [vmem:[%s569 + $0x290] sm:$0xff]
        %v807 = vld [vmem:[%s569 + $0x298] sm:$0xff]
        %v808 = vld [vmem:[%s569 + $0x2a0] sm:$0xff]
        %v809 = vld [vmem:[%s569 + $0x2a8] sm:$0xff]
        %v810 = vld [vmem:[%s569 + $0x2b0] sm:$0xff]
        %v811 = vld [vmem:[%s569 + $0x2b8] sm:$0xff]
        %v812 = vld [vmem:[%s569 + $0x2c0] sm:$0xff]
        %v813 = vld [vmem:[%s569 + $0x2c8] sm:$0xff]
        %v814 = vld [vmem:[%s569 + $0x2d0] sm:$0xff]
        %v815 = vld [vmem:[%s569 + $0x2d8] sm:$0xff]
        %v816 = vld [vmem:[%s569 + $0x2e0] sm:$0xff]
        %v817 = vld [vmem:[%s569 + $0x2e8] sm:$0xff]
        %v818 = vld [vmem:[%s569 + $0x2f0] sm:$0xff]
        %v819 = vld [vmem:[%s569 + $0x2f8] sm:$0xff]
        %v916 = vunpack.c.l.b16 %v724
        %v917 = vunpack.c.h.b16 %v724
        %v918 = vunpack.c.l.b16 %v725
        %v919 = vunpack.c.h.b16 %v725
        %v920 = vunpack.c.l.b16 %v726
        %v921 = vunpack.c.h.b16 %v726
        %v922 = vunpack.c.l.b16 %v727
        %v923 = vunpack.c.h.b16 %v727
        %v924 = vunpack.c.l.b16 %v728
        %v925 = vunpack.c.h.b16 %v728
        %v926 = vunpack.c.l.b16 %v729
        %v927 = vunpack.c.h.b16 %v729
        %v928 = vunpack.c.l.b16 %v730
        %v929 = vunpack.c.h.b16 %v730
        %v930 = vunpack.c.l.b16 %v731
        %v931 = vunpack.c.h.b16 %v731
        %v932 = vunpack.c.l.b16 %v732
        %v933 = vunpack.c.h.b16 %v732
        %v934 = vunpack.c.l.b16 %v733
        %v935 = vunpack.c.h.b16 %v733
        %v936 = vunpack.c.l.b16 %v734
        %v937 = vunpack.c.h.b16 %v734
        %v938 = vunpack.c.l.b16 %v735
        %v939 = vunpack.c.h.b16 %v735
        %v940 = vunpack.c.l.b16 %v736
        %v941 = vunpack.c.h.b16 %v736
        %v942 = vunpack.c.l.b16 %v737
        %v943 = vunpack.c.h.b16 %v737
        %v944 = vunpack.c.l.b16 %v738
        %v945 = vunpack.c.h.b16 %v738
        %v946 = vunpack.c.l.b16 %v739
        %v947 = vunpack.c.h.b16 %v739
        %v948 = vunpack.c.l.b16 %v740
        %v949 = vunpack.c.h.b16 %v740
        %v950 = vunpack.c.l.b16 %v741
        %v951 = vunpack.c.h.b16 %v741
        %v952 = vunpack.c.l.b16 %v742
        %v953 = vunpack.c.h.b16 %v742
        %v954 = vunpack.c.l.b16 %v743
        %v955 = vunpack.c.h.b16 %v743
        %v956 = vunpack.c.l.b16 %v744
        %v957 = vunpack.c.h.b16 %v744
        %v958 = vunpack.c.l.b16 %v745
        %v959 = vunpack.c.h.b16 %v745
        %v960 = vunpack.c.l.b16 %v746
        %v961 = vunpack.c.h.b16 %v746
        %v962 = vunpack.c.l.b16 %v747
        %v963 = vunpack.c.h.b16 %v747
        %v964 = vunpack.c.l.b16 %v748
        %v965 = vunpack.c.h.b16 %v748
        %v966 = vunpack.c.l.b16 %v749
        %v967 = vunpack.c.h.b16 %v749
        %v968 = vunpack.c.l.b16 %v750
        %v969 = vunpack.c.h.b16 %v750
        %v970 = vunpack.c.l.b16 %v751
        %v971 = vunpack.c.h.b16 %v751
        %v972 = vunpack.c.l.b16 %v752
        %v973 = vunpack.c.h.b16 %v752
        %v974 = vunpack.c.l.b16 %v753
        %v975 = vunpack.c.h.b16 %v753
        %v976 = vunpack.c.l.b16 %v754
        %v977 = vunpack.c.h.b16 %v754
        %v978 = vunpack.c.l.b16 %v755
        %v979 = vunpack.c.h.b16 %v755
        %v980 = vunpack.c.l.b16 %v756
        %v981 = vunpack.c.h.b16 %v756
        %v982 = vunpack.c.l.b16 %v757
        %v983 = vunpack.c.h.b16 %v757
        %v984 = vunpack.c.l.b16 %v758
        %v985 = vunpack.c.h.b16 %v758
        %v986 = vunpack.c.l.b16 %v759
        %v987 = vunpack.c.h.b16 %v759
        %v988 = vunpack.c.l.b16 %v760
        %v989 = vunpack.c.h.b16 %v760
        %v990 = vunpack.c.l.b16 %v761
        %v991 = vunpack.c.h.b16 %v761
        %v992 = vunpack.c.l.b16 %v762
        %v993 = vunpack.c.h.b16 %v762
        %v994 = vunpack.c.l.b16 %v763
        %v995 = vunpack.c.h.b16 %v763
        %v996 = vunpack.c.l.b16 %v764
        %v997 = vunpack.c.h.b16 %v764
        %v998 = vunpack.c.l.b16 %v765
        %v999 = vunpack.c.h.b16 %v765
        %v1000 = vunpack.c.l.b16 %v766
        %v1001 = vunpack.c.h.b16 %v766
        %v1002 = vunpack.c.l.b16 %v767
        %v1003 = vunpack.c.h.b16 %v767
        %v1004 = vunpack.c.l.b16 %v768
        %v1005 = vunpack.c.h.b16 %v768
        %v1006 = vunpack.c.l.b16 %v769
        %v1007 = vunpack.c.h.b16 %v769
        %v1008 = vunpack.c.l.b16 %v770
        %v1009 = vunpack.c.h.b16 %v770
        %v1010 = vunpack.c.l.b16 %v771
        %v1011 = vunpack.c.h.b16 %v771
        %v1012 = vunpack.c.l.b16 %v772
        %v1013 = vunpack.c.h.b16 %v772
        %v1014 = vunpack.c.l.b16 %v773
        %v1015 = vunpack.c.h.b16 %v773
        %v1016 = vunpack.c.l.b16 %v774
        %v1017 = vunpack.c.h.b16 %v774
        %v1018 = vunpack.c.l.b16 %v775
        %v1019 = vunpack.c.h.b16 %v775
        %v1020 = vunpack.c.l.b16 %v776
        %v1021 = vunpack.c.h.b16 %v776
        %v1022 = vunpack.c.l.b16 %v777
        %v1023 = vunpack.c.h.b16 %v777
        %v1024 = vunpack.c.l.b16 %v778
        %v1025 = vunpack.c.h.b16 %v778
        %v1026 = vunpack.c.l.b16 %v779
        %v1027 = vunpack.c.h.b16 %v779
        %v1028 = vunpack.c.l.b16 %v780
        %v1029 = vunpack.c.h.b16 %v780
        %v1030 = vunpack.c.l.b16 %v781
        %v1031 = vunpack.c.h.b16 %v781
        %v1032 = vunpack.c.l.b16 %v782
        %v1033 = vunpack.c.h.b16 %v782
        %v1034 = vunpack.c.l.b16 %v783
        %v1035 = vunpack.c.h.b16 %v783
        %v1036 = vunpack.c.l.b16 %v784
        %v1037 = vunpack.c.h.b16 %v784
        %v1038 = vunpack.c.l.b16 %v785
        %v1039 = vunpack.c.h.b16 %v785
        %v1040 = vunpack.c.l.b16 %v786
        %v1041 = vunpack.c.h.b16 %v786
        %v1042 = vunpack.c.l.b16 %v787
        %v1043 = vunpack.c.h.b16 %v787
        %v1044 = vunpack.c.l.b16 %v788
        %v1045 = vunpack.c.h.b16 %v788
        %v1046 = vunpack.c.l.b16 %v789
        %v1047 = vunpack.c.h.b16 %v789
        %v1048 = vunpack.c.l.b16 %v790
        %v1049 = vunpack.c.h.b16 %v790
        %v1050 = vunpack.c.l.b16 %v791
        %v1051 = vunpack.c.h.b16 %v791
        %v1052 = vunpack.c.l.b16 %v792
        %v1053 = vunpack.c.h.b16 %v792
        %v1054 = vunpack.c.l.b16 %v793
        %v1055 = vunpack.c.h.b16 %v793
        %v1056 = vunpack.c.l.b16 %v794
        %v1057 = vunpack.c.h.b16 %v794
        %v1058 = vunpack.c.l.b16 %v795
        %v1059 = vunpack.c.h.b16 %v795
        %v1060 = vunpack.c.l.b16 %v796
        %v1061 = vunpack.c.h.b16 %v796
        %v1062 = vunpack.c.l.b16 %v797
        %v1063 = vunpack.c.h.b16 %v797
        %v1064 = vunpack.c.l.b16 %v798
        %v1065 = vunpack.c.h.b16 %v798
        %v1066 = vunpack.c.l.b16 %v799
        %v1067 = vunpack.c.h.b16 %v799
        %v1068 = vunpack.c.l.b16 %v800
        %v1069 = vunpack.c.h.b16 %v800
        %v1070 = vunpack.c.l.b16 %v801
        %v1071 = vunpack.c.h.b16 %v801
        %v1072 = vunpack.c.l.b16 %v802
        %v1073 = vunpack.c.h.b16 %v802
        %v1074 = vunpack.c.l.b16 %v803
        %v1075 = vunpack.c.h.b16 %v803
        %v1076 = vunpack.c.l.b16 %v804
        %v1077 = vunpack.c.h.b16 %v804
        %v1078 = vunpack.c.l.b16 %v805
        %v1079 = vunpack.c.h.b16 %v805
        %v1080 = vunpack.c.l.b16 %v806
        %v1081 = vunpack.c.h.b16 %v806
        %v1082 = vunpack.c.l.b16 %v807
        %v1083 = vunpack.c.h.b16 %v807
        %v1084 = vunpack.c.l.b16 %v808
        %v1085 = vunpack.c.h.b16 %v808
        %v1086 = vunpack.c.l.b16 %v809
        %v1087 = vunpack.c.h.b16 %v809
        %v1088 = vunpack.c.l.b16 %v810
        %v1089 = vunpack.c.h.b16 %v810
        %v1090 = vunpack.c.l.b16 %v811
        %v1091 = vunpack.c.h.b16 %v811
        %v1092 = vunpack.c.l.b16 %v812
        %v1093 = vunpack.c.h.b16 %v812
        %v1094 = vunpack.c.l.b16 %v813
        %v1095 = vunpack.c.h.b16 %v813
        %v1096 = vunpack.c.l.b16 %v814
        %v1097 = vunpack.c.h.b16 %v814
        %v1098 = vunpack.c.l.b16 %v815
        %v1099 = vunpack.c.h.b16 %v815
        %v1100 = vunpack.c.l.b16 %v816
        %v1101 = vunpack.c.h.b16 %v816
        %v1102 = vunpack.c.l.b16 %v817
        %v1103 = vunpack.c.h.b16 %v817
        %v1104 = vunpack.c.l.b16 %v818
        %v1105 = vunpack.c.h.b16 %v818
        %v1106 = vunpack.c.l.b16 %v819
        %v1107 = vunpack.c.h.b16 %v819
        %v1108 = vpack.c.b16 %v928, %v916
        %v1109 = vpack.c.b16 %v929, %v917
        %v1110 = vpack.c.b16 %v930, %v918
        %v1111 = vpack.c.b16 %v931, %v919
        %v1112 = vpack.c.b16 %v932, %v920
        %v1113 = vpack.c.b16 %v933, %v921
        %v1114 = vpack.c.b16 %v934, %v922
        %v1115 = vpack.c.b16 %v935, %v923
        %v1116 = vpack.c.b16 %v936, %v924
        %v1117 = vpack.c.b16 %v937, %v925
        %v1118 = vpack.c.b16 %v938, %v926
        %v1119 = vpack.c.b16 %v939, %v927
        %v1120 = vpack.c.b16 %v952, %v940
        %v1121 = vpack.c.b16 %v953, %v941
        %v1122 = vpack.c.b16 %v954, %v942
        %v1123 = vpack.c.b16 %v955, %v943
        %v1124 = vpack.c.b16 %v956, %v944
        %v1125 = vpack.c.b16 %v957, %v945
        %v1126 = vpack.c.b16 %v958, %v946
        %v1127 = vpack.c.b16 %v959, %v947
        %v1128 = vpack.c.b16 %v960, %v948
        %v1129 = vpack.c.b16 %v961, %v949
        %v1130 = vpack.c.b16 %v962, %v950
        %v1131 = vpack.c.b16 %v963, %v951
        %v1132 = vpack.c.b16 %v976, %v964
        %v1133 = vpack.c.b16 %v977, %v965
        %v1134 = vpack.c.b16 %v978, %v966
        %v1135 = vpack.c.b16 %v979, %v967
        %v1136 = vpack.c.b16 %v980, %v968
        %v1137 = vpack.c.b16 %v981, %v969
        %v1138 = vpack.c.b16 %v982, %v970
        %v1139 = vpack.c.b16 %v983, %v971
        %v1140 = vpack.c.b16 %v984, %v972
        %v1141 = vpack.c.b16 %v985, %v973
        %v1142 = vpack.c.b16 %v986, %v974
        %v1143 = vpack.c.b16 %v987, %v975
        %v1144 = vpack.c.b16 %v1000, %v988
        %v1145 = vpack.c.b16 %v1001, %v989
        %v1146 = vpack.c.b16 %v1002, %v990
        %v1147 = vpack.c.b16 %v1003, %v991
        %v1148 = vpack.c.b16 %v1004, %v992
        %v1149 = vpack.c.b16 %v1005, %v993
        %v1150 = vpack.c.b16 %v1006, %v994
        %v1151 = vpack.c.b16 %v1007, %v995
        %v1152 = vpack.c.b16 %v1008, %v996
        %v1153 = vpack.c.b16 %v1009, %v997
        %v1154 = vpack.c.b16 %v1010, %v998
        %v1155 = vpack.c.b16 %v1011, %v999
        %v1156 = vpack.c.b16 %v1024, %v1012
        %v1157 = vpack.c.b16 %v1025, %v1013
        %v1158 = vpack.c.b16 %v1026, %v1014
        %v1159 = vpack.c.b16 %v1027, %v1015
        %v1160 = vpack.c.b16 %v1028, %v1016
        %v1161 = vpack.c.b16 %v1029, %v1017
        %v1162 = vpack.c.b16 %v1030, %v1018
        %v1163 = vpack.c.b16 %v1031, %v1019
        %v1164 = vpack.c.b16 %v1032, %v1020
        %v1165 = vpack.c.b16 %v1033, %v1021
        %v1166 = vpack.c.b16 %v1034, %v1022
        %v1167 = vpack.c.b16 %v1035, %v1023
        %v1168 = vpack.c.b16 %v1048, %v1036
        %v1169 = vpack.c.b16 %v1049, %v1037
        %v1170 = vpack.c.b16 %v1050, %v1038
        %v1171 = vpack.c.b16 %v1051, %v1039
        %v1172 = vpack.c.b16 %v1052, %v1040
        %v1173 = vpack.c.b16 %v1053, %v1041
        %v1174 = vpack.c.b16 %v1054, %v1042
        %v1175 = vpack.c.b16 %v1055, %v1043
        %v1176 = vpack.c.b16 %v1056, %v1044
        %v1177 = vpack.c.b16 %v1057, %v1045
        %v1178 = vpack.c.b16 %v1058, %v1046
        %v1179 = vpack.c.b16 %v1059, %v1047
        %v1180 = vpack.c.b16 %v1072, %v1060
        %v1181 = vpack.c.b16 %v1073, %v1061
        %v1182 = vpack.c.b16 %v1074, %v1062
        %v1183 = vpack.c.b16 %v1075, %v1063
        %v1184 = vpack.c.b16 %v1076, %v1064
        %v1185 = vpack.c.b16 %v1077, %v1065
        %v1186 = vpack.c.b16 %v1078, %v1066
        %v1187 = vpack.c.b16 %v1079, %v1067
        %v1188 = vpack.c.b16 %v1080, %v1068
        %v1189 = vpack.c.b16 %v1081, %v1069
        %v1190 = vpack.c.b16 %v1082, %v1070
        %v1191 = vpack.c.b16 %v1083, %v1071
        %v1192 = vpack.c.b16 %v1096, %v1084
        %v1193 = vpack.c.b16 %v1097, %v1085
        %v1194 = vpack.c.b16 %v1098, %v1086
        %v1195 = vpack.c.b16 %v1099, %v1087
        %v1196 = vpack.c.b16 %v1100, %v1088
        %v1197 = vpack.c.b16 %v1101, %v1089
        %v1198 = vpack.c.b16 %v1102, %v1090
        %v1199 = vpack.c.b16 %v1103, %v1091
        %v1200 = vpack.c.b16 %v1104, %v1092
        %v1201 = vpack.c.b16 %v1105, %v1093
        %v1202 = vpack.c.b16 %v1106, %v1094
        %v1203 = vpack.c.b16 %v1107, %v1095
        %1300 = vmatprep.subr.bf16.mxu0 %v1109
        %1301 = vmatpush1.bf16.msra.mxu0 %v1108
        %1302 = vmatprep.subr.bf16.mxu0 %v1121
        %1303 = vmatpush1.bf16.msra.mxu0 %v1120
        %1304 = vmatprep.subr.bf16.mxu0 %v1133
        %1305 = vmatpush1.bf16.msra.mxu0 %v1132
        %1306 = vmatprep.subr.bf16.mxu0 %v1145
        %1307 = vmatpush1.bf16.msra.mxu0 %v1144
        %1308 = vmatprep.subr.bf16.mxu0 %v1157
        %1309 = vmatpush1.bf16.msra.mxu0 %v1156
        %1310 = vmatprep.subr.bf16.mxu0 %v1169
        %1311 = vmatpush1.bf16.msra.mxu0 %v1168
        %1312 = vmatprep.subr.bf16.mxu0 %v1181
        %1313 = vmatpush1.bf16.msra.mxu0 %v1180
        %1314 = vmatprep.subr.bf16.mxu0 %v1193
        %1315 = vmatpush1.bf16.msra.mxu0 %v1192
        %1316 = vmatprep.subr.bf16.mxu0 0
        %1317 = vmatpush1.bf16.msra.mxu0 0
        %1318 = vmatprep.subr.bf16.mxu0 0
        %1319 = vmatpush1.bf16.msra.mxu0 0
        %1320 = vmatprep.subr.bf16.mxu0 0
        %1321 = vmatpush1.bf16.msra.mxu0 0
        %1322 = vmatprep.subr.bf16.mxu0 0
        %1323 = vmatpush1.bf16.msra.mxu0 0
        %1324 = vmatprep.subr.bf16.mxu0 0
        %1325 = vmatpush1.bf16.msra.mxu0 0
        %1326 = vmatprep.subr.bf16.mxu0 0
        %1327 = vmatpush1.bf16.msra.mxu0 0
        %1328 = vmatprep.subr.bf16.mxu0 0
        %1329 = vmatpush1.bf16.msra.mxu0 0
        %1330 = vmatprep.subr.bf16.mxu0 0
        %1331 = vmatpush1.bf16.msra.mxu0 0
        %1332 = vmatprep.mubr.bf16.mxu0 0
        %1333 = vmatmul.mubr.bf16.gmra.mrb[0].mxu0 %v723
        %v1334 = vpop.f32.mrb[0].mxu0
        %v1335 = vadd.f32 0.0, %v1334
        %v1336 = vpop.f32.mrb[0].mxu0
        %v1337 = vadd.f32 0.0, %v1336
        %v1338 = vpop.f32.mrb[0].mxu0
        %v1339 = vpop.f32.mrb[0].mxu0
        %1340 = vdwg.mxu0
        %1341 = vmatprep.subr.bf16.mxu0 %v1111
        %1342 = vmatpush1.bf16.msra.mxu0 %v1110
        %1343 = vmatprep.subr.bf16.mxu0 %v1123
        %1344 = vmatpush1.bf16.msra.mxu0 %v1122
        %1345 = vmatprep.subr.bf16.mxu0 %v1135
        %1346 = vmatpush1.bf16.msra.mxu0 %v1134
        %1347 = vmatprep.subr.bf16.mxu0 %v1147
        %1348 = vmatpush1.bf16.msra.mxu0 %v1146
        %1349 = vmatprep.subr.bf16.mxu0 %v1159
        %1350 = vmatpush1.bf16.msra.mxu0 %v1158
        %1351 = vmatprep.subr.bf16.mxu0 %v1171
        %1352 = vmatpush1.bf16.msra.mxu0 %v1170
        %1353 = vmatprep.subr.bf16.mxu0 %v1183
        %1354 = vmatpush1.bf16.msra.mxu0 %v1182
        %1355 = vmatprep.subr.bf16.mxu0 %v1195
        %1356 = vmatpush1.bf16.msra.mxu0 %v1194
        %1357 = vmatprep.subr.bf16.mxu0 0
        %1358 = vmatpush1.bf16.msra.mxu0 0
        %1359 = vmatprep.subr.bf16.mxu0 0
        %1360 = vmatpush1.bf16.msra.mxu0 0
        %1361 = vmatprep.subr.bf16.mxu0 0
        %1362 = vmatpush1.bf16.msra.mxu0 0
        %1363 = vmatprep.subr.bf16.mxu0 0
        %1364 = vmatpush1.bf16.msra.mxu0 0
        %1365 = vmatprep.subr.bf16.mxu0 0
        %1366 = vmatpush1.bf16.msra.mxu0 0
        %1367 = vmatprep.subr.bf16.mxu0 0
        %1368 = vmatpush1.bf16.msra.mxu0 0
        %1369 = vmatprep.subr.bf16.mxu0 0
        %1370 = vmatpush1.bf16.msra.mxu0 0
        %1371 = vmatprep.subr.bf16.mxu0 0
        %1372 = vmatpush1.bf16.msra.mxu0 0
        %1373 = vmatprep.mubr.bf16.mxu0 0
        %1374 = vmatmul.mubr.bf16.gmra.mrb[0].mxu0 %v723
        %v1375 = vpop.f32.mrb[0].mxu0
        %v1376 = vadd.f32 0.0, %v1375
        %v1377 = vpop.f32.mrb[0].mxu0
        %v1378 = vadd.f32 0.0, %v1377
        %v1379 = vpop.f32.mrb[0].mxu0
        %v1380 = vpop.f32.mrb[0].mxu0
        %1381 = vdwg.mxu0
        %1382 = vmatprep.subr.bf16.mxu0 %v1113
        %1383 = vmatpush1.bf16.msra.mxu0 %v1112
        %1384 = vmatprep.subr.bf16.mxu0 %v1125
        %1385 = vmatpush1.bf16.msra.mxu0 %v1124
        %1386 = vmatprep.subr.bf16.mxu0 %v1137
        %1387 = vmatpush1.bf16.msra.mxu0 %v1136
        %1388 = vmatprep.subr.bf16.mxu0 %v1149
        %1389 = vmatpush1.bf16.msra.mxu0 %v1148
        %1390 = vmatprep.subr.bf16.mxu0 %v1161
        %1391 = vmatpush1.bf16.msra.mxu0 %v1160
        %1392 = vmatprep.subr.bf16.mxu0 %v1173
        %1393 = vmatpush1.bf16.msra.mxu0 %v1172
        %1394 = vmatprep.subr.bf16.mxu0 %v1185
        %1395 = vmatpush1.bf16.msra.mxu0 %v1184
        %1396 = vmatprep.subr.bf16.mxu0 %v1197
        %1397 = vmatpush1.bf16.msra.mxu0 %v1196
        %1398 = vmatprep.subr.bf16.mxu0 0
        %1399 = vmatpush1.bf16.msra.mxu0 0
        %1400 = vmatprep.subr.bf16.mxu0 0
        %1401 = vmatpush1.bf16.msra.mxu0 0
        %1402 = vmatprep.subr.bf16.mxu0 0
        %1403 = vmatpush1.bf16.msra.mxu0 0
        %1404 = vmatprep.subr.bf16.mxu0 0
        %1405 = vmatpush1.bf16.msra.mxu0 0
        %1406 = vmatprep.subr.bf16.mxu0 0
        %1407 = vmatpush1.bf16.msra.mxu0 0
        %1408 = vmatprep.subr.bf16.mxu0 0
        %1409 = vmatpush1.bf16.msra.mxu0 0
        %1410 = vmatprep.subr.bf16.mxu0 0
        %1411 = vmatpush1.bf16.msra.mxu0 0
        %1412 = vmatprep.subr.bf16.mxu0 0
        %1413 = vmatpush1.bf16.msra.mxu0 0
        %1414 = vmatprep.mubr.bf16.mxu0 0
        %1415 = vmatmul.mubr.bf16.gmra.mrb[0].mxu0 %v723
        %v1416 = vpop.f32.mrb[0].mxu0
        %v1417 = vadd.f32 0.0, %v1416
        %v1418 = vpop.f32.mrb[0].mxu0
        %v1419 = vadd.f32 0.0, %v1418
        %v1420 = vpop.f32.mrb[0].mxu0
        %v1421 = vpop.f32.mrb[0].mxu0
        %1422 = vdwg.mxu0
        %1423 = vmatprep.subr.bf16.mxu0 %v1115
        %1424 = vmatpush1.bf16.msra.mxu0 %v1114
        %1425 = vmatprep.subr.bf16.mxu0 %v1127
        %1426 = vmatpush1.bf16.msra.mxu0 %v1126
        %1427 = vmatprep.subr.bf16.mxu0 %v1139
        %1428 = vmatpush1.bf16.msra.mxu0 %v1138
        %1429 = vmatprep.subr.bf16.mxu0 %v1151
        %1430 = vmatpush1.bf16.msra.mxu0 %v1150
        %1431 = vmatprep.subr.bf16.mxu0 %v1163
        %1432 = vmatpush1.bf16.msra.mxu0 %v1162
        %1433 = vmatprep.subr.bf16.mxu0 %v1175
        %1434 = vmatpush1.bf16.msra.mxu0 %v1174
        %1435 = vmatprep.subr.bf16.mxu0 %v1187
        %1436 = vmatpush1.bf16.msra.mxu0 %v1186
        %1437 = vmatprep.subr.bf16.mxu0 %v1199
        %1438 = vmatpush1.bf16.msra.mxu0 %v1198
        %1439 = vmatprep.subr.bf16.mxu0 0
        %1440 = vmatpush1.bf16.msra.mxu0 0
        %1441 = vmatprep.subr.bf16.mxu0 0
        %1442 = vmatpush1.bf16.msra.mxu0 0
        %1443 = vmatprep.subr.bf16.mxu0 0
        %1444 = vmatpush1.bf16.msra.mxu0 0
        %1445 = vmatprep.subr.bf16.mxu0 0
        %1446 = vmatpush1.bf16.msra.mxu0 0
        %1447 = vmatprep.subr.bf16.mxu0 0
        %1448 = vmatpush1.bf16.msra.mxu0 0
        %1449 = vmatprep.subr.bf16.mxu0 0
        %1450 = vmatpush1.bf16.msra.mxu0 0
        %1451 = vmatprep.subr.bf16.mxu0 0
        %1452 = vmatpush1.bf16.msra.mxu0 0
        %1453 = vmatprep.subr.bf16.mxu0 0
        %1454 = vmatpush1.bf16.msra.mxu0 0
        %1455 = vmatprep.mubr.bf16.mxu0 0
        %1456 = vmatmul.mubr.bf16.gmra.mrb[0].mxu0 %v723
        %v1457 = vpop.f32.mrb[0].mxu0
        %v1458 = vadd.f32 0.0, %v1457
        %v1459 = vpop.f32.mrb[0].mxu0
        %v1460 = vadd.f32 0.0, %v1459
        %v1461 = vpop.f32.mrb[0].mxu0
        %v1462 = vpop.f32.mrb[0].mxu0
        %1463 = vdwg.mxu0
        %1464 = vmatprep.subr.bf16.mxu0 %v1117
        %1465 = vmatpush1.bf16.msra.mxu0 %v1116
        %1466 = vmatprep.subr.bf16.mxu0 %v1129
        %1467 = vmatpush1.bf16.msra.mxu0 %v1128
        %1468 = vmatprep.subr.bf16.mxu0 %v1141
        %1469 = vmatpush1.bf16.msra.mxu0 %v1140
        %1470 = vmatprep.subr.bf16.mxu0 %v1153
        %1471 = vmatpush1.bf16.msra.mxu0 %v1152
        %1472 = vmatprep.subr.bf16.mxu0 %v1165
        %1473 = vmatpush1.bf16.msra.mxu0 %v1164
        %1474 = vmatprep.subr.bf16.mxu0 %v1177
        %1475 = vmatpush1.bf16.msra.mxu0 %v1176
        %1476 = vmatprep.subr.bf16.mxu0 %v1189
        %1477 = vmatpush1.bf16.msra.mxu0 %v1188
        %1478 = vmatprep.subr.bf16.mxu0 %v1201
        %1479 = vmatpush1.bf16.msra.mxu0 %v1200
        %1480 = vmatprep.subr.bf16.mxu0 0
        %1481 = vmatpush1.bf16.msra.mxu0 0
        %1482 = vmatprep.subr.bf16.mxu0 0
        %1483 = vmatpush1.bf16.msra.mxu0 0
        %1484 = vmatprep.subr.bf16.mxu0 0
        %1485 = vmatpush1.bf16.msra.mxu0 0
        %1486 = vmatprep.subr.bf16.mxu0 0
        %1487 = vmatpush1.bf16.msra.mxu0 0
        %1488 = vmatprep.subr.bf16.mxu0 0
        %1489 = vmatpush1.bf16.msra.mxu0 0
        %1490 = vmatprep.subr.bf16.mxu0 0
        %1491 = vmatpush1.bf16.msra.mxu0 0
        %1492 = vmatprep.subr.bf16.mxu0 0
        %1493 = vmatpush1.bf16.msra.mxu0 0
        %1494 = vmatprep.subr.bf16.mxu0 0
        %1495 = vmatpush1.bf16.msra.mxu0 0
        %1496 = vmatprep.mubr.bf16.mxu0 0
        %1497 = vmatmul.mubr.bf16.gmra.mrb[0].mxu0 %v723
        %v1498 = vpop.f32.mrb[0].mxu0
        %v1499 = vadd.f32 0.0, %v1498
        %v1500 = vpop.f32.mrb[0].mxu0
        %v1501 = vadd.f32 0.0, %v1500
        %v1502 = vpop.f32.mrb[0].mxu0
        %v1503 = vpop.f32.mrb[0].mxu0
        %1504 = vdwg.mxu0
        %1505 = vmatprep.subr.bf16.mxu0 %v1119
        %1506 = vmatpush1.bf16.msra.mxu0 %v1118
        %1507 = vmatprep.subr.bf16.mxu0 %v1131
        %1508 = vmatpush1.bf16.msra.mxu0 %v1130
        %1509 = vmatprep.subr.bf16.mxu0 %v1143
        %1510 = vmatpush1.bf16.msra.mxu0 %v1142
        %1511 = vmatprep.subr.bf16.mxu0 %v1155
        %1512 = vmatpush1.bf16.msra.mxu0 %v1154
        %1513 = vmatprep.subr.bf16.mxu0 %v1167
        %1514 = vmatpush1.bf16.msra.mxu0 %v1166
        %1515 = vmatprep.subr.bf16.mxu0 %v1179
        %1516 = vmatpush1.bf16.msra.mxu0 %v1178
        %1517 = vmatprep.subr.bf16.mxu0 %v1191
        %1518 = vmatpush1.bf16.msra.mxu0 %v1190
        %1519 = vmatprep.subr.bf16.mxu0 %v1203
        %1520 = vmatpush1.bf16.msra.mxu0 %v1202
        %1521 = vmatprep.subr.bf16.mxu0 0
        %1522 = vmatpush1.bf16.msra.mxu0 0
        %1523 = vmatprep.subr.bf16.mxu0 0
        %1524 = vmatpush1.bf16.msra.mxu0 0
        %1525 = vmatprep.subr.bf16.mxu0 0
        %1526 = vmatpush1.bf16.msra.mxu0 0
        %1527 = vmatprep.subr.bf16.mxu0 0
        %1528 = vmatpush1.bf16.msra.mxu0 0
        %1529 = vmatprep.subr.bf16.mxu0 0
        %1530 = vmatpush1.bf16.msra.mxu0 0
        %1531 = vmatprep.subr.bf16.mxu0 0
        %1532 = vmatpush1.bf16.msra.mxu0 0
        %1533 = vmatprep.subr.bf16.mxu0 0
        %1534 = vmatpush1.bf16.msra.mxu0 0
        %1535 = vmatprep.subr.bf16.mxu0 0
        %1536 = vmatpush1.bf16.msra.mxu0 0
        %1537 = vmatprep.mubr.bf16.mxu0 0
        %1538 = vmatmul.mubr.bf16.gmra.mrb[0].mxu0 %v723
        %v1539 = vpop.f32.mrb[0].mxu0
        %v1540 = vadd.f32 0.0, %v1539
        %v1541 = vpop.f32.mrb[0].mxu0
        %v1542 = vadd.f32 0.0, %v1541
        %v1543 = vpop.f32.mrb[0].mxu0
        %v1544 = vpop.f32.mrb[0].mxu0
        %1545 = vdwg.mxu0
        %v1546 = vcombine.low %v1335, %v1376
        %v1547 = vcombine.high %v1335, %v1376
        %v1549 = vunpack.c.l.s4 1983009808
        %v1550 = vunpack.c.0.s8 %v1549
        %v1551 = vlaneseq
        %v1552 = vshrl.u32 %v1551, 7
        %v1553 = vsub.s32 %v1550, %v1552
        %v1554 = vrot.slane %v1546, %v1553
        %v1556 = vunpack.c.l.s4 1983009808
        %v1557 = vunpack.c.0.s8 %v1556
        %v1558 = vlaneseq
        %v1559 = vshrl.u32 %v1558, 7
        %v1560 = vsub.s32 %v1557, %v1559
        %v1561 = vrot.slane %v1547, %v1560
        %v1562 = vcombine.low %v1337, %v1378
        %v1563 = vcombine.high %v1337, %v1378
        %v1565 = vunpack.c.l.s4 1983009808
        %v1566 = vunpack.c.0.s8 %v1565
        %v1567 = vlaneseq
        %v1568 = vshrl.u32 %v1567, 7
        %v1569 = vsub.s32 %v1566, %v1568
        %v1570 = vrot.slane %v1562, %v1569
        %v1572 = vunpack.c.l.s4 1983009808
        %v1573 = vunpack.c.0.s8 %v1572
        %v1574 = vlaneseq
        %v1575 = vshrl.u32 %v1574, 7
        %v1576 = vsub.s32 %v1573, %v1575
        %v1577 = vrot.slane %v1563, %v1576
        %v1578 = vcombine.low %v1554, %v1570
        %v1579 = vcombine.high %v1554, %v1570
        %v1581 = vunpack.c.l.s4 1934713408
        %v1582 = vunpack.c.0.s8 %v1581
        %v1583 = vlaneseq
        %v1584 = vshrl.u32 %v1583, 7
        %v1585 = vsub.s32 %v1582, %v1584
        %v1586 = vrot.slane %v1578, %v1585
        %v1588 = vunpack.c.l.s4 1934713408
        %v1589 = vunpack.c.0.s8 %v1588
        %v1590 = vlaneseq
        %v1591 = vshrl.u32 %v1590, 7
        %v1592 = vsub.s32 %v1589, %v1591
        %v1593 = vrot.slane %v1579, %v1592
        %v1594 = vcombine.low %v1561, %v1577
        %v1595 = vcombine.high %v1561, %v1577
        %v1597 = vunpack.c.l.s4 1934713408
        %v1598 = vunpack.c.0.s8 %v1597
        %v1599 = vlaneseq
        %v1600 = vshrl.u32 %v1599, 7
        %v1601 = vsub.s32 %v1598, %v1600
        %v1602 = vrot.slane %v1594, %v1601
        %v1604 = vunpack.c.l.s4 1934713408
        %v1605 = vunpack.c.0.s8 %v1604
        %v1606 = vlaneseq
        %v1607 = vshrl.u32 %v1606, 7
        %v1608 = vsub.s32 %v1605, %v1607
        %v1609 = vrot.slane %v1595, %v1608
        %v1610 = vcombine.high %v1586, 0.0
        %v1611 = vcombine.high %v1593, 0.0
        %v1612 = vcombine.high %v1602, 0.0
        %v1613 = vcombine.high %v1609, 0.0
        %v1614 = vcombine.low %v1417, %v1458
        %v1615 = vcombine.high %v1417, %v1458
        %v1617 = vunpack.c.l.s4 1983009808
        %v1618 = vunpack.c.0.s8 %v1617
        %v1619 = vlaneseq
        %v1620 = vshrl.u32 %v1619, 7
        %v1621 = vsub.s32 %v1618, %v1620
        %v1622 = vrot.slane %v1614, %v1621
        %v1624 = vunpack.c.l.s4 1983009808
        %v1625 = vunpack.c.0.s8 %v1624
        %v1626 = vlaneseq
        %v1627 = vshrl.u32 %v1626, 7
        %v1628 = vsub.s32 %v1625, %v1627
        %v1629 = vrot.slane %v1615, %v1628
        %v1630 = vcombine.low %v1419, %v1460
        %v1631 = vcombine.high %v1419, %v1460
        %v1633 = vunpack.c.l.s4 1983009808
        %v1634 = vunpack.c.0.s8 %v1633
        %v1635 = vlaneseq
        %v1636 = vshrl.u32 %v1635, 7
        %v1637 = vsub.s32 %v1634, %v1636
        %v1638 = vrot.slane %v1630, %v1637
        %v1640 = vunpack.c.l.s4 1983009808
        %v1641 = vunpack.c.0.s8 %v1640
        %v1642 = vlaneseq
        %v1643 = vshrl.u32 %v1642, 7
        %v1644 = vsub.s32 %v1641, %v1643
        %v1645 = vrot.slane %v1631, %v1644
        %v1646 = vcombine.low %v1622, %v1638
        %v1647 = vcombine.high %v1622, %v1638
        %v1649 = vunpack.c.l.s4 1934713408
        %v1650 = vunpack.c.0.s8 %v1649
        %v1651 = vlaneseq
        %v1652 = vshrl.u32 %v1651, 7
        %v1653 = vsub.s32 %v1650, %v1652
        %v1654 = vrot.slane %v1646, %v1653
        %v1656 = vunpack.c.l.s4 1934713408
        %v1657 = vunpack.c.0.s8 %v1656
        %v1658 = vlaneseq
        %v1659 = vshrl.u32 %v1658, 7
        %v1660 = vsub.s32 %v1657, %v1659
        %v1661 = vrot.slane %v1647, %v1660
        %v1662 = vcombine.low %v1629, %v1645
        %v1663 = vcombine.high %v1629, %v1645
        %v1665 = vunpack.c.l.s4 1934713408
        %v1666 = vunpack.c.0.s8 %v1665
        %v1667 = vlaneseq
        %v1668 = vshrl.u32 %v1667, 7
        %v1669 = vsub.s32 %v1666, %v1668
        %v1670 = vrot.slane %v1662, %v1669
        %v1672 = vunpack.c.l.s4 1934713408
        %v1673 = vunpack.c.0.s8 %v1672
        %v1674 = vlaneseq
        %v1675 = vshrl.u32 %v1674, 7
        %v1676 = vsub.s32 %v1673, %v1675
        %v1677 = vrot.slane %v1663, %v1676
        %v1678 = vcombine.high %v1654, 0.0
        %v1679 = vcombine.high %v1661, 0.0
        %v1680 = vcombine.high %v1670, 0.0
        %v1681 = vcombine.high %v1677, 0.0
        %v1682 = vcombine.low %v1499, %v1540
        %v1683 = vcombine.high %v1499, %v1540
        %v1685 = vunpack.c.l.s4 1983009808
        %v1686 = vunpack.c.0.s8 %v1685
        %v1687 = vlaneseq
        %v1688 = vshrl.u32 %v1687, 7
        %v1689 = vsub.s32 %v1686, %v1688
        %v1690 = vrot.slane %v1682, %v1689
        %v1692 = vunpack.c.l.s4 1983009808
        %v1693 = vunpack.c.0.s8 %v1692
        %v1694 = vlaneseq
        %v1695 = vshrl.u32 %v1694, 7
        %v1696 = vsub.s32 %v1693, %v1695
        %v1697 = vrot.slane %v1683, %v1696
        %v1698 = vcombine.low %v1501, %v1542
        %v1699 = vcombine.high %v1501, %v1542
        %v1701 = vunpack.c.l.s4 1983009808
        %v1702 = vunpack.c.0.s8 %v1701
        %v1703 = vlaneseq
        %v1704 = vshrl.u32 %v1703, 7
        %v1705 = vsub.s32 %v1702, %v1704
        %v1706 = vrot.slane %v1698, %v1705
        %v1708 = vunpack.c.l.s4 1983009808
        %v1709 = vunpack.c.0.s8 %v1708
        %v1710 = vlaneseq
        %v1711 = vshrl.u32 %v1710, 7
        %v1712 = vsub.s32 %v1709, %v1711
        %v1713 = vrot.slane %v1699, %v1712
        %v1714 = vcombine.low %v1690, %v1706
        %v1715 = vcombine.high %v1690, %v1706
        %v1717 = vunpack.c.l.s4 1934713408
        %v1718 = vunpack.c.0.s8 %v1717
        %v1719 = vlaneseq
        %v1720 = vshrl.u32 %v1719, 7
        %v1721 = vsub.s32 %v1718, %v1720
        %v1722 = vrot.slane %v1714, %v1721
        %v1724 = vunpack.c.l.s4 1934713408
        %v1725 = vunpack.c.0.s8 %v1724
        %v1726 = vlaneseq
        %v1727 = vshrl.u32 %v1726, 7
        %v1728 = vsub.s32 %v1725, %v1727
        %v1729 = vrot.slane %v1715, %v1728
        %v1730 = vcombine.low %v1697, %v1713
        %v1731 = vcombine.high %v1697, %v1713
        %v1733 = vunpack.c.l.s4 1934713408
        %v1734 = vunpack.c.0.s8 %v1733
        %v1735 = vlaneseq
        %v1736 = vshrl.u32 %v1735, 7
        %v1737 = vsub.s32 %v1734, %v1736
        %v1738 = vrot.slane %v1730, %v1737
        %v1740 = vunpack.c.l.s4 1934713408
        %v1741 = vunpack.c.0.s8 %v1740
        %v1742 = vlaneseq
        %v1743 = vshrl.u32 %v1742, 7
        %v1744 = vsub.s32 %v1741, %v1743
        %v1745 = vrot.slane %v1731, %v1744
        %v1746 = vcombine.high %v1722, 0.0
        %v1747 = vcombine.high %v1729, 0.0
        %v1748 = vcombine.high %v1738, 0.0
        %v1749 = vcombine.high %v1745, 0.0
        %v1750 = vcombine.low %v1586, %v1593
        %v1752 = vunpack.c.l.s4 1983009808
        %v1753 = vunpack.c.0.s8 %v1752
        %v1754 = vlaneseq
        %v1755 = vshrl.u32 %v1754, 7
        %v1756 = vsub.s32 %v1753, %v1755
        %v1757 = vrot.slane %v1750, %v1756
        %v1758 = vcombine.low %v1610, %v1611
        %v1760 = vunpack.c.l.s4 1983009808
        %v1761 = vunpack.c.0.s8 %v1760
        %v1762 = vlaneseq
        %v1763 = vshrl.u32 %v1762, 7
        %v1764 = vsub.s32 %v1761, %v1763
        %v1765 = vrot.slane %v1758, %v1764
        %v1766 = vcombine.low %v1602, %v1609
        %v1768 = vunpack.c.l.s4 1983009808
        %v1769 = vunpack.c.0.s8 %v1768
        %v1770 = vlaneseq
        %v1771 = vshrl.u32 %v1770, 7
        %v1772 = vsub.s32 %v1769, %v1771
        %v1773 = vrot.slane %v1766, %v1772
        %v1774 = vcombine.low %v1612, %v1613
        %v1776 = vunpack.c.l.s4 1983009808
        %v1777 = vunpack.c.0.s8 %v1776
        %v1778 = vlaneseq
        %v1779 = vshrl.u32 %v1778, 7
        %v1780 = vsub.s32 %v1777, %v1779
        %v1781 = vrot.slane %v1774, %v1780
        %v1782 = vcombine.low %v1757, %v1765
        %v1783 = vcombine.high %v1757, %v1765
        %v1785 = vunpack.c.l.s4 1934713408
        %v1786 = vunpack.c.0.s8 %v1785
        %v1787 = vlaneseq
        %v1788 = vshrl.u32 %v1787, 7
        %v1789 = vsub.s32 %v1786, %v1788
        %v1790 = vrot.slane %v1782, %v1789
        %v1792 = vunpack.c.l.s4 1934713408
        %v1793 = vunpack.c.0.s8 %v1792
        %v1794 = vlaneseq
        %v1795 = vshrl.u32 %v1794, 7
        %v1796 = vsub.s32 %v1793, %v1795
        %v1797 = vrot.slane %v1783, %v1796
        %v1798 = vcombine.low %v1773, %v1781
        %v1799 = vcombine.high %v1773, %v1781
        %v1801 = vunpack.c.l.s4 1934713408
        %v1802 = vunpack.c.0.s8 %v1801
        %v1803 = vlaneseq
        %v1804 = vshrl.u32 %v1803, 7
        %v1805 = vsub.s32 %v1802, %v1804
        %v1806 = vrot.slane %v1798, %v1805
        %v1808 = vunpack.c.l.s4 1934713408
        %v1809 = vunpack.c.0.s8 %v1808
        %v1810 = vlaneseq
        %v1811 = vshrl.u32 %v1810, 7
        %v1812 = vsub.s32 %v1809, %v1811
        %v1813 = vrot.slane %v1799, %v1812
        %v1814 = vcombine.low %v1790, %v1806
        %v1815 = vcombine.high %v1790, %v1806
        %v1816 = vcombine.low %v1797, %v1813
        %v1817 = vcombine.high %v1797, %v1813
        %v1818 = vpack.c.bf16 %v1814, %v1814
        %v1819 = vpack.c.bf16 %v1815, %v1815
        %v1820 = vpack.c.bf16 %v1816, %v1816
        %v1821 = vpack.c.bf16 %v1817, %v1817
        %v1822 = vcombine.low %v1654, %v1661
        %v1824 = vunpack.c.l.s4 1983009808
        %v1825 = vunpack.c.0.s8 %v1824
        %v1826 = vlaneseq
        %v1827 = vshrl.u32 %v1826, 7
        %v1828 = vsub.s32 %v1825, %v1827
        %v1829 = vrot.slane %v1822, %v1828
        %v1830 = vcombine.low %v1678, %v1679
        %v1832 = vunpack.c.l.s4 1983009808
        %v1833 = vunpack.c.0.s8 %v1832
        %v1834 = vlaneseq
        %v1835 = vshrl.u32 %v1834, 7
        %v1836 = vsub.s32 %v1833, %v1835
        %v1837 = vrot.slane %v1830, %v1836
        %v1838 = vcombine.low %v1670, %v1677
        %v1840 = vunpack.c.l.s4 1983009808
        %v1841 = vunpack.c.0.s8 %v1840
        %v1842 = vlaneseq
        %v1843 = vshrl.u32 %v1842, 7
        %v1844 = vsub.s32 %v1841, %v1843
        %v1845 = vrot.slane %v1838, %v1844
        %v1846 = vcombine.low %v1680, %v1681
        %v1848 = vunpack.c.l.s4 1983009808
        %v1849 = vunpack.c.0.s8 %v1848
        %v1850 = vlaneseq
        %v1851 = vshrl.u32 %v1850, 7
        %v1852 = vsub.s32 %v1849, %v1851
        %v1853 = vrot.slane %v1846, %v1852
        %v1854 = vcombine.low %v1829, %v1837
        %v1855 = vcombine.high %v1829, %v1837
        %v1857 = vunpack.c.l.s4 1934713408
        %v1858 = vunpack.c.0.s8 %v1857
        %v1859 = vlaneseq
        %v1860 = vshrl.u32 %v1859, 7
        %v1861 = vsub.s32 %v1858, %v1860
        %v1862 = vrot.slane %v1854, %v1861
        %v1864 = vunpack.c.l.s4 1934713408
        %v1865 = vunpack.c.0.s8 %v1864
        %v1866 = vlaneseq
        %v1867 = vshrl.u32 %v1866, 7
        %v1868 = vsub.s32 %v1865, %v1867
        %v1869 = vrot.slane %v1855, %v1868
        %v1870 = vcombine.low %v1845, %v1853
        %v1871 = vcombine.high %v1845, %v1853
        %v1873 = vunpack.c.l.s4 1934713408
        %v1874 = vunpack.c.0.s8 %v1873
        %v1875 = vlaneseq
        %v1876 = vshrl.u32 %v1875, 7
        %v1877 = vsub.s32 %v1874, %v1876
        %v1878 = vrot.slane %v1870, %v1877
        %v1880 = vunpack.c.l.s4 1934713408
        %v1881 = vunpack.c.0.s8 %v1880
        %v1882 = vlaneseq
        %v1883 = vshrl.u32 %v1882, 7
        %v1884 = vsub.s32 %v1881, %v1883
        %v1885 = vrot.slane %v1871, %v1884
        %v1886 = vcombine.low %v1862, %v1878
        %v1887 = vcombine.high %v1862, %v1878
        %v1888 = vcombine.low %v1869, %v1885
        %v1889 = vcombine.high %v1869, %v1885
        %v1890 = vpack.c.bf16 %v1886, %v1886
        %v1891 = vpack.c.bf16 %v1887, %v1887
        %v1892 = vpack.c.bf16 %v1888, %v1888
        %v1893 = vpack.c.bf16 %v1889, %v1889
        %v1894 = vcombine.low %v1722, %v1729
        %v1896 = vunpack.c.l.s4 1983009808
        %v1897 = vunpack.c.0.s8 %v1896
        %v1898 = vlaneseq
        %v1899 = vshrl.u32 %v1898, 7
        %v1900 = vsub.s32 %v1897, %v1899
        %v1901 = vrot.slane %v1894, %v1900
        %v1902 = vcombine.low %v1746, %v1747
        %v1904 = vunpack.c.l.s4 1983009808
        %v1905 = vunpack.c.0.s8 %v1904
        %v1906 = vlaneseq
        %v1907 = vshrl.u32 %v1906, 7
        %v1908 = vsub.s32 %v1905, %v1907
        %v1909 = vrot.slane %v1902, %v1908
        %v1910 = vcombine.low %v1738, %v1745
        %v1912 = vunpack.c.l.s4 1983009808
        %v1913 = vunpack.c.0.s8 %v1912
        %v1914 = vlaneseq
        %v1915 = vshrl.u32 %v1914, 7
        %v1916 = vsub.s32 %v1913, %v1915
        %v1917 = vrot.slane %v1910, %v1916
        %v1918 = vcombine.low %v1748, %v1749
        %v1920 = vunpack.c.l.s4 1983009808
        %v1921 = vunpack.c.0.s8 %v1920
        %v1922 = vlaneseq
        %v1923 = vshrl.u32 %v1922, 7
        %v1924 = vsub.s32 %v1921, %v1923
        %v1925 = vrot.slane %v1918, %v1924
        %v1926 = vcombine.low %v1901, %v1909
        %v1927 = vcombine.high %v1901, %v1909
        %v1929 = vunpack.c.l.s4 1934713408
        %v1930 = vunpack.c.0.s8 %v1929
        %v1931 = vlaneseq
        %v1932 = vshrl.u32 %v1931, 7
        %v1933 = vsub.s32 %v1930, %v1932
        %v1934 = vrot.slane %v1926, %v1933
        %v1936 = vunpack.c.l.s4 1934713408
        %v1937 = vunpack.c.0.s8 %v1936
        %v1938 = vlaneseq
        %v1939 = vshrl.u32 %v1938, 7
        %v1940 = vsub.s32 %v1937, %v1939
        %v1941 = vrot.slane %v1927, %v1940
        %v1942 = vcombine.low %v1917, %v1925
        %v1943 = vcombine.high %v1917, %v1925
        %v1945 = vunpack.c.l.s4 1934713408
        %v1946 = vunpack.c.0.s8 %v1945
        %v1947 = vlaneseq
        %v1948 = vshrl.u32 %v1947, 7
        %v1949 = vsub.s32 %v1946, %v1948
        %v1950 = vrot.slane %v1942, %v1949
        %v1952 = vunpack.c.l.s4 1934713408
        %v1953 = vunpack.c.0.s8 %v1952
        %v1954 = vlaneseq
        %v1955 = vshrl.u32 %v1954, 7
        %v1956 = vsub.s32 %v1953, %v1955
        %v1957 = vrot.slane %v1943, %v1956
        %v1958 = vcombine.low %v1934, %v1950
        %v1959 = vcombine.high %v1934, %v1950
        %v1960 = vcombine.low %v1941, %v1957
        %v1961 = vcombine.high %v1941, %v1957
        %v1962 = vpack.c.bf16 %v1958, %v1958
        %v1963 = vpack.c.bf16 %v1959, %v1959
        %v1964 = vpack.c.bf16 %v1960, %v1960
        %v1965 = vpack.c.bf16 %v1961, %v1961
        %1966 = vmatprep.subr.bf16.mxu0 0
        %1967 = vmatpush1.bf16.xpose.msra.mxu0 %v1890
        %1968 = vmatprep.subr.bf16.mxu0 0
        %1969 = vmatpush1.bf16.xpose.msra.mxu0 0
        %1970 = vmatprep.subr.bf16.mxu0 0
        %1971 = vmatpush1.bf16.xpose.msra.mxu0 0
        %1972 = vmatprep.subr.bf16.mxu0 0
        %1973 = vmatpush1.bf16.xpose.msra.mxu0 0
        %1974 = vmatprep.subr.bf16.mxu0 0
        %1975 = vmatpush1.bf16.xpose.msra.mxu0 0
        %1976 = vmatprep.subr.bf16.mxu0 0
        %1977 = vmatpush1.bf16.xpose.msra.mxu0 0
        %1978 = vmatprep.subr.bf16.mxu0 0
        %1979 = vmatpush1.bf16.xpose.msra.mxu0 0
        %1980 = vmatprep.subr.bf16.mxu0 0
        %1981 = vmatpush1.bf16.xpose.msra.mxu0 0
        %1982 = vmatprep.subr.bf16.mxu0 0
        %1983 = vmatpush1.bf16.xpose.msra.mxu0 0
        %1984 = vmatprep.subr.bf16.mxu0 0
        %1985 = vmatpush1.bf16.xpose.msra.mxu0 0
        %1986 = vmatprep.subr.bf16.mxu0 0
        %1987 = vmatpush1.bf16.xpose.msra.mxu0 0
        %1988 = vmatprep.subr.bf16.mxu0 0
        %1989 = vmatpush1.bf16.xpose.msra.mxu0 0
        %1990 = vmatprep.subr.bf16.mxu0 0
        %1991 = vmatpush1.bf16.xpose.msra.mxu0 0
        %1992 = vmatprep.subr.bf16.mxu0 0
        %1993 = vmatpush1.bf16.xpose.msra.mxu0 0
        %1994 = vmatprep.subr.bf16.mxu0 0
        %1995 = vmatpush1.bf16.xpose.msra.mxu0 0
        %1996 = vmatprep.subr.bf16.mxu0 0
        %1997 = vmatpush1.bf16.xpose.msra.mxu0 0
        %1998 = vmatprep.mubr.bf16.mxu0 0
        %1999 = vmatmul.mubr.bf16.gmra.mrb[0].mxu0 %v1818
        %v2000 = vpop.f32.mrb[0].mxu0
        %v2001 = vadd.f32 0.0, %v2000
        %v2002 = vpop.f32.mrb[0].mxu0
        %v2003 = vpop.f32.mrb[0].mxu0
        %v2004 = vpop.f32.mrb[0].mxu0
        %2005 = vdwg.mxu0
        %2006 = vmatprep.subr.bf16.mxu0 0
        %2007 = vmatpush1.bf16.xpose.msra.mxu0 %v1891
        %2008 = vmatprep.subr.bf16.mxu0 0
        %2009 = vmatpush1.bf16.xpose.msra.mxu0 0
        %2010 = vmatprep.subr.bf16.mxu0 0
        %2011 = vmatpush1.bf16.xpose.msra.mxu0 0
        %2012 = vmatprep.subr.bf16.mxu0 0
        %2013 = vmatpush1.bf16.xpose.msra.mxu0 0
        %2014 = vmatprep.subr.bf16.mxu0 0
        %2015 = vmatpush1.bf16.xpose.msra.mxu0 0
        %2016 = vmatprep.subr.bf16.mxu0 0
        %2017 = vmatpush1.bf16.xpose.msra.mxu0 0
        %2018 = vmatprep.subr.bf16.mxu0 0
        %2019 = vmatpush1.bf16.xpose.msra.mxu0 0
        %2020 = vmatprep.subr.bf16.mxu0 0
        %2021 = vmatpush1.bf16.xpose.msra.mxu0 0
        %2022 = vmatprep.subr.bf16.mxu0 0
        %2023 = vmatpush1.bf16.xpose.msra.mxu0 0
        %2024 = vmatprep.subr.bf16.mxu0 0
        %2025 = vmatpush1.bf16.xpose.msra.mxu0 0
        %2026 = vmatprep.subr.bf16.mxu0 0
        %2027 = vmatpush1.bf16.xpose.msra.mxu0 0
        %2028 = vmatprep.subr.bf16.mxu0 0
        %2029 = vmatpush1.bf16.xpose.msra.mxu0 0
        %2030 = vmatprep.subr.bf16.mxu0 0
        %2031 = vmatpush1.bf16.xpose.msra.mxu0 0
        %2032 = vmatprep.subr.bf16.mxu0 0
        %2033 = vmatpush1.bf16.xpose.msra.mxu0 0
        %2034 = vmatprep.subr.bf16.mxu0 0
        %2035 = vmatpush1.bf16.xpose.msra.mxu0 0
        %2036 = vmatprep.subr.bf16.mxu0 0
        %2037 = vmatpush1.bf16.xpose.msra.mxu0 0
        %2038 = vmatprep.mubr.bf16.mxu0 0
        %2039 = vmatmul.mubr.bf16.gmra.mrb[0].mxu0 %v1819
        %v2040 = vpop.f32.mrb[0].mxu0
        %v2041 = vadd.f32 0.0, %v2040
        %v2042 = vpop.f32.mrb[0].mxu0
        %v2043 = vpop.f32.mrb[0].mxu0
        %v2044 = vpop.f32.mrb[0].mxu0
        %2045 = vdwg.mxu0
        %2046 = vmatprep.subr.bf16.mxu0 0
        %2047 = vmatpush1.bf16.xpose.msra.mxu0 %v1892
        %2048 = vmatprep.subr.bf16.mxu0 0
        %2049 = vmatpush1.bf16.xpose.msra.mxu0 0
        %2050 = vmatprep.subr.bf16.mxu0 0
        %2051 = vmatpush1.bf16.xpose.msra.mxu0 0
        %2052 = vmatprep.subr.bf16.mxu0 0
        %2053 = vmatpush1.bf16.xpose.msra.mxu0 0
        %2054 = vmatprep.subr.bf16.mxu0 0
        %2055 = vmatpush1.bf16.xpose.msra.mxu0 0
        %2056 = vmatprep.subr.bf16.mxu0 0
        %2057 = vmatpush1.bf16.xpose.msra.mxu0 0
        %2058 = vmatprep.subr.bf16.mxu0 0
        %2059 = vmatpush1.bf16.xpose.msra.mxu0 0
        %2060 = vmatprep.subr.bf16.mxu0 0
        %2061 = vmatpush1.bf16.xpose.msra.mxu0 0
        %2062 = vmatprep.subr.bf16.mxu0 0
        %2063 = vmatpush1.bf16.xpose.msra.mxu0 0
        %2064 = vmatprep.subr.bf16.mxu0 0
        %2065 = vmatpush1.bf16.xpose.msra.mxu0 0
        %2066 = vmatprep.subr.bf16.mxu0 0
        %2067 = vmatpush1.bf16.xpose.msra.mxu0 0
        %2068 = vmatprep.subr.bf16.mxu0 0
        %2069 = vmatpush1.bf16.xpose.msra.mxu0 0
        %2070 = vmatprep.subr.bf16.mxu0 0
        %2071 = vmatpush1.bf16.xpose.msra.mxu0 0
        %2072 = vmatprep.subr.bf16.mxu0 0
        %2073 = vmatpush1.bf16.xpose.msra.mxu0 0
        %2074 = vmatprep.subr.bf16.mxu0 0
        %2075 = vmatpush1.bf16.xpose.msra.mxu0 0
        %2076 = vmatprep.subr.bf16.mxu0 0
        %2077 = vmatpush1.bf16.xpose.msra.mxu0 0
        %2078 = vmatprep.mubr.bf16.mxu0 0
        %2079 = vmatmul.mubr.bf16.gmra.mrb[0].mxu0 %v1820
        %v2080 = vpop.f32.mrb[0].mxu0
        %v2081 = vadd.f32 0.0, %v2080
        %v2082 = vpop.f32.mrb[0].mxu0
        %v2083 = vpop.f32.mrb[0].mxu0
        %v2084 = vpop.f32.mrb[0].mxu0
        %2085 = vdwg.mxu0
        %2086 = vmatprep.subr.bf16.mxu0 0
        %2087 = vmatpush1.bf16.xpose.msra.mxu0 %v1893
        %2088 = vmatprep.subr.bf16.mxu0 0
        %2089 = vmatpush1.bf16.xpose.msra.mxu0 0
        %2090 = vmatprep.subr.bf16.mxu0 0
        %2091 = vmatpush1.bf16.xpose.msra.mxu0 0
        %2092 = vmatprep.subr.bf16.mxu0 0
        %2093 = vmatpush1.bf16.xpose.msra.mxu0 0
        %2094 = vmatprep.subr.bf16.mxu0 0
        %2095 = vmatpush1.bf16.xpose.msra.mxu0 0
        %2096 = vmatprep.subr.bf16.mxu0 0
        %2097 = vmatpush1.bf16.xpose.msra.mxu0 0
        %2098 = vmatprep.subr.bf16.mxu0 0
        %2099 = vmatpush1.bf16.xpose.msra.mxu0 0
        %2100 = vmatprep.subr.bf16.mxu0 0
        %2101 = vmatpush1.bf16.xpose.msra.mxu0 0
        %2102 = vmatprep.subr.bf16.mxu0 0
        %2103 = vmatpush1.bf16.xpose.msra.mxu0 0
        %2104 = vmatprep.subr.bf16.mxu0 0
        %2105 = vmatpush1.bf16.xpose.msra.mxu0 0
        %2106 = vmatprep.subr.bf16.mxu0 0
        %2107 = vmatpush1.bf16.xpose.msra.mxu0 0
        %2108 = vmatprep.subr.bf16.mxu0 0
        %2109 = vmatpush1.bf16.xpose.msra.mxu0 0
        %2110 = vmatprep.subr.bf16.mxu0 0
        %2111 = vmatpush1.bf16.xpose.msra.mxu0 0
        %2112 = vmatprep.subr.bf16.mxu0 0
        %2113 = vmatpush1.bf16.xpose.msra.mxu0 0
        %2114 = vmatprep.subr.bf16.mxu0 0
        %2115 = vmatpush1.bf16.xpose.msra.mxu0 0
        %2116 = vmatprep.subr.bf16.mxu0 0
        %2117 = vmatpush1.bf16.xpose.msra.mxu0 0
        %2118 = vmatprep.mubr.bf16.mxu0 0
        %2119 = vmatmul.mubr.bf16.gmra.mrb[0].mxu0 %v1821
        %v2120 = vpop.f32.mrb[0].mxu0
        %v2121 = vadd.f32 0.0, %v2120
        %v2122 = vpop.f32.mrb[0].mxu0
        %v2123 = vpop.f32.mrb[0].mxu0
        %v2124 = vpop.f32.mrb[0].mxu0
        %2125 = vdwg.mxu0
        %v2126 = vmul.f32 %v2001, 0.35355338
        %v2127 = vmul.f32 %v2041, 0.35355338
        %v2128 = vmul.f32 %v2081, 0.35355338
        %v2129 = vmul.f32 %v2121, 0.35355338
        %v2131 = vlaneseq
        %v2132 = vshrl.u32 %v2131, 7
        %v2133 = vsub.s32 0, %v2132
        %v2134 = vrot.slane %v693, %v2133
        %v2136 = vadd.f32 %v2126, %v2134
        %v2137 = vadd.f32 %v2127, %v2134
        %v2138 = vadd.f32 %v2128, %v2134
        %v2139 = vadd.f32 %v2129, %v2134
        %vm2140 = vcmask 64512
        %v2141 = vsel %vm2140, %v2136, -inf
        %2142 = vmax.xlane.f32.xlu0 %v2141
        %v2143 = vpop.xlane.xlu0 %2142
        %v2144 = vsel %vm2140, %v2137, -inf
        %2145 = vmax.xlane.f32.xlu0 %v2144
        %v2146 = vpop.xlane.xlu0 %2145
        %v2147 = vsel %vm2140, %v2138, -inf
        %2148 = vmax.xlane.f32.xlu0 %v2147
        %v2149 = vpop.xlane.xlu0 %2148
        %v2150 = vsel %vm2140, %v2139, -inf
        %2151 = vmax.xlane.f32.xlu0 %v2150
        %v2152 = vpop.xlane.xlu0 %2151
        %v2153 = vsub.f32 %v2136, %v2143
        %v2154 = vsub.f32 %v2137, %v2146
        %v2155 = vsub.f32 %v2138, %v2149
        %v2156 = vsub.f32 %v2139, %v2152
        %v2157 = vmul.f32 %v2153, 1.442695
        %v2158 = vpow.pop %v2157
        %v2159 = vmul.f32 %v2154, 1.442695
        %v2160 = vpow.pop %v2159
        %v2161 = vmul.f32 %v2155, 1.442695
        %v2162 = vpow.pop %v2161
        %v2163 = vmul.f32 %v2156, 1.442695
        %v2164 = vpow.pop %v2163
        %v2165 = vsel %vm2140, %v2158, 0.0
        %2166 = vadd.xlane.f32.xlu0 %v2165
        %v2167 = vpop.xlane.xlu0 %2166
        %v2168 = vsel %vm2140, %v2160, 0.0
        %2169 = vadd.xlane.f32.xlu0 %v2168
        %v2170 = vpop.xlane.xlu0 %2169
        %v2171 = vsel %vm2140, %v2162, 0.0
        %2172 = vadd.xlane.f32.xlu0 %v2171
        %v2173 = vpop.xlane.xlu0 %2172
        %v2174 = vsel %vm2140, %v2164, 0.0
        %2175 = vadd.xlane.f32.xlu0 %v2174
        %v2176 = vpop.xlane.xlu0 %2175
        %v2177 = vrcp.pop %v2167
        %v2178 = vrcp.pop %v2170
        %v2179 = vrcp.pop %v2173
        %v2180 = vrcp.pop %v2176
        %v2181 = vmul.f32 %v2158, %v2177
        %v2182 = vmul.f32 %v2160, %v2178
        %v2183 = vmul.f32 %v2162, %v2179
        %v2184 = vmul.f32 %v2164, %v2180
        %v2185 = vpack.c.bf16 %v2181, %v2181
        %v2186 = vpack.c.bf16 %v2182, %v2182
        %v2187 = vpack.c.bf16 %v2183, %v2183
        %v2188 = vpack.c.bf16 %v2184, %v2184
        %v2190 = vsel %vm2140, %v2185, 0
        %vm2192 = vcmask 1043456
        %v2194 = vsel %vm2192, %v1962, 0
        %2196 = vmatprep.subr.bf16.mxu0 0
        %2197 = vmatpush1.bf16.msra.mxu0 %v2194
        %2198 = vmatprep.subr.bf16.mxu0 0
        %2199 = vmatpush1.bf16.msra.mxu0 0
        %2200 = vmatprep.subr.bf16.mxu0 0
        %2201 = vmatpush1.bf16.msra.mxu0 0
        %2202 = vmatprep.subr.bf16.mxu0 0
        %2203 = vmatpush1.bf16.msra.mxu0 0
        %2204 = vmatprep.subr.bf16.mxu0 0
        %2205 = vmatpush1.bf16.msra.mxu0 0
        %2206 = vmatprep.subr.bf16.mxu0 0
        %2207 = vmatpush1.bf16.msra.mxu0 0
        %2208 = vmatprep.subr.bf16.mxu0 0
        %2209 = vmatpush1.bf16.msra.mxu0 0
        %2210 = vmatprep.subr.bf16.mxu0 0
        %2211 = vmatpush1.bf16.msra.mxu0 0
        %2212 = vmatprep.subr.bf16.mxu0 0
        %2213 = vmatpush1.bf16.msra.mxu0 0
        %2214 = vmatprep.subr.bf16.mxu0 0
        %2215 = vmatpush1.bf16.msra.mxu0 0
        %2216 = vmatprep.subr.bf16.mxu0 0
        %2217 = vmatpush1.bf16.msra.mxu0 0
        %2218 = vmatprep.subr.bf16.mxu0 0
        %2219 = vmatpush1.bf16.msra.mxu0 0
        %2220 = vmatprep.subr.bf16.mxu0 0
        %2221 = vmatpush1.bf16.msra.mxu0 0
        %2222 = vmatprep.subr.bf16.mxu0 0
        %2223 = vmatpush1.bf16.msra.mxu0 0
        %2224 = vmatprep.subr.bf16.mxu0 0
        %2225 = vmatpush1.bf16.msra.mxu0 0
        %2226 = vmatprep.subr.bf16.mxu0 0
        %2227 = vmatpush1.bf16.msra.mxu0 0
        %2228 = vmatprep.mubr.bf16.mxu0 0
        %2229 = vmatmul.mubr.bf16.gmra.mrb[0].mxu0 %v2190
        %v2230 = vpop.f32.mrb[0].mxu0
        %v2231 = vadd.f32 0.0, %v2230
        %v2232 = vpop.f32.mrb[0].mxu0
        %v2233 = vpop.f32.mrb[0].mxu0
        %v2234 = vpop.f32.mrb[0].mxu0
        %2235 = vdwg.mxu0
        %v2237 = vsel %vm2140, %v2186, 0
        %v2240 = vsel %vm2192, %v1963, 0
        %2242 = vmatprep.subr.bf16.mxu0 0
        %2243 = vmatpush1.bf16.msra.mxu0 %v2240
        %2244 = vmatprep.subr.bf16.mxu0 0
        %2245 = vmatpush1.bf16.msra.mxu0 0
        %2246 = vmatprep.subr.bf16.mxu0 0
        %2247 = vmatpush1.bf16.msra.mxu0 0
        %2248 = vmatprep.subr.bf16.mxu0 0
        %2249 = vmatpush1.bf16.msra.mxu0 0
        %2250 = vmatprep.subr.bf16.mxu0 0
        %2251 = vmatpush1.bf16.msra.mxu0 0
        %2252 = vmatprep.subr.bf16.mxu0 0
        %2253 = vmatpush1.bf16.msra.mxu0 0
        %2254 = vmatprep.subr.bf16.mxu0 0
        %2255 = vmatpush1.bf16.msra.mxu0 0
        %2256 = vmatprep.subr.bf16.mxu0 0
        %2257 = vmatpush1.bf16.msra.mxu0 0
        %2258 = vmatprep.subr.bf16.mxu0 0
        %2259 = vmatpush1.bf16.msra.mxu0 0
        %2260 = vmatprep.subr.bf16.mxu0 0
        %2261 = vmatpush1.bf16.msra.mxu0 0
        %2262 = vmatprep.subr.bf16.mxu0 0
        %2263 = vmatpush1.bf16.msra.mxu0 0
        %2264 = vmatprep.subr.bf16.mxu0 0
        %2265 = vmatpush1.bf16.msra.mxu0 0
        %2266 = vmatprep.subr.bf16.mxu0 0
        %2267 = vmatpush1.bf16.msra.mxu0 0
        %2268 = vmatprep.subr.bf16.mxu0 0
        %2269 = vmatpush1.bf16.msra.mxu0 0
        %2270 = vmatprep.subr.bf16.mxu0 0
        %2271 = vmatpush1.bf16.msra.mxu0 0
        %2272 = vmatprep.subr.bf16.mxu0 0
        %2273 = vmatpush1.bf16.msra.mxu0 0
        %2274 = vmatprep.mubr.bf16.mxu0 0
        %2275 = vmatmul.mubr.bf16.gmra.mrb[0].mxu0 %v2237
        %v2276 = vpop.f32.mrb[0].mxu0
        %v2277 = vadd.f32 0.0, %v2276
        %v2278 = vpop.f32.mrb[0].mxu0
        %v2279 = vpop.f32.mrb[0].mxu0
        %v2280 = vpop.f32.mrb[0].mxu0
        %2281 = vdwg.mxu0
        %v2283 = vsel %vm2140, %v2187, 0
        %v2286 = vsel %vm2192, %v1964, 0
        %2288 = vmatprep.subr.bf16.mxu0 0
        %2289 = vmatpush1.bf16.msra.mxu0 %v2286
        %2290 = vmatprep.subr.bf16.mxu0 0
        %2291 = vmatpush1.bf16.msra.mxu0 0
        %2292 = vmatprep.subr.bf16.mxu0 0
        %2293 = vmatpush1.bf16.msra.mxu0 0
        %2294 = vmatprep.subr.bf16.mxu0 0
        %2295 = vmatpush1.bf16.msra.mxu0 0
        %2296 = vmatprep.subr.bf16.mxu0 0
        %2297 = vmatpush1.bf16.msra.mxu0 0
        %2298 = vmatprep.subr.bf16.mxu0 0
        %2299 = vmatpush1.bf16.msra.mxu0 0
        %2300 = vmatprep.subr.bf16.mxu0 0
        %2301 = vmatpush1.bf16.msra.mxu0 0
        %2302 = vmatprep.subr.bf16.mxu0 0
        %2303 = vmatpush1.bf16.msra.mxu0 0
        %2304 = vmatprep.subr.bf16.mxu0 0
        %2305 = vmatpush1.bf16.msra.mxu0 0
        %2306 = vmatprep.subr.bf16.mxu0 0
        %2307 = vmatpush1.bf16.msra.mxu0 0
        %2308 = vmatprep.subr.bf16.mxu0 0
        %2309 = vmatpush1.bf16.msra.mxu0 0
        %2310 = vmatprep.subr.bf16.mxu0 0
        %2311 = vmatpush1.bf16.msra.mxu0 0
        %2312 = vmatprep.subr.bf16.mxu0 0
        %2313 = vmatpush1.bf16.msra.mxu0 0
        %2314 = vmatprep.subr.bf16.mxu0 0
        %2315 = vmatpush1.bf16.msra.mxu0 0
        %2316 = vmatprep.subr.bf16.mxu0 0
        %2317 = vmatpush1.bf16.msra.mxu0 0
        %2318 = vmatprep.subr.bf16.mxu0 0
        %2319 = vmatpush1.bf16.msra.mxu0 0
        %2320 = vmatprep.mubr.bf16.mxu0 0
        %2321 = vmatmul.mubr.bf16.gmra.mrb[0].mxu0 %v2283
        %v2322 = vpop.f32.mrb[0].mxu0
        %v2323 = vadd.f32 0.0, %v2322
        %v2324 = vpop.f32.mrb[0].mxu0
        %v2325 = vpop.f32.mrb[0].mxu0
        %v2326 = vpop.f32.mrb[0].mxu0
        %2327 = vdwg.mxu0
        %v2329 = vsel %vm2140, %v2188, 0
        %v2332 = vsel %vm2192, %v1965, 0
        %2334 = vmatprep.subr.bf16.mxu0 0
        %2335 = vmatpush1.bf16.msra.mxu0 %v2332
        %2336 = vmatprep.subr.bf16.mxu0 0
        %2337 = vmatpush1.bf16.msra.mxu0 0
        %2338 = vmatprep.subr.bf16.mxu0 0
        %2339 = vmatpush1.bf16.msra.mxu0 0
        %2340 = vmatprep.subr.bf16.mxu0 0
        %2341 = vmatpush1.bf16.msra.mxu0 0
        %2342 = vmatprep.subr.bf16.mxu0 0
        %2343 = vmatpush1.bf16.msra.mxu0 0
        %2344 = vmatprep.subr.bf16.mxu0 0
        %2345 = vmatpush1.bf16.msra.mxu0 0
        %2346 = vmatprep.subr.bf16.mxu0 0
        %2347 = vmatpush1.bf16.msra.mxu0 0
        %2348 = vmatprep.subr.bf16.mxu0 0
        %2349 = vmatpush1.bf16.msra.mxu0 0
        %2350 = vmatprep.subr.bf16.mxu0 0
        %2351 = vmatpush1.bf16.msra.mxu0 0
        %2352 = vmatprep.subr.bf16.mxu0 0
        %2353 = vmatpush1.bf16.msra.mxu0 0
        %2354 = vmatprep.subr.bf16.mxu0 0
        %2355 = vmatpush1.bf16.msra.mxu0 0
        %2356 = vmatprep.subr.bf16.mxu0 0
        %2357 = vmatpush1.bf16.msra.mxu0 0
        %2358 = vmatprep.subr.bf16.mxu0 0
        %2359 = vmatpush1.bf16.msra.mxu0 0
        %2360 = vmatprep.subr.bf16.mxu0 0
        %2361 = vmatpush1.bf16.msra.mxu0 0
        %2362 = vmatprep.subr.bf16.mxu0 0
        %2363 = vmatpush1.bf16.msra.mxu0 0
        %2364 = vmatprep.subr.bf16.mxu0 0
        %2365 = vmatpush1.bf16.msra.mxu0 0
        %2366 = vmatprep.mubr.bf16.mxu0 0
        %2367 = vmatmul.mubr.bf16.gmra.mrb[0].mxu0 %v2329
        %v2368 = vpop.f32.mrb[0].mxu0
        %v2369 = vadd.f32 0.0, %v2368
        %v2370 = vpop.f32.mrb[0].mxu0
        %v2371 = vpop.f32.mrb[0].mxu0
        %v2372 = vpop.f32.mrb[0].mxu0
        %2373 = vdwg.mxu0
        %v2374 = vcombine.low %v2231, %v2323
        %v2375 = vcombine.high %v2231, %v2323
        %v2377 = vunpack.c.l.s4 1983009808
        %v2378 = vunpack.c.0.s8 %v2377
        %v2379 = vlaneseq
        %v2380 = vshrl.u32 %v2379, 7
        %v2381 = vsub.s32 %v2378, %v2380
        %v2382 = vrot.slane %v2374, %v2381
        %v2384 = vunpack.c.l.s4 1983009808
        %v2385 = vunpack.c.0.s8 %v2384
        %v2386 = vlaneseq
        %v2387 = vshrl.u32 %v2386, 7
        %v2388 = vsub.s32 %v2385, %v2387
        %v2389 = vrot.slane %v2375, %v2388
        %v2390 = vcombine.low %v2277, %v2369
        %v2391 = vcombine.high %v2277, %v2369
        %v2393 = vunpack.c.l.s4 1983009808
        %v2394 = vunpack.c.0.s8 %v2393
        %v2395 = vlaneseq
        %v2396 = vshrl.u32 %v2395, 7
        %v2397 = vsub.s32 %v2394, %v2396
        %v2398 = vrot.slane %v2390, %v2397
        %v2400 = vunpack.c.l.s4 1983009808
        %v2401 = vunpack.c.0.s8 %v2400
        %v2402 = vlaneseq
        %v2403 = vshrl.u32 %v2402, 7
        %v2404 = vsub.s32 %v2401, %v2403
        %v2405 = vrot.slane %v2391, %v2404
        %v2406 = vcombine.low %v2382, %v2398
        %v2407 = vcombine.high %v2382, %v2398
        %v2409 = vunpack.c.l.s4 1934713408
        %v2410 = vunpack.c.0.s8 %v2409
        %v2411 = vlaneseq
        %v2412 = vshrl.u32 %v2411, 7
        %v2413 = vsub.s32 %v2410, %v2412
        %v2414 = vrot.slane %v2406, %v2413
        %v2416 = vunpack.c.l.s4 1934713408
        %v2417 = vunpack.c.0.s8 %v2416
        %v2418 = vlaneseq
        %v2419 = vshrl.u32 %v2418, 7
        %v2420 = vsub.s32 %v2417, %v2419
        %v2421 = vrot.slane %v2407, %v2420
        %v2422 = vcombine.low %v2389, %v2405
        %v2423 = vcombine.high %v2389, %v2405
        %v2425 = vunpack.c.l.s4 1934713408
        %v2426 = vunpack.c.0.s8 %v2425
        %v2427 = vlaneseq
        %v2428 = vshrl.u32 %v2427, 7
        %v2429 = vsub.s32 %v2426, %v2428
        %v2430 = vrot.slane %v2422, %v2429
        %v2432 = vunpack.c.l.s4 1934713408
        %v2433 = vunpack.c.0.s8 %v2432
        %v2434 = vlaneseq
        %v2435 = vshrl.u32 %v2434, 7
        %v2436 = vsub.s32 %v2433, %v2435
        %v2437 = vrot.slane %v2423, %v2436
        %v2438 = vcombine.high %v2414, 0.0
        %v2439 = vcombine.high %v2421, 0.0
        %v2440 = vcombine.high %v2430, 0.0
        %v2441 = vcombine.high %v2437, 0.0
        %v2442 = vcombine.low %v2414, %v2421
        %v2444 = vunpack.c.l.s4 1983009808
        %v2445 = vunpack.c.0.s8 %v2444
        %v2446 = vlaneseq
        %v2447 = vshrl.u32 %v2446, 7
        %v2448 = vsub.s32 %v2445, %v2447
        %v2449 = vrot.slane %v2442, %v2448
        %v2450 = vcombine.low %v2438, %v2439
        %v2452 = vunpack.c.l.s4 1983009808
        %v2453 = vunpack.c.0.s8 %v2452
        %v2454 = vlaneseq
        %v2455 = vshrl.u32 %v2454, 7
        %v2456 = vsub.s32 %v2453, %v2455
        %v2457 = vrot.slane %v2450, %v2456
        %v2458 = vcombine.low %v2430, %v2437
        %v2460 = vunpack.c.l.s4 1983009808
        %v2461 = vunpack.c.0.s8 %v2460
        %v2462 = vlaneseq
        %v2463 = vshrl.u32 %v2462, 7
        %v2464 = vsub.s32 %v2461, %v2463
        %v2465 = vrot.slane %v2458, %v2464
        %v2466 = vcombine.low %v2440, %v2441
        %v2468 = vunpack.c.l.s4 1983009808
        %v2469 = vunpack.c.0.s8 %v2468
        %v2470 = vlaneseq
        %v2471 = vshrl.u32 %v2470, 7
        %v2472 = vsub.s32 %v2469, %v2471
        %v2473 = vrot.slane %v2466, %v2472
        %v2474 = vcombine.low %v2449, %v2457
        %v2475 = vcombine.high %v2449, %v2457
        %v2477 = vunpack.c.l.s4 1934713408
        %v2478 = vunpack.c.0.s8 %v2477
        %v2479 = vlaneseq
        %v2480 = vshrl.u32 %v2479, 7
        %v2481 = vsub.s32 %v2478, %v2480
        %v2482 = vrot.slane %v2474, %v2481
        %v2484 = vunpack.c.l.s4 1934713408
        %v2485 = vunpack.c.0.s8 %v2484
        %v2486 = vlaneseq
        %v2487 = vshrl.u32 %v2486, 7
        %v2488 = vsub.s32 %v2485, %v2487
        %v2489 = vrot.slane %v2475, %v2488
        %v2490 = vcombine.low %v2465, %v2473
        %v2491 = vcombine.high %v2465, %v2473
        %v2493 = vunpack.c.l.s4 1934713408
        %v2494 = vunpack.c.0.s8 %v2493
        %v2495 = vlaneseq
        %v2496 = vshrl.u32 %v2495, 7
        %v2497 = vsub.s32 %v2494, %v2496
        %v2498 = vrot.slane %v2490, %v2497
        %v2500 = vunpack.c.l.s4 1934713408
        %v2501 = vunpack.c.0.s8 %v2500
        %v2502 = vlaneseq
        %v2503 = vshrl.u32 %v2502, 7
        %v2504 = vsub.s32 %v2501, %v2503
        %v2505 = vrot.slane %v2491, %v2504
        %v2506 = vcombine.low %v2482, %v2498
        %v2507 = vcombine.high %v2482, %v2498
        %v2508 = vcombine.low %v2489, %v2505
        %v2509 = vcombine.high %v2489, %v2505
        %v2510 = vpack.c.bf16 %v2506, %v2506
        %v2511 = vpack.c.bf16 %v2507, %v2507
        %v2512 = vpack.c.bf16 %v2508, %v2508
        %v2513 = vpack.c.bf16 %v2509, %v2509
        %v2514 = vld [vmem:[%s578] sm:$0xf]
        %v2515 = vld [vmem:[%s578 + $0x4] sm:$0xf]
        %v2516 = vld [vmem:[%s578 + $0x8] sm:$0xf]
        %v2517 = vld [vmem:[%s578 + $0xc] sm:$0xf]
        %v2518 = vld [vmem:[%s578 + $0x10] sm:$0xf]
        %v2519 = vld [vmem:[%s578 + $0x14] sm:$0xf]
        %v2520 = vld [vmem:[%s578 + $0x18] sm:$0xf]
        %v2521 = vld [vmem:[%s578 + $0x1c] sm:$0xf]
        %v2522 = vld [vmem:[%s578 + $0x20] sm:$0xf]
        %v2523 = vld [vmem:[%s578 + $0x24] sm:$0xf]
        %v2524 = vld [vmem:[%s578 + $0x28] sm:$0xf]
        %v2525 = vld [vmem:[%s578 + $0x2c] sm:$0xf]
        %v2526 = vld [vmem:[%s578 + $0x30] sm:$0xf]
        %v2527 = vld [vmem:[%s578 + $0x34] sm:$0xf]
        %v2528 = vld [vmem:[%s578 + $0x38] sm:$0xf]
        %v2529 = vld [vmem:[%s578 + $0x3c] sm:$0xf]
        %v2530 = vld [vmem:[%s578 + $0x40] sm:$0xf]
        %v2531 = vld [vmem:[%s578 + $0x44] sm:$0xf]
        %v2532 = vld [vmem:[%s578 + $0x48] sm:$0xf]
        %v2533 = vld [vmem:[%s578 + $0x4c] sm:$0xf]
        %v2534 = vld [vmem:[%s578 + $0x50] sm:$0xf]
        %v2535 = vld [vmem:[%s578 + $0x54] sm:$0xf]
        %v2536 = vld [vmem:[%s578 + $0x58] sm:$0xf]
        %v2537 = vld [vmem:[%s578 + $0x5c] sm:$0xf]
        %v2538 = vld [vmem:[%s578 + $0x60] sm:$0xf]
        %v2539 = vld [vmem:[%s578 + $0x64] sm:$0xf]
        %v2540 = vld [vmem:[%s578 + $0x68] sm:$0xf]
        %v2541 = vld [vmem:[%s578 + $0x6c] sm:$0xf]
        %v2542 = vld [vmem:[%s578 + $0x70] sm:$0xf]
        %v2543 = vld [vmem:[%s578 + $0x74] sm:$0xf]
        %v2544 = vld [vmem:[%s578 + $0x78] sm:$0xf]
        %v2545 = vld [vmem:[%s578 + $0x7c] sm:$0xf]
        %v2546 = vld [vmem:[%s578 + $0x80] sm:$0xf]
        %v2547 = vld [vmem:[%s578 + $0x84] sm:$0xf]
        %v2548 = vld [vmem:[%s578 + $0x88] sm:$0xf]
        %v2549 = vld [vmem:[%s578 + $0x8c] sm:$0xf]
        %v2550 = vld [vmem:[%s578 + $0x90] sm:$0xf]
        %v2551 = vld [vmem:[%s578 + $0x94] sm:$0xf]
        %v2552 = vld [vmem:[%s578 + $0x98] sm:$0xf]
        %v2553 = vld [vmem:[%s578 + $0x9c] sm:$0xf]
        %v2554 = vld [vmem:[%s578 + $0xa0] sm:$0xf]
        %v2555 = vld [vmem:[%s578 + $0xa4] sm:$0xf]
        %v2556 = vld [vmem:[%s578 + $0xa8] sm:$0xf]
        %v2557 = vld [vmem:[%s578 + $0xac] sm:$0xf]
        %v2558 = vld [vmem:[%s578 + $0xb0] sm:$0xf]
        %v2559 = vld [vmem:[%s578 + $0xb4] sm:$0xf]
        %v2560 = vld [vmem:[%s578 + $0xb8] sm:$0xf]
        %v2561 = vld [vmem:[%s578 + $0xbc] sm:$0xf]
        %v2562 = vld [vmem:[%s578 + $0xc0] sm:$0xf]
        %v2563 = vld [vmem:[%s578 + $0xc4] sm:$0xf]
        %v2564 = vld [vmem:[%s578 + $0xc8] sm:$0xf]
        %v2565 = vld [vmem:[%s578 + $0xcc] sm:$0xf]
        %v2566 = vld [vmem:[%s578 + $0xd0] sm:$0xf]
        %v2567 = vld [vmem:[%s578 + $0xd4] sm:$0xf]
        %v2568 = vld [vmem:[%s578 + $0xd8] sm:$0xf]
        %v2569 = vld [vmem:[%s578 + $0xdc] sm:$0xf]
        %v2570 = vld [vmem:[%s578 + $0xe0] sm:$0xf]
        %v2571 = vld [vmem:[%s578 + $0xe4] sm:$0xf]
        %v2572 = vld [vmem:[%s578 + $0xe8] sm:$0xf]
        %v2573 = vld [vmem:[%s578 + $0xec] sm:$0xf]
        %v2574 = vld [vmem:[%s578 + $0xf0] sm:$0xf]
        %v2575 = vld [vmem:[%s578 + $0xf4] sm:$0xf]
        %v2576 = vld [vmem:[%s578 + $0xf8] sm:$0xf]
        %v2577 = vld [vmem:[%s578 + $0xfc] sm:$0xf]
        %v2642 = vunpack.c.l.b16 %v2514
        %v2643 = vunpack.c.l.b16 %v2515
        %v2644 = vunpack.c.l.b16 %v2516
        %v2645 = vunpack.c.l.b16 %v2517
        %v2646 = vunpack.c.l.b16 %v2518
        %v2647 = vunpack.c.l.b16 %v2519
        %v2648 = vunpack.c.l.b16 %v2520
        %v2649 = vunpack.c.l.b16 %v2521
        %v2650 = vunpack.c.l.b16 %v2522
        %v2651 = vunpack.c.l.b16 %v2523
        %v2652 = vunpack.c.l.b16 %v2524
        %v2653 = vunpack.c.l.b16 %v2525
        %v2654 = vunpack.c.l.b16 %v2526
        %v2655 = vunpack.c.l.b16 %v2527
        %v2656 = vunpack.c.l.b16 %v2528
        %v2657 = vunpack.c.l.b16 %v2529
        %v2658 = vunpack.c.l.b16 %v2530
        %v2659 = vunpack.c.l.b16 %v2531
        %v2660 = vunpack.c.l.b16 %v2532
        %v2661 = vunpack.c.l.b16 %v2533
        %v2662 = vunpack.c.l.b16 %v2534
        %v2663 = vunpack.c.l.b16 %v2535
        %v2664 = vunpack.c.l.b16 %v2536
        %v2665 = vunpack.c.l.b16 %v2537
        %v2666 = vunpack.c.l.b16 %v2538
        %v2667 = vunpack.c.l.b16 %v2539
        %v2668 = vunpack.c.l.b16 %v2540
        %v2669 = vunpack.c.l.b16 %v2541
        %v2670 = vunpack.c.l.b16 %v2542
        %v2671 = vunpack.c.l.b16 %v2543
        %v2672 = vunpack.c.l.b16 %v2544
        %v2673 = vunpack.c.l.b16 %v2545
        %v2674 = vunpack.c.l.b16 %v2546
        %v2675 = vunpack.c.l.b16 %v2547
        %v2676 = vunpack.c.l.b16 %v2548
        %v2677 = vunpack.c.l.b16 %v2549
        %v2678 = vunpack.c.l.b16 %v2550
        %v2679 = vunpack.c.l.b16 %v2551
        %v2680 = vunpack.c.l.b16 %v2552
        %v2681 = vunpack.c.l.b16 %v2553
        %v2682 = vunpack.c.l.b16 %v2554
        %v2683 = vunpack.c.l.b16 %v2555
        %v2684 = vunpack.c.l.b16 %v2556
        %v2685 = vunpack.c.l.b16 %v2557
        %v2686 = vunpack.c.l.b16 %v2558
        %v2687 = vunpack.c.l.b16 %v2559
        %v2688 = vunpack.c.l.b16 %v2560
        %v2689 = vunpack.c.l.b16 %v2561
        %v2690 = vunpack.c.l.b16 %v2562
        %v2691 = vunpack.c.l.b16 %v2563
        %v2692 = vunpack.c.l.b16 %v2564
        %v2693 = vunpack.c.l.b16 %v2565
        %v2694 = vunpack.c.l.b16 %v2566
        %v2695 = vunpack.c.l.b16 %v2567
        %v2696 = vunpack.c.l.b16 %v2568
        %v2697 = vunpack.c.l.b16 %v2569
        %v2698 = vunpack.c.l.b16 %v2570
        %v2699 = vunpack.c.l.b16 %v2571
        %v2700 = vunpack.c.l.b16 %v2572
        %v2701 = vunpack.c.l.b16 %v2573
        %v2702 = vunpack.c.l.b16 %v2574
        %v2703 = vunpack.c.l.b16 %v2575
        %v2704 = vunpack.c.l.b16 %v2576
        %v2705 = vunpack.c.l.b16 %v2577
        %v2706 = vpack.c.b16 %v2643, %v2642
        %v2707 = vpack.c.b16 %v2645, %v2644
        %v2708 = vpack.c.b16 %v2647, %v2646
        %v2709 = vpack.c.b16 %v2649, %v2648
        %v2710 = vpack.c.b16 %v2651, %v2650
        %v2711 = vpack.c.b16 %v2653, %v2652
        %v2712 = vpack.c.b16 %v2655, %v2654
        %v2713 = vpack.c.b16 %v2657, %v2656
        %v2714 = vpack.c.b16 %v2659, %v2658
        %v2715 = vpack.c.b16 %v2661, %v2660
        %v2716 = vpack.c.b16 %v2663, %v2662
        %v2717 = vpack.c.b16 %v2665, %v2664
        %v2718 = vpack.c.b16 %v2667, %v2666
        %v2719 = vpack.c.b16 %v2669, %v2668
        %v2720 = vpack.c.b16 %v2671, %v2670
        %v2721 = vpack.c.b16 %v2673, %v2672
        %v2722 = vpack.c.b16 %v2675, %v2674
        %v2723 = vpack.c.b16 %v2677, %v2676
        %v2724 = vpack.c.b16 %v2679, %v2678
        %v2725 = vpack.c.b16 %v2681, %v2680
        %v2726 = vpack.c.b16 %v2683, %v2682
        %v2727 = vpack.c.b16 %v2685, %v2684
        %v2728 = vpack.c.b16 %v2687, %v2686
        %v2729 = vpack.c.b16 %v2689, %v2688
        %v2730 = vpack.c.b16 %v2691, %v2690
        %v2731 = vpack.c.b16 %v2693, %v2692
        %v2732 = vpack.c.b16 %v2695, %v2694
        %v2733 = vpack.c.b16 %v2697, %v2696
        %v2734 = vpack.c.b16 %v2699, %v2698
        %v2735 = vpack.c.b16 %v2701, %v2700
        %v2736 = vpack.c.b16 %v2703, %v2702
        %v2737 = vpack.c.b16 %v2705, %v2704
        %2770 = vmatprep.subr.bf16.mxu0 0
        %2771 = vmatpush1.bf16.msra.mxu0 %v2706
        %2772 = vmatprep.subr.bf16.mxu0 0
        %2773 = vmatpush1.bf16.msra.mxu0 %v2707
        %2774 = vmatprep.subr.bf16.mxu0 0
        %2775 = vmatpush1.bf16.msra.mxu0 %v2708
        %2776 = vmatprep.subr.bf16.mxu0 0
        %2777 = vmatpush1.bf16.msra.mxu0 %v2709
        %2778 = vmatprep.subr.bf16.mxu0 0
        %2779 = vmatpush1.bf16.msra.mxu0 %v2710
        %2780 = vmatprep.subr.bf16.mxu0 0
        %2781 = vmatpush1.bf16.msra.mxu0 %v2711
        %2782 = vmatprep.subr.bf16.mxu0 0
        %2783 = vmatpush1.bf16.msra.mxu0 %v2712
        %2784 = vmatprep.subr.bf16.mxu0 0
        %2785 = vmatpush1.bf16.msra.mxu0 %v2713
        %2786 = vmatprep.subr.bf16.mxu0 0
        %2787 = vmatpush1.bf16.msra.mxu0 %v2714
        %2788 = vmatprep.subr.bf16.mxu0 0
        %2789 = vmatpush1.bf16.msra.mxu0 %v2715
        %2790 = vmatprep.subr.bf16.mxu0 0
        %2791 = vmatpush1.bf16.msra.mxu0 %v2716
        %2792 = vmatprep.subr.bf16.mxu0 0
        %2793 = vmatpush1.bf16.msra.mxu0 %v2717
        %2794 = vmatprep.subr.bf16.mxu0 0
        %2795 = vmatpush1.bf16.msra.mxu0 %v2718
        %2796 = vmatprep.subr.bf16.mxu0 0
        %2797 = vmatpush1.bf16.msra.mxu0 %v2719
        %2798 = vmatprep.subr.bf16.mxu0 0
        %2799 = vmatpush1.bf16.msra.mxu0 %v2720
        %2800 = vmatprep.subr.bf16.mxu0 0
        %2801 = vmatpush1.bf16.msra.mxu0 %v2721
        %2802 = vmatprep.mubr.bf16.mxu0 %v2511
        %2803 = vmatmul.mubr.bf16.gmra.mrb[0].mxu0 %v2510
        %v2804 = vpop.f32.mrb[0].mxu0
        %v2805 = vadd.f32 0.0, %v2804
        %v2806 = vpop.f32.mrb[0].mxu0
        %v2807 = vpop.f32.mrb[0].mxu0
        %v2808 = vpop.f32.mrb[0].mxu0
        %2809 = vdwg.mxu0
        %2810 = vmatprep.subr.bf16.mxu0 0
        %2811 = vmatpush1.bf16.msra.mxu0 %v2722
        %2812 = vmatprep.subr.bf16.mxu0 0
        %2813 = vmatpush1.bf16.msra.mxu0 %v2723
        %2814 = vmatprep.subr.bf16.mxu0 0
        %2815 = vmatpush1.bf16.msra.mxu0 %v2724
        %2816 = vmatprep.subr.bf16.mxu0 0
        %2817 = vmatpush1.bf16.msra.mxu0 %v2725
        %2818 = vmatprep.subr.bf16.mxu0 0
        %2819 = vmatpush1.bf16.msra.mxu0 %v2726
        %2820 = vmatprep.subr.bf16.mxu0 0
        %2821 = vmatpush1.bf16.msra.mxu0 %v2727
        %2822 = vmatprep.subr.bf16.mxu0 0
        %2823 = vmatpush1.bf16.msra.mxu0 %v2728
        %2824 = vmatprep.subr.bf16.mxu0 0
        %2825 = vmatpush1.bf16.msra.mxu0 %v2729
        %2826 = vmatprep.subr.bf16.mxu0 0
        %2827 = vmatpush1.bf16.msra.mxu0 %v2730
        %2828 = vmatprep.subr.bf16.mxu0 0
        %2829 = vmatpush1.bf16.msra.mxu0 %v2731
        %2830 = vmatprep.subr.bf16.mxu0 0
        %2831 = vmatpush1.bf16.msra.mxu0 %v2732
        %2832 = vmatprep.subr.bf16.mxu0 0
        %2833 = vmatpush1.bf16.msra.mxu0 %v2733
        %2834 = vmatprep.subr.bf16.mxu0 0
        %2835 = vmatpush1.bf16.msra.mxu0 %v2734
        %2836 = vmatprep.subr.bf16.mxu0 0
        %2837 = vmatpush1.bf16.msra.mxu0 %v2735
        %2838 = vmatprep.subr.bf16.mxu0 0
        %2839 = vmatpush1.bf16.msra.mxu0 %v2736
        %2840 = vmatprep.subr.bf16.mxu0 0
        %2841 = vmatpush1.bf16.msra.mxu0 %v2737
        %2842 = vmatprep.mubr.bf16.mxu0 %v2513
        %2843 = vmatmul.mubr.bf16.gmra.mrb[0].mxu0 %v2512
        %v2844 = vpop.f32.mrb[0].mxu0
        %v2845 = vadd.f32 %v2805, %v2844
        %v2846 = vpop.f32.mrb[0].mxu0
        %v2847 = vpop.f32.mrb[0].mxu0
        %v2848 = vpop.f32.mrb[0].mxu0
        %2849 = vdwg.mxu0
        %v2850 = vadd.f32 %v692, %v2845
        %2851 = vadd.xlane.f32.xlu0 %v2850
        %v2852 = vpop.xlane.xlu0 %2851
        %v2853 = vmul.f32 %v2852, 0.03125
        %v2854 = vmul.f32 %v2850, %v2850
        %2855 = vadd.xlane.f32.xlu0 %v2854
        %v2856 = vpop.xlane.xlu0 %2855
        %v2857 = vmul.f32 %v2856, 0.03125
        %v2858 = vmul.f32 %v2853, %v2853
        %v2859 = vsub.f32 %v2857, %v2858
        %v2860 = vsub.f32 %v2850, %v2853
        %v2861 = vadd.f32 %v2859, 1e-06
        %v2862 = vrsqrt.pop %v2861
        %v2863 = vmul.f32 %v2860, %v2862
        %v2864 = vmul.f32 %v2863, %v713
        %v2865 = vadd.f32 %v2864, %v720
        %v2866 = vpack.c.bf16 %v2865, %v2865
        %v2867 = vld [vmem:[%s587] sm:$0xf]
        %v2868 = vld [vmem:[%s587 + $0x4] sm:$0xf]
        %v2869 = vld [vmem:[%s587 + $0x8] sm:$0xf]
        %v2870 = vld [vmem:[%s587 + $0xc] sm:$0xf]
        %v2871 = vld [vmem:[%s587 + $0x10] sm:$0xf]
        %v2872 = vld [vmem:[%s587 + $0x14] sm:$0xf]
        %v2873 = vld [vmem:[%s587 + $0x18] sm:$0xf]
        %v2874 = vld [vmem:[%s587 + $0x1c] sm:$0xf]
        %v2875 = vld [vmem:[%s587 + $0x20] sm:$0xf]
        %v2876 = vld [vmem:[%s587 + $0x24] sm:$0xf]
        %v2877 = vld [vmem:[%s587 + $0x28] sm:$0xf]
        %v2878 = vld [vmem:[%s587 + $0x2c] sm:$0xf]
        %v2879 = vld [vmem:[%s587 + $0x30] sm:$0xf]
        %v2880 = vld [vmem:[%s587 + $0x34] sm:$0xf]
        %v2881 = vld [vmem:[%s587 + $0x38] sm:$0xf]
        %v2882 = vld [vmem:[%s587 + $0x3c] sm:$0xf]
        %v2883 = vld [vmem:[%s681] sm:$0x1]
        %v2885 = vlaneseq
        %v2886 = vshrl.u32 %v2885, 7
        %v2887 = vsub.s32 0, %v2886
        %v2888 = vrot.slane %v2883, %v2887
        %v2906 = vunpack.c.l.b16 %v2867
        %v2907 = vunpack.c.l.b16 %v2868
        %v2908 = vunpack.c.l.b16 %v2869
        %v2909 = vunpack.c.l.b16 %v2870
        %v2910 = vunpack.c.l.b16 %v2871
        %v2911 = vunpack.c.l.b16 %v2872
        %v2912 = vunpack.c.l.b16 %v2873
        %v2913 = vunpack.c.l.b16 %v2874
        %v2914 = vunpack.c.l.b16 %v2875
        %v2915 = vunpack.c.l.b16 %v2876
        %v2916 = vunpack.c.l.b16 %v2877
        %v2917 = vunpack.c.l.b16 %v2878
        %v2918 = vunpack.c.l.b16 %v2879
        %v2919 = vunpack.c.l.b16 %v2880
        %v2920 = vunpack.c.l.b16 %v2881
        %v2921 = vunpack.c.l.b16 %v2882
        %v2922 = vpack.c.b16 %v2907, %v2906
        %v2923 = vpack.c.b16 %v2909, %v2908
        %v2924 = vpack.c.b16 %v2911, %v2910
        %v2925 = vpack.c.b16 %v2913, %v2912
        %v2926 = vpack.c.b16 %v2915, %v2914
        %v2927 = vpack.c.b16 %v2917, %v2916
        %v2928 = vpack.c.b16 %v2919, %v2918
        %v2929 = vpack.c.b16 %v2921, %v2920
        %2938 = vmatprep.subr.bf16.mxu0 0
        %2939 = vmatpush1.bf16.msra.mxu0 %v2922
        %2940 = vmatprep.subr.bf16.mxu0 0
        %2941 = vmatpush1.bf16.msra.mxu0 %v2923
        %2942 = vmatprep.subr.bf16.mxu0 0
        %2943 = vmatpush1.bf16.msra.mxu0 %v2924
        %2944 = vmatprep.subr.bf16.mxu0 0
        %2945 = vmatpush1.bf16.msra.mxu0 %v2925
        %2946 = vmatprep.subr.bf16.mxu0 0
        %2947 = vmatpush1.bf16.msra.mxu0 %v2926
        %2948 = vmatprep.subr.bf16.mxu0 0
        %2949 = vmatpush1.bf16.msra.mxu0 %v2927
        %2950 = vmatprep.subr.bf16.mxu0 0
        %2951 = vmatpush1.bf16.msra.mxu0 %v2928
        %2952 = vmatprep.subr.bf16.mxu0 0
        %2953 = vmatpush1.bf16.msra.mxu0 %v2929
        %2954 = vmatprep.subr.bf16.mxu0 0
        %2955 = vmatpush1.bf16.msra.mxu0 0
        %2956 = vmatprep.subr.bf16.mxu0 0
        %2957 = vmatpush1.bf16.msra.mxu0 0
        %2958 = vmatprep.subr.bf16.mxu0 0
        %2959 = vmatpush1.bf16.msra.mxu0 0
        %2960 = vmatprep.subr.bf16.mxu0 0
        %2961 = vmatpush1.bf16.msra.mxu0 0
        %2962 = vmatprep.subr.bf16.mxu0 0
        %2963 = vmatpush1.bf16.msra.mxu0 0
        %2964 = vmatprep.subr.bf16.mxu0 0
        %2965 = vmatpush1.bf16.msra.mxu0 0
        %2966 = vmatprep.subr.bf16.mxu0 0
        %2967 = vmatpush1.bf16.msra.mxu0 0
        %2968 = vmatprep.subr.bf16.mxu0 0
        %2969 = vmatpush1.bf16.msra.mxu0 0
        %2970 = vmatprep.mubr.bf16.mxu0 0
        %2971 = vmatmul.mubr.bf16.gmra.mrb[0].mxu0 %v2866
        %v2972 = vpop.f32.mrb[0].mxu0
        %v2973 = vadd.f32 %v2888, %v2972
        %v2974 = vpop.f32.mrb[0].mxu0
        %v2975 = vpop.f32.mrb[0].mxu0
        %v2976 = vpop.f32.mrb[0].mxu0
        %2977 = vdwg.mxu0
        %v2978 = vmax.f32 %v2973, 0.0
        %v2979 = vpack.c.bf16 %v2978, %v2978
        %v2980 = vld [vmem:[%s596] sm:$0xf]
        %v2981 = vld [vmem:[%s596 + $0x4] sm:$0xf]
        %v2982 = vld [vmem:[%s596 + $0x8] sm:$0xf]
        %v2983 = vld [vmem:[%s596 + $0xc] sm:$0xf]
        %v2984 = vld [vmem:[%s596 + $0x10] sm:$0xf]
        %v2985 = vld [vmem:[%s596 + $0x14] sm:$0xf]
        %v2986 = vld [vmem:[%s596 + $0x18] sm:$0xf]
        %v2987 = vld [vmem:[%s596 + $0x1c] sm:$0xf]
        %v2988 = vld [vmem:[%s596 + $0x20] sm:$0xf]
        %v2989 = vld [vmem:[%s596 + $0x24] sm:$0xf]
        %v2990 = vld [vmem:[%s596 + $0x28] sm:$0xf]
        %v2991 = vld [vmem:[%s596 + $0x2c] sm:$0xf]
        %v2992 = vld [vmem:[%s596 + $0x30] sm:$0xf]
        %v2993 = vld [vmem:[%s596 + $0x34] sm:$0xf]
        %v2994 = vld [vmem:[%s596 + $0x38] sm:$0xf]
        %v2995 = vld [vmem:[%s596 + $0x3c] sm:$0xf]
        %v2996 = vld [vmem:[%s684] sm:$0x1]
        %v2998 = vlaneseq
        %v2999 = vshrl.u32 %v2998, 7
        %v3000 = vsub.s32 0, %v2999
        %v3001 = vrot.slane %v2996, %v3000
        %v3019 = vunpack.c.l.b16 %v2980
        %v3020 = vunpack.c.l.b16 %v2981
        %v3021 = vunpack.c.l.b16 %v2982
        %v3022 = vunpack.c.l.b16 %v2983
        %v3023 = vunpack.c.l.b16 %v2984
        %v3024 = vunpack.c.l.b16 %v2985
        %v3025 = vunpack.c.l.b16 %v2986
        %v3026 = vunpack.c.l.b16 %v2987
        %v3027 = vunpack.c.l.b16 %v2988
        %v3028 = vunpack.c.l.b16 %v2989
        %v3029 = vunpack.c.l.b16 %v2990
        %v3030 = vunpack.c.l.b16 %v2991
        %v3031 = vunpack.c.l.b16 %v2992
        %v3032 = vunpack.c.l.b16 %v2993
        %v3033 = vunpack.c.l.b16 %v2994
        %v3034 = vunpack.c.l.b16 %v2995
        %v3035 = vpack.c.b16 %v3020, %v3019
        %v3036 = vpack.c.b16 %v3022, %v3021
        %v3037 = vpack.c.b16 %v3024, %v3023
        %v3038 = vpack.c.b16 %v3026, %v3025
        %v3039 = vpack.c.b16 %v3028, %v3027
        %v3040 = vpack.c.b16 %v3030, %v3029
        %v3041 = vpack.c.b16 %v3032, %v3031
        %v3042 = vpack.c.b16 %v3034, %v3033
        %3051 = vmatprep.subr.bf16.mxu0 0
        %3052 = vmatpush1.bf16.msra.mxu0 %v3035
        %3053 = vmatprep.subr.bf16.mxu0 0
        %3054 = vmatpush1.bf16.msra.mxu0 %v3036
        %3055 = vmatprep.subr.bf16.mxu0 0
        %3056 = vmatpush1.bf16.msra.mxu0 %v3037
        %3057 = vmatprep.subr.bf16.mxu0 0
        %3058 = vmatpush1.bf16.msra.mxu0 %v3038
        %3059 = vmatprep.subr.bf16.mxu0 0
        %3060 = vmatpush1.bf16.msra.mxu0 %v3039
        %3061 = vmatprep.subr.bf16.mxu0 0
        %3062 = vmatpush1.bf16.msra.mxu0 %v3040
        %3063 = vmatprep.subr.bf16.mxu0 0
        %3064 = vmatpush1.bf16.msra.mxu0 %v3041
        %3065 = vmatprep.subr.bf16.mxu0 0
        %3066 = vmatpush1.bf16.msra.mxu0 %v3042
        %3067 = vmatprep.subr.bf16.mxu0 0
        %3068 = vmatpush1.bf16.msra.mxu0 0
        %3069 = vmatprep.subr.bf16.mxu0 0
        %3070 = vmatpush1.bf16.msra.mxu0 0
        %3071 = vmatprep.subr.bf16.mxu0 0
        %3072 = vmatpush1.bf16.msra.mxu0 0
        %3073 = vmatprep.subr.bf16.mxu0 0
        %3074 = vmatpush1.bf16.msra.mxu0 0
        %3075 = vmatprep.subr.bf16.mxu0 0
        %3076 = vmatpush1.bf16.msra.mxu0 0
        %3077 = vmatprep.subr.bf16.mxu0 0
        %3078 = vmatpush1.bf16.msra.mxu0 0
        %3079 = vmatprep.subr.bf16.mxu0 0
        %3080 = vmatpush1.bf16.msra.mxu0 0
        %3081 = vmatprep.subr.bf16.mxu0 0
        %3082 = vmatpush1.bf16.msra.mxu0 0
        %3083 = vmatprep.mubr.bf16.mxu0 0
        %3084 = vmatmul.mubr.bf16.gmra.mrb[0].mxu0 %v2979
        %v3085 = vpop.f32.mrb[0].mxu0
        %v3086 = vadd.f32 %v3001, %v3085
        %v3087 = vpop.f32.mrb[0].mxu0
        %v3088 = vpop.f32.mrb[0].mxu0
        %v3089 = vpop.f32.mrb[0].mxu0
        %3090 = vdwg.mxu0
        %v3091 = vadd.f32 %v2850, %v3086
        %3092 = vst [vmem:[#allocation2] sm:$0xff] %v3091
        %p3093 = scmp.eq.s32.totalorder %s43, 1
        // Predicated region
        $region97: #{tpu_custom_call.1} parent=67 // pred_check
          %p3094 = pneg %p3093
        $region98: #{tpu_custom_call.1} parent=67 // pred_check_branch
          %3096 = sbr.rel (%p3094) target = $region100
        $region99: #{tpu_custom_call.1} parent=67 // pred_region
          %v3097 = vld [vmem:[%s10] sm:$0x1]
          %v3098 = vld [vmem:[%s11] sm:$0x1]
          %3099 = vadd.xlane.f32.xlu0 %v3091
          %v3100 = vpop.xlane.xlu0 %3099
          %v3101 = vmul.f32 %v3100, 0.03125
          %v3102 = vmul.f32 %v3091, %v3091
          %3103 = vadd.xlane.f32.xlu0 %v3102
          %v3104 = vpop.xlane.xlu0 %3103
          %v3105 = vmul.f32 %v3104, 0.03125
          %v3106 = vmul.f32 %v3101, %v3101
          %v3107 = vsub.f32 %v3105, %v3106
          %v3108 = vsub.f32 %v3091, %v3101
          %v3109 = vadd.f32 %v3107, 1e-06
          %v3110 = vrsqrt.pop %v3109
          %v3111 = vmul.f32 %v3108, %v3110
          %v3113 = vlaneseq
          %v3114 = vshrl.u32 %v3113, 7
          %v3115 = vsub.s32 0, %v3114
          %v3116 = vrot.slane %v3097, %v3115
          %v3118 = vmul.f32 %v3111, %v3116
          %v3120 = vlaneseq
          %v3121 = vshrl.u32 %v3120, 7
          %v3122 = vsub.s32 0, %v3121
          %v3123 = vrot.slane %v3098, %v3122
          %v3125 = vadd.f32 %v3118, %v3123
          %3126 = vst [vmem:[%s672] sm:$0xff] %v3125
        $region100: #{tpu_custom_call.1} parent=67 // pred_fallthru
          _
        %s3127 = sand.u32 %s360, 1
        %s3128 = scalar_lea.sflag [#allocation5], %s3127
        %s3129 = sand.u32 %s360, 1
        %s3130 = smul.addr %s3129, 8
        %s3131 = scalar_lea.vmem [#allocation14], %s3130
        // Predicated region
        $region101: #{tpu_custom_call.1} parent=67 // pred_check
          %p3132 = pneg %p370
        $region102: #{tpu_custom_call.1} parent=67 // pred_check_branch
          %3134 = sbr.rel (%p3132) target = $region104
        $region103: #{tpu_custom_call.1} parent=67 // pred_region
          %s3136 = ssub.s32 128, 128
          %3137 = vsyncadd %s3128, %s3136
          %s3138 = smul.addr %s42, 128
          %s3139 = scalar_lea.hbm %s12, %s3138
          %s3141 = sshll.u32 %s3131, 4
          %s3142 = int_to_ptr.vmem [resolvable:$true] %s3141
          %3144 = dma.vmem_to_hbm [thread:$0]  %s3142, 128, %s3139, %s3128
        $region104: #{tpu_custom_call.1} parent=67 // pred_fallthru
          _
      $region68: #{tpu_custom_call.1} parent=5 // pred_fallthru
        _
      %p3145 = scmp.le.s32.totalorder 2, %s33
      // Predicated region
      $region105: #{tpu_custom_call.1} parent=5 // pred_check
        %p3146 = pneg %p3145
      $region106: #{tpu_custom_call.1} parent=5 // pred_check_branch
        %3148 = sbr.rel (%p3146) target = $region108
      $region107: #{tpu_custom_call.1} parent=5 // pred_region
        %s3149 = ssub.s32 %s33, 2
        // Predicated region
        $region109: #{tpu_custom_call.1} parent=107 // pred_check
          %p3150 = pneg %p376
        $region110: #{tpu_custom_call.1} parent=107 // pred_check_branch
          %3152 = sbr.rel (%p3150) target = $region112
        $region111: #{tpu_custom_call.1} parent=107 // pred_region
          %s3153 = sand.u32 %s361, 1
          %s3154 = scalar_lea.sflag [#allocation5], %s3153
          %s3155 = sand.u32 %s361, 1
          %s3156 = smul.addr %s3155, 8
          %s3157 = scalar_lea.vmem [#allocation14], %s3156
          %3158 = dma.done %s3154, 128
        $region112: #{tpu_custom_call.1} parent=107 // pred_fallthru
          _
      $region108: #{tpu_custom_call.1} parent=5 // pred_fallthru
        _
    $region6: #{tpu_custom_call.1} parent=1 // loop_footer
      %s37 = sadd.s32 1, %s33
    $region7: #{tpu_custom_call.1} parent=1 // loop_footer_branch
      %32 = sbr.rel target = $region3
    $region8: #{tpu_custom_call.1} parent=1 // loop_exit
      _
    %3159 = vsyncpa [#allocation4], 1
    %s3160 = scalar_lea.sflag [#allocation4], 1
    %3161 = vsyncpa %s3160, 1
    %3162 = vsyncpa [#allocation7], 1
    %s3163 = scalar_lea.sflag [#allocation7], 1
    %3164 = vsyncpa %s3163, 1
    %3165 = vsyncpa [#allocation10], 1
    %s3166 = scalar_lea.sflag [#allocation10], 1
    %3167 = vsyncpa %s3166, 1
    %3168 = vsyncpa [#allocation13], 1
    %s3169 = scalar_lea.sflag [#allocation13], 1
    %3170 = vsyncpa %s3169, 1
    %3171 = vsyncpa [#allocation5], 1
    %s3172 = scalar_lea.sflag [#allocation5], 1
    %3173 = vsyncpa %s3172, 1

</llo_original>
